<compile_context>
chip_gen: v7x
topology: tpu7x:2x2x1
jax: 0.10.0
libtpu: 0.0.40
codegen_flags: <defaults>
</compile_context>

<pallas_src>
import functools

import jax
import jax.numpy as jnp
from jax import lax
from jax.experimental import pallas as pl
from jax.experimental.pallas import tpu as pltpu


# ----------------------------------------------------------------------------
# Fused kernel factory (shapes are static / baked in at trace time).
# ----------------------------------------------------------------------------
def _make_lstm_dense_kernel(num_layers, T, B, D, H):
    G = 4 * H

    def kernel(*refs):
        # refs = [x_flat,
        #         (w_ih, w_hh, bias) * num_layers,
        #         w1, b1, w2, b2, w3, b3,
        #         out_ref,
        #         xg_scratch (T, B, 4H), seq_scratch (T, B, H)]
        x_ref = refs[0]
        lstm_refs = refs[1:1 + 3 * num_layers]
        (w1_ref, b1_ref, w2_ref, b2_ref, w3_ref, b3_ref) = refs[
            1 + 3 * num_layers:7 + 3 * num_layers]
        out_ref = refs[7 + 3 * num_layers]
        xg_sc = refs[8 + 3 * num_layers]
        seq_sc = refs[9 + 3 * num_layers]

        h_last = None
        for layer in range(num_layers):
            w_ih = lstm_refs[3 * layer][...]        # (Din, 4H)
            w_hh = lstm_refs[3 * layer + 1][...]    # (H, 4H)   loaded once/layer
            bias = lstm_refs[3 * layer + 2][...]    # (1, 4H)

            # ---- hoisted, time-parallel input projection: ONE big MXU matmul ----
            if layer == 0:
                x_flat = x_ref[...]                 # (T*B, D), time-major rows
            else:
                # previous layer's hidden sequence, already time-major in VMEM
                x_flat = jnp.concatenate([seq_sc[t] for t in range(T)], axis=0)
            xg = jnp.dot(x_flat, w_ih, preferred_element_type=jnp.float32) + bias
            # Scatter gate rows into a time-major scratch so the recurrence can
            # read them with a cheap leading-axis dynamic index (once per layer).
            for t in range(T):
                xg_sc[t] = xg[t * B:(t + 1) * B, :]

            last_layer = layer == num_layers - 1

            # ---- sequential recurrence: one small dot + VPU/EUP tail per step ----
            def step(t, carry, w_hh=w_hh, write_seq=not last_layer):
                h, c = carry
                g = xg_sc[t] + jnp.dot(h, w_hh, preferred_element_type=jnp.float32)
                i_g = jax.nn.sigmoid(g[:, 0 * H:1 * H])
                f_g = jax.nn.sigmoid(g[:, 1 * H:2 * H])
                g_g = jnp.tanh(g[:, 2 * H:3 * H])
                o_g = jax.nn.sigmoid(g[:, 3 * H:4 * H])
                c_new = f_g * c + i_g * g_g
                h_new = o_g * jnp.tanh(c_new)
                if write_seq:
                    seq_sc[t] = h_new               # feeds next layer's projection
                return (h_new, c_new)

            h0 = jnp.zeros((B, H), jnp.float32)
            c0 = jnp.zeros((B, H), jnp.float32)
            # T is small; fully unroll for LLO scheduler visibility.
            # TODO(synk): for long sequences, chunk the time axis so the gate
            # scratch fits the v7x 64 MiB VMEM budget instead of holding all T.
            h_last, _ = lax.fori_loop(0, T, step, (h0, c0), unroll=True)

        # ---- fused MLP head on the last hidden state (free filler in the tail) ----
        z = jnp.dot(h_last, w1_ref[...], preferred_element_type=jnp.float32) + b1_ref[...]
        z = jnp.maximum(z, 0.0)
        z = jnp.dot(z, w2_ref[...], preferred_element_type=jnp.float32) + b2_ref[...]
        z = jnp.maximum(z, 0.0)
        z = jnp.dot(z, w3_ref[...], preferred_element_type=jnp.float32) + b3_ref[...]
        out_ref[...] = z.astype(out_ref.dtype)

    return kernel


# ----------------------------------------------------------------------------
# Parameter construction + full forward
# ----------------------------------------------------------------------------
def init_params(key, input_size, hidden_size, num_layers, h_s2):
    params = {"lstm": []}
    H = hidden_size
    scale = 1.0 / jnp.sqrt(jnp.float32(H))
    for layer in range(num_layers):
        d_in = input_size if layer == 0 else H
        key, k1, k2, k3, k4 = jax.random.split(key, 5)
        w_ih = jax.random.uniform(k1, (d_in, 4 * H), jnp.float32, -scale, scale)
        w_hh = jax.random.uniform(k2, (H, 4 * H), jnp.float32, -scale, scale)
        b_ih = jax.random.uniform(k3, (1, 4 * H), jnp.float32, -scale, scale)
        b_hh = jax.random.uniform(k4, (1, 4 * H), jnp.float32, -scale, scale)
        params["lstm"].append((w_ih, w_hh, b_ih + b_hh))

    def linear(key, d_in, d_out):
        s = 1.0 / jnp.sqrt(jnp.float32(d_in))
        k_w, k_b = jax.random.split(key)
        w = jax.random.uniform(k_w, (d_in, d_out), jnp.float32, -s, s)
        b = jax.random.uniform(k_b, (1, d_out), jnp.float32, -s, s)
        return w, b

    key, kf1, kf2, kf3 = jax.random.split(key, 4)
    params["fc1"] = linear(kf1, H, h_s2)
    params["fc2"] = linear(kf2, h_s2, h_s2)
    params["fc3"] = linear(kf3, h_s2, 1)
    return params


@jax.jit
def lstm_dense_forward(params, x_btd):
    # x_btd: (B, T, D) batch_first, like the PyTorch module.
    B, T, D = x_btd.shape
    H = params["lstm"][0][1].shape[0]
    num_layers = len(params["lstm"])

    # Single tiny relayout of the raw input to time-major flat rows; nothing
    # downstream gets re-transposed (hidden sequences stay in VMEM scratch).
    x_flat = jnp.transpose(x_btd, (1, 0, 2)).reshape(T * B, D)

    args = [x_flat]
    for (w_ih, w_hh, b) in params["lstm"]:
        args.extend((w_ih, w_hh, b))
    (w1, b1), (w2, b2), (w3, b3) = params["fc1"], params["fc2"], params["fc3"]
    args.extend((w1, b1, w2, b2, w3, b3))

    vmem_spec = pl.BlockSpec(memory_space=pltpu.MemorySpace.VMEM)
    out = pl.pallas_call(
        _make_lstm_dense_kernel(num_layers, T, B, D, H),
        out_shape=jax.ShapeDtypeStruct((B, 1), jnp.float32),
        in_specs=[vmem_spec] * len(args),
        out_specs=vmem_spec,
        scratch_shapes=[
            pltpu.VMEM((T, B, 4 * H), jnp.float32),   # hoisted gate projections
            pltpu.VMEM((T, B, H), jnp.float32),       # layer-to-layer hidden seq
        ],
    )(*args)
    return out.reshape(-1)                            # .flatten() in PyTorch


# ----------------------------------------------------------------------------
# Pure-JAX reference for correctness checking.
# ----------------------------------------------------------------------------
def reference_forward(params, x_btd):
    seq = jnp.transpose(x_btd, (1, 0, 2))
    for (w_ih, w_hh, b) in params["lstm"]:
        T, B, _ = seq.shape
        H = w_hh.shape[0]
        h = jnp.zeros((B, H), jnp.float32)
        c = jnp.zeros((B, H), jnp.float32)
        outs = []
        for t in range(T):
            gates = seq[t] @ w_ih + h @ w_hh + b
            i_g = jax.nn.sigmoid(gates[:, 0 * H:1 * H])
            f_g = jax.nn.sigmoid(gates[:, 1 * H:2 * H])
            g_g = jnp.tanh(gates[:, 2 * H:3 * H])
            o_g = jax.nn.sigmoid(gates[:, 3 * H:4 * H])
            c = f_g * c + i_g * g_g
            h = o_g * jnp.tanh(c)
            outs.append(h)
        seq = jnp.stack(outs, axis=0)
    h_last = seq[-1]
    w1, b1 = params["fc1"]
    w2, b2 = params["fc2"]
    w3, b3 = params["fc3"]
    z = jnp.maximum(h_last @ w1 + b1, 0.0)
    z = jnp.maximum(z @ w2 + b2, 0.0)
    return (z @ w3 + b3).reshape(-1)


if __name__ == "__main__":
    B, T = 2, 8
    input_size, hidden_size, num_layers, h_s2 = 4, 32, 2, 16

    key = jax.random.PRNGKey(0)
    k_params, k_x = jax.random.split(key)
    params = init_params(k_params, input_size, hidden_size, num_layers, h_s2)
    x = jax.random.normal(k_x, (B, T, input_size), jnp.float32)

    out = lstm_dense_forward(params, x)
    out = jax.block_until_ready(out)

    ref = reference_forward(params, x)
    assert out.shape == (B,)
    assert jnp.allclose(out, ref, atol=2e-4, rtol=2e-4), (out, ref)

    print("KERNEL_OK")
</pallas_src>

<mosaic_0001>
module attributes {stable_mosaic.version = 11 : i64} {
  func.func @kernel(%arg0: memref<16x4xf32, #tpu.memory_space<vmem>>, %arg1: memref<4x128xf32, #tpu.memory_space<vmem>>, %arg2: memref<32x128xf32, #tpu.memory_space<vmem>>, %arg3: memref<1x128xf32, #tpu.memory_space<vmem>>, %arg4: memref<32x128xf32, #tpu.memory_space<vmem>>, %arg5: memref<32x128xf32, #tpu.memory_space<vmem>>, %arg6: memref<1x128xf32, #tpu.memory_space<vmem>>, %arg7: memref<32x16xf32, #tpu.memory_space<vmem>>, %arg8: memref<1x16xf32, #tpu.memory_space<vmem>>, %arg9: memref<16x16xf32, #tpu.memory_space<vmem>>, %arg10: memref<1x16xf32, #tpu.memory_space<vmem>>, %arg11: memref<16x1xf32, #tpu.memory_space<vmem>>, %arg12: memref<1x1xf32, #tpu.memory_space<vmem>>, %arg13: memref<2x1xf32, #tpu.memory_space<vmem>>, %arg14: memref<8x2x128xf32, #tpu.memory_space<vmem>>, %arg15: memref<8x2x32xf32, #tpu.memory_space<vmem>>) attributes {dimension_semantics = [], scalar_prefetch = 0 : i64, scratch_operands = 2 : i64, tpu.core_type = #tpu.core_type<tc>} {
    %c0 = arith.constant 0 : index
    %c0_0 = arith.constant 0 : index
    %0 = vector.load %arg1[%c0, %c0_0] : memref<4x128xf32, #tpu.memory_space<vmem>>, vector<4x128xf32>
    %c0_1 = arith.constant 0 : index
    %c0_2 = arith.constant 0 : index
    %1 = vector.load %arg2[%c0_1, %c0_2] : memref<32x128xf32, #tpu.memory_space<vmem>>, vector<32x128xf32>
    %c0_3 = arith.constant 0 : index
    %c0_4 = arith.constant 0 : index
    %2 = vector.load %arg3[%c0_3, %c0_4] : memref<1x128xf32, #tpu.memory_space<vmem>>, vector<1x128xf32>
    %c0_5 = arith.constant 0 : index
    %c0_6 = arith.constant 0 : index
    %3 = vector.load %arg0[%c0_5, %c0_6] : memref<16x4xf32, #tpu.memory_space<vmem>>, vector<16x4xf32>
    %cst = arith.constant dense<0.000000e+00> : vector<16x128xf32>
    %4 = tpu.matmul %3, %0, %cst {dimension_numbers = #tpu.dot_dimension_numbers<[1], [0], [0], [1], [0, 0, 1, 1], [], []>} : vector<16x4xf32>, vector<4x128xf32>, vector<16x128xf32> -> vector<16x128xf32>
    %5 = vector.broadcast %2 : vector<1x128xf32> to vector<16x128xf32>
    %6 = arith.addf %4, %5 : vector<16x128xf32>
    %7 = vector.extract_strided_slice %6 {offsets = [0, 0], sizes = [2, 128], strides = [1, 1]} : vector<16x128xf32> to vector<2x128xf32>
    %c0_7 = arith.constant 0 : index
    %c0_8 = arith.constant 0 : index
    %c0_9 = arith.constant 0 : index
    %8 = vector.load %arg14[%c0_7, %c0_8, %c0_9] : memref<8x2x128xf32, #tpu.memory_space<vmem>>, vector<1x2x128xf32>
    %9 = vector.shape_cast %8 : vector<1x2x128xf32> to vector<2x128xf32>
    %10 = vector.shape_cast %7 : vector<2x128xf32> to vector<1x2x128xf32>
    tpu.vector_store %arg14[%c0_7, %c0_8, %c0_9], %10 {strides = array<i32>} : memref<8x2x128xf32, #tpu.memory_space<vmem>>, vector<1x2x128xf32>,
    %11 = vector.extract_strided_slice %6 {offsets = [2, 0], sizes = [2, 128], strides = [1, 1]} : vector<16x128xf32> to vector<2x128xf32>
    %c1 = arith.constant 1 : index
    %c0_10 = arith.constant 0 : index
    %c0_11 = arith.constant 0 : index
    %12 = vector.load %arg14[%c1, %c0_10, %c0_11] : memref<8x2x128xf32, #tpu.memory_space<vmem>>, vector<1x2x128xf32>
    %13 = vector.shape_cast %12 : vector<1x2x128xf32> to vector<2x128xf32>
    %14 = vector.shape_cast %11 : vector<2x128xf32> to vector<1x2x128xf32>
    tpu.vector_store %arg14[%c1, %c0_10, %c0_11], %14 {strides = array<i32>} : memref<8x2x128xf32, #tpu.memory_space<vmem>>, vector<1x2x128xf32>,
    %15 = vector.extract_strided_slice %6 {offsets = [4, 0], sizes = [2, 128], strides = [1, 1]} : vector<16x128xf32> to vector<2x128xf32>
    %c2 = arith.constant 2 : index
    %c0_12 = arith.constant 0 : index
    %c0_13 = arith.constant 0 : index
    %16 = vector.load %arg14[%c2, %c0_12, %c0_13] : memref<8x2x128xf32, #tpu.memory_space<vmem>>, vector<1x2x128xf32>
    %17 = vector.shape_cast %16 : vector<1x2x128xf32> to vector<2x128xf32>
    %18 = vector.shape_cast %15 : vector<2x128xf32> to vector<1x2x128xf32>
    tpu.vector_store %arg14[%c2, %c0_12, %c0_13], %18 {strides = array<i32>} : memref<8x2x128xf32, #tpu.memory_space<vmem>>, vector<1x2x128xf32>,
    %19 = vector.extract_strided_slice %6 {offsets = [6, 0], sizes = [2, 128], strides = [1, 1]} : vector<16x128xf32> to vector<2x128xf32>
    %c3 = arith.constant 3 : index
    %c0_14 = arith.constant 0 : index
    %c0_15 = arith.constant 0 : index
    %20 = vector.load %arg14[%c3, %c0_14, %c0_15] : memref<8x2x128xf32, #tpu.memory_space<vmem>>, vector<1x2x128xf32>
    %21 = vector.shape_cast %20 : vector<1x2x128xf32> to vector<2x128xf32>
    %22 = vector.shape_cast %19 : vector<2x128xf32> to vector<1x2x128xf32>
    tpu.vector_store %arg14[%c3, %c0_14, %c0_15], %22 {strides = array<i32>} : memref<8x2x128xf32, #tpu.memory_space<vmem>>, vector<1x2x128xf32>,
    %23 = vector.extract_strided_slice %6 {offsets = [8, 0], sizes = [2, 128], strides = [1, 1]} : vector<16x128xf32> to vector<2x128xf32>
    %c4 = arith.constant 4 : index
    %c0_16 = arith.constant 0 : index
    %c0_17 = arith.constant 0 : index
    %24 = vector.load %arg14[%c4, %c0_16, %c0_17] : memref<8x2x128xf32, #tpu.memory_space<vmem>>, vector<1x2x128xf32>
    %25 = vector.shape_cast %24 : vector<1x2x128xf32> to vector<2x128xf32>
    %26 = vector.shape_cast %23 : vector<2x128xf32> to vector<1x2x128xf32>
    tpu.vector_store %arg14[%c4, %c0_16, %c0_17], %26 {strides = array<i32>} : memref<8x2x128xf32, #tpu.memory_space<vmem>>, vector<1x2x128xf32>,
    %27 = vector.extract_strided_slice %6 {offsets = [10, 0], sizes = [2, 128], strides = [1, 1]} : vector<16x128xf32> to vector<2x128xf32>
    %c5 = arith.constant 5 : index
    %c0_18 = arith.constant 0 : index
    %c0_19 = arith.constant 0 : index
    %28 = vector.load %arg14[%c5, %c0_18, %c0_19] : memref<8x2x128xf32, #tpu.memory_space<vmem>>, vector<1x2x128xf32>
    %29 = vector.shape_cast %28 : vector<1x2x128xf32> to vector<2x128xf32>
    %30 = vector.shape_cast %27 : vector<2x128xf32> to vector<1x2x128xf32>
    tpu.vector_store %arg14[%c5, %c0_18, %c0_19], %30 {strides = array<i32>} : memref<8x2x128xf32, #tpu.memory_space<vmem>>, vector<1x2x128xf32>,
    %31 = vector.extract_strided_slice %6 {offsets = [12, 0], sizes = [2, 128], strides = [1, 1]} : vector<16x128xf32> to vector<2x128xf32>
    %c6 = arith.constant 6 : index
    %c0_20 = arith.constant 0 : index
    %c0_21 = arith.constant 0 : index
    %32 = vector.load %arg14[%c6, %c0_20, %c0_21] : memref<8x2x128xf32, #tpu.memory_space<vmem>>, vector<1x2x128xf32>
    %33 = vector.shape_cast %32 : vector<1x2x128xf32> to vector<2x128xf32>
    %34 = vector.shape_cast %31 : vector<2x128xf32> to vector<1x2x128xf32>
    tpu.vector_store %arg14[%c6, %c0_20, %c0_21], %34 {strides = array<i32>} : memref<8x2x128xf32, #tpu.memory_space<vmem>>, vector<1x2x128xf32>,
    %35 = vector.extract_strided_slice %6 {offsets = [14, 0], sizes = [2, 128], strides = [1, 1]} : vector<16x128xf32> to vector<2x128xf32>
    %c7 = arith.constant 7 : index
    %c0_22 = arith.constant 0 : index
    %c0_23 = arith.constant 0 : index
    %36 = vector.load %arg14[%c7, %c0_22, %c0_23] : memref<8x2x128xf32, #tpu.memory_space<vmem>>, vector<1x2x128xf32>
    %37 = vector.shape_cast %36 : vector<1x2x128xf32> to vector<2x128xf32>
    %38 = vector.shape_cast %35 : vector<2x128xf32> to vector<1x2x128xf32>
    tpu.vector_store %arg14[%c7, %c0_22, %c0_23], %38 {strides = array<i32>} : memref<8x2x128xf32, #tpu.memory_space<vmem>>, vector<1x2x128xf32>,
    %cst_24 = arith.constant 0.000000e+00 : f32
    %39 = vector.broadcast %cst_24 : f32 to vector<2x32xf32>
    %cst_25 = arith.constant 0.000000e+00 : f32
    %40 = vector.broadcast %cst_25 : f32 to vector<2x32xf32>
    %c0_i32 = arith.constant 0 : i32
    %41 = arith.index_cast %c0_i32 : i32 to index
    %c0_26 = arith.constant 0 : index
    %c0_27 = arith.constant 0 : index
    %42 = vector.load %arg14[%41, %c0_26, %c0_27] : memref<8x2x128xf32, #tpu.memory_space<vmem>>, vector<1x2x128xf32>
    %43 = vector.shape_cast %42 : vector<1x2x128xf32> to vector<2x128xf32>
    %cst_28 = arith.constant dense<0.000000e+00> : vector<2x128xf32>
    %44 = tpu.matmul %39, %1, %cst_28 {dimension_numbers = #tpu.dot_dimension_numbers<[1], [0], [0], [1], [0, 0, 1, 1], [], []>} : vector<2x32xf32>, vector<32x128xf32>, vector<2x128xf32> -> vector<2x128xf32>
    %45 = arith.addf %43, %44 : vector<2x128xf32>
    %46 = vector.extract_strided_slice %45 {offsets = [0, 0], sizes = [2, 32], strides = [1, 1]} : vector<2x128xf32> to vector<2x32xf32>
    %47 = arith.negf %46 : vector<2x32xf32>
    %48 = math.exp %47 : vector<2x32xf32>
    %cst_29 = arith.constant 1.000000e+00 : f32
    %49 = vector.broadcast %cst_29 : f32 to vector<2x32xf32>
    %50 = arith.addf %49, %48 : vector<2x32xf32>
    %51 = arith.divf %49, %50 : vector<2x32xf32>
    %52 = vector.extract_strided_slice %45 {offsets = [0, 32], sizes = [2, 32], strides = [1, 1]} : vector<2x128xf32> to vector<2x32xf32>
    %53 = arith.negf %52 : vector<2x32xf32>
    %54 = math.exp %53 : vector<2x32xf32>
    %cst_30 = arith.constant 1.000000e+00 : f32
    %55 = vector.broadcast %cst_30 : f32 to vector<2x32xf32>
    %56 = arith.addf %55, %54 : vector<2x32xf32>
    %57 = arith.divf %55, %56 : vector<2x32xf32>
    %58 = vector.extract_strided_slice %45 {offsets = [0, 64], sizes = [2, 32], strides = [1, 1]} : vector<2x128xf32> to vector<2x32xf32>
    %59 = math.tanh %58 : vector<2x32xf32>
    %60 = vector.extract_strided_slice %45 {offsets = [0, 96], sizes = [2, 32], strides = [1, 1]} : vector<2x128xf32> to vector<2x32xf32>
    %61 = arith.negf %60 : vector<2x32xf32>
    %62 = math.exp %61 : vector<2x32xf32>
    %cst_31 = arith.constant 1.000000e+00 : f32
    %63 = vector.broadcast %cst_31 : f32 to vector<2x32xf32>
    %64 = arith.addf %63, %62 : vector<2x32xf32>
    %65 = arith.divf %63, %64 : vector<2x32xf32>
    %66 = arith.mulf %57, %40 : vector<2x32xf32>
    %67 = arith.mulf %51, %59 : vector<2x32xf32>
    %68 = arith.addf %66, %67 : vector<2x32xf32>
    %69 = math.tanh %68 : vector<2x32xf32>
    %70 = arith.mulf %65, %69 : vector<2x32xf32>
    %71 = arith.index_cast %c0_i32 : i32 to index
    %c0_32 = arith.constant 0 : index
    %c0_33 = arith.constant 0 : index
    %72 = vector.load %arg15[%71, %c0_32, %c0_33] : memref<8x2x32xf32, #tpu.memory_space<vmem>>, vector<1x2x32xf32>
    %73 = vector.shape_cast %72 : vector<1x2x32xf32> to vector<2x32xf32>
    %74 = vector.shape_cast %70 : vector<2x32xf32> to vector<1x2x32xf32>
    tpu.vector_store %arg15[%71, %c0_32, %c0_33], %74 {strides = array<i32>} : memref<8x2x32xf32, #tpu.memory_space<vmem>>, vector<1x2x32xf32>,
    %c1_i32 = arith.constant 1 : i32
    %75 = arith.index_cast %c1_i32 : i32 to index
    %c0_34 = arith.constant 0 : index
    %c0_35 = arith.constant 0 : index
    %76 = vector.load %arg14[%75, %c0_34, %c0_35] : memref<8x2x128xf32, #tpu.memory_space<vmem>>, vector<1x2x128xf32>
    %77 = vector.shape_cast %76 : vector<1x2x128xf32> to vector<2x128xf32>
    %cst_36 = arith.constant dense<0.000000e+00> : vector<2x128xf32>
    %78 = tpu.matmul %70, %1, %cst_36 {dimension_numbers = #tpu.dot_dimension_numbers<[1], [0], [0], [1], [0, 0, 1, 1], [], []>} : vector<2x32xf32>, vector<32x128xf32>, vector<2x128xf32> -> vector<2x128xf32>
    %79 = arith.addf %77, %78 : vector<2x128xf32>
    %80 = vector.extract_strided_slice %79 {offsets = [0, 0], sizes = [2, 32], strides = [1, 1]} : vector<2x128xf32> to vector<2x32xf32>
    %81 = arith.negf %80 : vector<2x32xf32>
    %82 = math.exp %81 : vector<2x32xf32>
    %cst_37 = arith.constant 1.000000e+00 : f32
    %83 = vector.broadcast %cst_37 : f32 to vector<2x32xf32>
    %84 = arith.addf %83, %82 : vector<2x32xf32>
    %85 = arith.divf %83, %84 : vector<2x32xf32>
    %86 = vector.extract_strided_slice %79 {offsets = [0, 32], sizes = [2, 32], strides = [1, 1]} : vector<2x128xf32> to vector<2x32xf32>
    %87 = arith.negf %86 : vector<2x32xf32>
    %88 = math.exp %87 : vector<2x32xf32>
    %cst_38 = arith.constant 1.000000e+00 : f32
    %89 = vector.broadcast %cst_38 : f32 to vector<2x32xf32>
    %90 = arith.addf %89, %88 : vector<2x32xf32>
    %91 = arith.divf %89, %90 : vector<2x32xf32>
    %92 = vector.extract_strided_slice %79 {offsets = [0, 64], sizes = [2, 32], strides = [1, 1]} : vector<2x128xf32> to vector<2x32xf32>
    %93 = math.tanh %92 : vector<2x32xf32>
    %94 = vector.extract_strided_slice %79 {offsets = [0, 96], sizes = [2, 32], strides = [1, 1]} : vector<2x128xf32> to vector<2x32xf32>
    %95 = arith.negf %94 : vector<2x32xf32>
    %96 = math.exp %95 : vector<2x32xf32>
    %cst_39 = arith.constant 1.000000e+00 : f32
    %97 = vector.broadcast %cst_39 : f32 to vector<2x32xf32>
    %98 = arith.addf %97, %96 : vector<2x32xf32>
    %99 = arith.divf %97, %98 : vector<2x32xf32>
    %100 = arith.mulf %91, %68 : vector<2x32xf32>
    %101 = arith.mulf %85, %93 : vector<2x32xf32>
    %102 = arith.addf %100, %101 : vector<2x32xf32>
    %103 = math.tanh %102 : vector<2x32xf32>
    %104 = arith.mulf %99, %103 : vector<2x32xf32>
    %105 = arith.index_cast %c1_i32 : i32 to index
    %c0_40 = arith.constant 0 : index
    %c0_41 = arith.constant 0 : index
    %106 = vector.load %arg15[%105, %c0_40, %c0_41] : memref<8x2x32xf32, #tpu.memory_space<vmem>>, vector<1x2x32xf32>
    %107 = vector.shape_cast %106 : vector<1x2x32xf32> to vector<2x32xf32>
    %108 = vector.shape_cast %104 : vector<2x32xf32> to vector<1x2x32xf32>
    tpu.vector_store %arg15[%105, %c0_40, %c0_41], %108 {strides = array<i32>} : memref<8x2x32xf32, #tpu.memory_space<vmem>>, vector<1x2x32xf32>,
    %c2_i32 = arith.constant 2 : i32
    %109 = arith.index_cast %c2_i32 : i32 to index
    %c0_42 = arith.constant 0 : index
    %c0_43 = arith.constant 0 : index
    %110 = vector.load %arg14[%109, %c0_42, %c0_43] : memref<8x2x128xf32, #tpu.memory_space<vmem>>, vector<1x2x128xf32>
    %111 = vector.shape_cast %110 : vector<1x2x128xf32> to vector<2x128xf32>
    %cst_44 = arith.constant dense<0.000000e+00> : vector<2x128xf32>
    %112 = tpu.matmul %104, %1, %cst_44 {dimension_numbers = #tpu.dot_dimension_numbers<[1], [0], [0], [1], [0, 0, 1, 1], [], []>} : vector<2x32xf32>, vector<32x128xf32>, vector<2x128xf32> -> vector<2x128xf32>
    %113 = arith.addf %111, %112 : vector<2x128xf32>
    %114 = vector.extract_strided_slice %113 {offsets = [0, 0], sizes = [2, 32], strides = [1, 1]} : vector<2x128xf32> to vector<2x32xf32>
    %115 = arith.negf %114 : vector<2x32xf32>
    %116 = math.exp %115 : vector<2x32xf32>
    %cst_45 = arith.constant 1.000000e+00 : f32
    %117 = vector.broadcast %cst_45 : f32 to vector<2x32xf32>
    %118 = arith.addf %117, %116 : vector<2x32xf32>
    %119 = arith.divf %117, %118 : vector<2x32xf32>
    %120 = vector.extract_strided_slice %113 {offsets = [0, 32], sizes = [2, 32], strides = [1, 1]} : vector<2x128xf32> to vector<2x32xf32>
    %121 = arith.negf %120 : vector<2x32xf32>
    %122 = math.exp %121 : vector<2x32xf32>
    %cst_46 = arith.constant 1.000000e+00 : f32
    %123 = vector.broadcast %cst_46 : f32 to vector<2x32xf32>
    %124 = arith.addf %123, %122 : vector<2x32xf32>
    %125 = arith.divf %123, %124 : vector<2x32xf32>
    %126 = vector.extract_strided_slice %113 {offsets = [0, 64], sizes = [2, 32], strides = [1, 1]} : vector<2x128xf32> to vector<2x32xf32>
    %127 = math.tanh %126 : vector<2x32xf32>
    %128 = vector.extract_strided_slice %113 {offsets = [0, 96], sizes = [2, 32], strides = [1, 1]} : vector<2x128xf32> to vector<2x32xf32>
    %129 = arith.negf %128 : vector<2x32xf32>
    %130 = math.exp %129 : vector<2x32xf32>
    %cst_47 = arith.constant 1.000000e+00 : f32
    %131 = vector.broadcast %cst_47 : f32 to vector<2x32xf32>
    %132 = arith.addf %131, %130 : vector<2x32xf32>
    %133 = arith.divf %131, %132 : vector<2x32xf32>
    %134 = arith.mulf %125, %102 : vector<2x32xf32>
    %135 = arith.mulf %119, %127 : vector<2x32xf32>
    %136 = arith.addf %134, %135 : vector<2x32xf32>
    %137 = math.tanh %136 : vector<2x32xf32>
    %138 = arith.mulf %133, %137 : vector<2x32xf32>
    %139 = arith.index_cast %c2_i32 : i32 to index
    %c0_48 = arith.constant 0 : index
    %c0_49 = arith.constant 0 : index
    %140 = vector.load %arg15[%139, %c0_48, %c0_49] : memref<8x2x32xf32, #tpu.memory_space<vmem>>, vector<1x2x32xf32>
    %141 = vector.shape_cast %140 : vector<1x2x32xf32> to vector<2x32xf32>
    %142 = vector.shape_cast %138 : vector<2x32xf32> to vector<1x2x32xf32>
    tpu.vector_store %arg15[%139, %c0_48, %c0_49], %142 {strides = array<i32>} : memref<8x2x32xf32, #tpu.memory_space<vmem>>, vector<1x2x32xf32>,
    %c3_i32 = arith.constant 3 : i32
    %143 = arith.index_cast %c3_i32 : i32 to index
    %c0_50 = arith.constant 0 : index
    %c0_51 = arith.constant 0 : index
    %144 = vector.load %arg14[%143, %c0_50, %c0_51] : memref<8x2x128xf32, #tpu.memory_space<vmem>>, vector<1x2x128xf32>
    %145 = vector.shape_cast %144 : vector<1x2x128xf32> to vector<2x128xf32>
    %cst_52 = arith.constant dense<0.000000e+00> : vector<2x128xf32>
    %146 = tpu.matmul %138, %1, %cst_52 {dimension_numbers = #tpu.dot_dimension_numbers<[1], [0], [0], [1], [0, 0, 1, 1], [], []>} : vector<2x32xf32>, vector<32x128xf32>, vector<2x128xf32> -> vector<2x128xf32>
    %147 = arith.addf %145, %146 : vector<2x128xf32>
    %148 = vector.extract_strided_slice %147 {offsets = [0, 0], sizes = [2, 32], strides = [1, 1]} : vector<2x128xf32> to vector<2x32xf32>
    %149 = arith.negf %148 : vector<2x32xf32>
    %150 = math.exp %149 : vector<2x32xf32>
    %cst_53 = arith.constant 1.000000e+00 : f32
    %151 = vector.broadcast %cst_53 : f32 to vector<2x32xf32>
    %152 = arith.addf %151, %150 : vector<2x32xf32>
    %153 = arith.divf %151, %152 : vector<2x32xf32>
    %154 = vector.extract_strided_slice %147 {offsets = [0, 32], sizes = [2, 32], strides = [1, 1]} : vector<2x128xf32> to vector<2x32xf32>
    %155 = arith.negf %154 : vector<2x32xf32>
    %156 = math.exp %155 : vector<2x32xf32>
    %cst_54 = arith.constant 1.000000e+00 : f32
    %157 = vector.broadcast %cst_54 : f32 to vector<2x32xf32>
    %158 = arith.addf %157, %156 : vector<2x32xf32>
    %159 = arith.divf %157, %158 : vector<2x32xf32>
    %160 = vector.extract_strided_slice %147 {offsets = [0, 64], sizes = [2, 32], strides = [1, 1]} : vector<2x128xf32> to vector<2x32xf32>
    %161 = math.tanh %160 : vector<2x32xf32>
    %162 = vector.extract_strided_slice %147 {offsets = [0, 96], sizes = [2, 32], strides = [1, 1]} : vector<2x128xf32> to vector<2x32xf32>
    %163 = arith.negf %162 : vector<2x32xf32>
    %164 = math.exp %163 : vector<2x32xf32>
    %cst_55 = arith.constant 1.000000e+00 : f32
    %165 = vector.broadcast %cst_55 : f32 to vector<2x32xf32>
    %166 = arith.addf %165, %164 : vector<2x32xf32>
    %167 = arith.divf %165, %166 : vector<2x32xf32>
    %168 = arith.mulf %159, %136 : vector<2x32xf32>
    %169 = arith.mulf %153, %161 : vector<2x32xf32>
    %170 = arith.addf %168, %169 : vector<2x32xf32>
    %171 = math.tanh %170 : vector<2x32xf32>
    %172 = arith.mulf %167, %171 : vector<2x32xf32>
    %173 = arith.index_cast %c3_i32 : i32 to index
    %c0_56 = arith.constant 0 : index
    %c0_57 = arith.constant 0 : index
    %174 = vector.load %arg15[%173, %c0_56, %c0_57] : memref<8x2x32xf32, #tpu.memory_space<vmem>>, vector<1x2x32xf32>
    %175 = vector.shape_cast %174 : vector<1x2x32xf32> to vector<2x32xf32>
    %176 = vector.shape_cast %172 : vector<2x32xf32> to vector<1x2x32xf32>
    tpu.vector_store %arg15[%173, %c0_56, %c0_57], %176 {strides = array<i32>} : memref<8x2x32xf32, #tpu.memory_space<vmem>>, vector<1x2x32xf32>,
    %c4_i32 = arith.constant 4 : i32
    %177 = arith.index_cast %c4_i32 : i32 to index
    %c0_58 = arith.constant 0 : index
    %c0_59 = arith.constant 0 : index
    %178 = vector.load %arg14[%177, %c0_58, %c0_59] : memref<8x2x128xf32, #tpu.memory_space<vmem>>, vector<1x2x128xf32>
    %179 = vector.shape_cast %178 : vector<1x2x128xf32> to vector<2x128xf32>
    %cst_60 = arith.constant dense<0.000000e+00> : vector<2x128xf32>
    %180 = tpu.matmul %172, %1, %cst_60 {dimension_numbers = #tpu.dot_dimension_numbers<[1], [0], [0], [1], [0, 0, 1, 1], [], []>} : vector<2x32xf32>, vector<32x128xf32>, vector<2x128xf32> -> vector<2x128xf32>
    %181 = arith.addf %179, %180 : vector<2x128xf32>
    %182 = vector.extract_strided_slice %181 {offsets = [0, 0], sizes = [2, 32], strides = [1, 1]} : vector<2x128xf32> to vector<2x32xf32>
    %183 = arith.negf %182 : vector<2x32xf32>
    %184 = math.exp %183 : vector<2x32xf32>
    %cst_61 = arith.constant 1.000000e+00 : f32
    %185 = vector.broadcast %cst_61 : f32 to vector<2x32xf32>
    %186 = arith.addf %185, %184 : vector<2x32xf32>
    %187 = arith.divf %185, %186 : vector<2x32xf32>
    %188 = vector.extract_strided_slice %181 {offsets = [0, 32], sizes = [2, 32], strides = [1, 1]} : vector<2x128xf32> to vector<2x32xf32>
    %189 = arith.negf %188 : vector<2x32xf32>
    %190 = math.exp %189 : vector<2x32xf32>
    %cst_62 = arith.constant 1.000000e+00 : f32
    %191 = vector.broadcast %cst_62 : f32 to vector<2x32xf32>
    %192 = arith.addf %191, %190 : vector<2x32xf32>
    %193 = arith.divf %191, %192 : vector<2x32xf32>
    %194 = vector.extract_strided_slice %181 {offsets = [0, 64], sizes = [2, 32], strides = [1, 1]} : vector<2x128xf32> to vector<2x32xf32>
    %195 = math.tanh %194 : vector<2x32xf32>
    %196 = vector.extract_strided_slice %181 {offsets = [0, 96], sizes = [2, 32], strides = [1, 1]} : vector<2x128xf32> to vector<2x32xf32>
    %197 = arith.negf %196 : vector<2x32xf32>
    %198 = math.exp %197 : vector<2x32xf32>
    %cst_63 = arith.constant 1.000000e+00 : f32
    %199 = vector.broadcast %cst_63 : f32 to vector<2x32xf32>
    %200 = arith.addf %199, %198 : vector<2x32xf32>
    %201 = arith.divf %199, %200 : vector<2x32xf32>
    %202 = arith.mulf %193, %170 : vector<2x32xf32>
    %203 = arith.mulf %187, %195 : vector<2x32xf32>
    %204 = arith.addf %202, %203 : vector<2x32xf32>
    %205 = math.tanh %204 : vector<2x32xf32>
    %206 = arith.mulf %201, %205 : vector<2x32xf32>
    %207 = arith.index_cast %c4_i32 : i32 to index
    %c0_64 = arith.constant 0 : index
    %c0_65 = arith.constant 0 : index
    %208 = vector.load %arg15[%207, %c0_64, %c0_65] : memref<8x2x32xf32, #tpu.memory_space<vmem>>, vector<1x2x32xf32>
    %209 = vector.shape_cast %208 : vector<1x2x32xf32> to vector<2x32xf32>
    %210 = vector.shape_cast %206 : vector<2x32xf32> to vector<1x2x32xf32>
    tpu.vector_store %arg15[%207, %c0_64, %c0_65], %210 {strides = array<i32>} : memref<8x2x32xf32, #tpu.memory_space<vmem>>, vector<1x2x32xf32>,
    %c5_i32 = arith.constant 5 : i32
    %211 = arith.index_cast %c5_i32 : i32 to index
    %c0_66 = arith.constant 0 : index
    %c0_67 = arith.constant 0 : index
    %212 = vector.load %arg14[%211, %c0_66, %c0_67] : memref<8x2x128xf32, #tpu.memory_space<vmem>>, vector<1x2x128xf32>
    %213 = vector.shape_cast %212 : vector<1x2x128xf32> to vector<2x128xf32>
    %cst_68 = arith.constant dense<0.000000e+00> : vector<2x128xf32>
    %214 = tpu.matmul %206, %1, %cst_68 {dimension_numbers = #tpu.dot_dimension_numbers<[1], [0], [0], [1], [0, 0, 1, 1], [], []>} : vector<2x32xf32>, vector<32x128xf32>, vector<2x128xf32> -> vector<2x128xf32>
    %215 = arith.addf %213, %214 : vector<2x128xf32>
    %216 = vector.extract_strided_slice %215 {offsets = [0, 0], sizes = [2, 32], strides = [1, 1]} : vector<2x128xf32> to vector<2x32xf32>
    %217 = arith.negf %216 : vector<2x32xf32>
    %218 = math.exp %217 : vector<2x32xf32>
    %cst_69 = arith.constant 1.000000e+00 : f32
    %219 = vector.broadcast %cst_69 : f32 to vector<2x32xf32>
    %220 = arith.addf %219, %218 : vector<2x32xf32>
    %221 = arith.divf %219, %220 : vector<2x32xf32>
    %222 = vector.extract_strided_slice %215 {offsets = [0, 32], sizes = [2, 32], strides = [1, 1]} : vector<2x128xf32> to vector<2x32xf32>
    %223 = arith.negf %222 : vector<2x32xf32>
    %224 = math.exp %223 : vector<2x32xf32>
    %cst_70 = arith.constant 1.000000e+00 : f32
    %225 = vector.broadcast %cst_70 : f32 to vector<2x32xf32>
    %226 = arith.addf %225, %224 : vector<2x32xf32>
    %227 = arith.divf %225, %226 : vector<2x32xf32>
    %228 = vector.extract_strided_slice %215 {offsets = [0, 64], sizes = [2, 32], strides = [1, 1]} : vector<2x128xf32> to vector<2x32xf32>
    %229 = math.tanh %228 : vector<2x32xf32>
    %230 = vector.extract_strided_slice %215 {offsets = [0, 96], sizes = [2, 32], strides = [1, 1]} : vector<2x128xf32> to vector<2x32xf32>
    %231 = arith.negf %230 : vector<2x32xf32>
    %232 = math.exp %231 : vector<2x32xf32>
    %cst_71 = arith.constant 1.000000e+00 : f32
    %233 = vector.broadcast %cst_71 : f32 to vector<2x32xf32>
    %234 = arith.addf %233, %232 : vector<2x32xf32>
    %235 = arith.divf %233, %234 : vector<2x32xf32>
    %236 = arith.mulf %227, %204 : vector<2x32xf32>
    %237 = arith.mulf %221, %229 : vector<2x32xf32>
    %238 = arith.addf %236, %237 : vector<2x32xf32>
    %239 = math.tanh %238 : vector<2x32xf32>
    %240 = arith.mulf %235, %239 : vector<2x32xf32>
    %241 = arith.index_cast %c5_i32 : i32 to index
    %c0_72 = arith.constant 0 : index
    %c0_73 = arith.constant 0 : index
    %242 = vector.load %arg15[%241, %c0_72, %c0_73] : memref<8x2x32xf32, #tpu.memory_space<vmem>>, vector<1x2x32xf32>
    %243 = vector.shape_cast %242 : vector<1x2x32xf32> to vector<2x32xf32>
    %244 = vector.shape_cast %240 : vector<2x32xf32> to vector<1x2x32xf32>
    tpu.vector_store %arg15[%241, %c0_72, %c0_73], %244 {strides = array<i32>} : memref<8x2x32xf32, #tpu.memory_space<vmem>>, vector<1x2x32xf32>,
    %c6_i32 = arith.constant 6 : i32
    %245 = arith.index_cast %c6_i32 : i32 to index
    %c0_74 = arith.constant 0 : index
    %c0_75 = arith.constant 0 : index
    %246 = vector.load %arg14[%245, %c0_74, %c0_75] : memref<8x2x128xf32, #tpu.memory_space<vmem>>, vector<1x2x128xf32>
    %247 = vector.shape_cast %246 : vector<1x2x128xf32> to vector<2x128xf32>
    %cst_76 = arith.constant dense<0.000000e+00> : vector<2x128xf32>
    %248 = tpu.matmul %240, %1, %cst_76 {dimension_numbers = #tpu.dot_dimension_numbers<[1], [0], [0], [1], [0, 0, 1, 1], [], []>} : vector<2x32xf32>, vector<32x128xf32>, vector<2x128xf32> -> vector<2x128xf32>
    %249 = arith.addf %247, %248 : vector<2x128xf32>
    %250 = vector.extract_strided_slice %249 {offsets = [0, 0], sizes = [2, 32], strides = [1, 1]} : vector<2x128xf32> to vector<2x32xf32>
    %251 = arith.negf %250 : vector<2x32xf32>
    %252 = math.exp %251 : vector<2x32xf32>
    %cst_77 = arith.constant 1.000000e+00 : f32
    %253 = vector.broadcast %cst_77 : f32 to vector<2x32xf32>
    %254 = arith.addf %253, %252 : vector<2x32xf32>
    %255 = arith.divf %253, %254 : vector<2x32xf32>
    %256 = vector.extract_strided_slice %249 {offsets = [0, 32], sizes = [2, 32], strides = [1, 1]} : vector<2x128xf32> to vector<2x32xf32>
    %257 = arith.negf %256 : vector<2x32xf32>
    %258 = math.exp %257 : vector<2x32xf32>
    %cst_78 = arith.constant 1.000000e+00 : f32
    %259 = vector.broadcast %cst_78 : f32 to vector<2x32xf32>
    %260 = arith.addf %259, %258 : vector<2x32xf32>
    %261 = arith.divf %259, %260 : vector<2x32xf32>
    %262 = vector.extract_strided_slice %249 {offsets = [0, 64], sizes = [2, 32], strides = [1, 1]} : vector<2x128xf32> to vector<2x32xf32>
    %263 = math.tanh %262 : vector<2x32xf32>
    %264 = vector.extract_strided_slice %249 {offsets = [0, 96], sizes = [2, 32], strides = [1, 1]} : vector<2x128xf32> to vector<2x32xf32>
    %265 = arith.negf %264 : vector<2x32xf32>
    %266 = math.exp %265 : vector<2x32xf32>
    %cst_79 = arith.constant 1.000000e+00 : f32
    %267 = vector.broadcast %cst_79 : f32 to vector<2x32xf32>
    %268 = arith.addf %267, %266 : vector<2x32xf32>
    %269 = arith.divf %267, %268 : vector<2x32xf32>
    %270 = arith.mulf %261, %238 : vector<2x32xf32>
    %271 = arith.mulf %255, %263 : vector<2x32xf32>
    %272 = arith.addf %270, %271 : vector<2x32xf32>
    %273 = math.tanh %272 : vector<2x32xf32>
    %274 = arith.mulf %269, %273 : vector<2x32xf32>
    %275 = arith.index_cast %c6_i32 : i32 to index
    %c0_80 = arith.constant 0 : index
    %c0_81 = arith.constant 0 : index
    %276 = vector.load %arg15[%275, %c0_80, %c0_81] : memref<8x2x32xf32, #tpu.memory_space<vmem>>, vector<1x2x32xf32>
    %277 = vector.shape_cast %276 : vector<1x2x32xf32> to vector<2x32xf32>
    %278 = vector.shape_cast %274 : vector<2x32xf32> to vector<1x2x32xf32>
    tpu.vector_store %arg15[%275, %c0_80, %c0_81], %278 {strides = array<i32>} : memref<8x2x32xf32, #tpu.memory_space<vmem>>, vector<1x2x32xf32>,
    %c7_i32 = arith.constant 7 : i32
    %279 = arith.index_cast %c7_i32 : i32 to index
    %c0_82 = arith.constant 0 : index
    %c0_83 = arith.constant 0 : index
    %280 = vector.load %arg14[%279, %c0_82, %c0_83] : memref<8x2x128xf32, #tpu.memory_space<vmem>>, vector<1x2x128xf32>
    %281 = vector.shape_cast %280 : vector<1x2x128xf32> to vector<2x128xf32>
    %cst_84 = arith.constant dense<0.000000e+00> : vector<2x128xf32>
    %282 = tpu.matmul %274, %1, %cst_84 {dimension_numbers = #tpu.dot_dimension_numbers<[1], [0], [0], [1], [0, 0, 1, 1], [], []>} : vector<2x32xf32>, vector<32x128xf32>, vector<2x128xf32> -> vector<2x128xf32>
    %283 = arith.addf %281, %282 : vector<2x128xf32>
    %284 = vector.extract_strided_slice %283 {offsets = [0, 0], sizes = [2, 32], strides = [1, 1]} : vector<2x128xf32> to vector<2x32xf32>
    %285 = arith.negf %284 : vector<2x32xf32>
    %286 = math.exp %285 : vector<2x32xf32>
    %cst_85 = arith.constant 1.000000e+00 : f32
    %287 = vector.broadcast %cst_85 : f32 to vector<2x32xf32>
    %288 = arith.addf %287, %286 : vector<2x32xf32>
    %289 = arith.divf %287, %288 : vector<2x32xf32>
    %290 = vector.extract_strided_slice %283 {offsets = [0, 32], sizes = [2, 32], strides = [1, 1]} : vector<2x128xf32> to vector<2x32xf32>
    %291 = arith.negf %290 : vector<2x32xf32>
    %292 = math.exp %291 : vector<2x32xf32>
    %cst_86 = arith.constant 1.000000e+00 : f32
    %293 = vector.broadcast %cst_86 : f32 to vector<2x32xf32>
    %294 = arith.addf %293, %292 : vector<2x32xf32>
    %295 = arith.divf %293, %294 : vector<2x32xf32>
    %296 = vector.extract_strided_slice %283 {offsets = [0, 64], sizes = [2, 32], strides = [1, 1]} : vector<2x128xf32> to vector<2x32xf32>
    %297 = math.tanh %296 : vector<2x32xf32>
    %298 = vector.extract_strided_slice %283 {offsets = [0, 96], sizes = [2, 32], strides = [1, 1]} : vector<2x128xf32> to vector<2x32xf32>
    %299 = arith.negf %298 : vector<2x32xf32>
    %300 = math.exp %299 : vector<2x32xf32>
    %cst_87 = arith.constant 1.000000e+00 : f32
    %301 = vector.broadcast %cst_87 : f32 to vector<2x32xf32>
    %302 = arith.addf %301, %300 : vector<2x32xf32>
    %303 = arith.divf %301, %302 : vector<2x32xf32>
    %304 = arith.mulf %295, %272 : vector<2x32xf32>
    %305 = arith.mulf %289, %297 : vector<2x32xf32>
    %306 = arith.addf %304, %305 : vector<2x32xf32>
    %307 = math.tanh %306 : vector<2x32xf32>
    %308 = arith.mulf %303, %307 : vector<2x32xf32>
    %309 = arith.index_cast %c7_i32 : i32 to index
    %c0_88 = arith.constant 0 : index
    %c0_89 = arith.constant 0 : index
    %310 = vector.load %arg15[%309, %c0_88, %c0_89] : memref<8x2x32xf32, #tpu.memory_space<vmem>>, vector<1x2x32xf32>
    %311 = vector.shape_cast %310 : vector<1x2x32xf32> to vector<2x32xf32>
    %312 = vector.shape_cast %308 : vector<2x32xf32> to vector<1x2x32xf32>
    tpu.vector_store %arg15[%309, %c0_88, %c0_89], %312 {strides = array<i32>} : memref<8x2x32xf32, #tpu.memory_space<vmem>>, vector<1x2x32xf32>,
    %c8_i32 = arith.constant 8 : i32
    %c0_90 = arith.constant 0 : index
    %c0_91 = arith.constant 0 : index
    %313 = vector.load %arg4[%c0_90, %c0_91] : memref<32x128xf32, #tpu.memory_space<vmem>>, vector<32x128xf32>
    %c0_92 = arith.constant 0 : index
    %c0_93 = arith.constant 0 : index
    %314 = vector.load %arg5[%c0_92, %c0_93] : memref<32x128xf32, #tpu.memory_space<vmem>>, vector<32x128xf32>
    %c0_94 = arith.constant 0 : index
    %c0_95 = arith.constant 0 : index
    %315 = vector.load %arg6[%c0_94, %c0_95] : memref<1x128xf32, #tpu.memory_space<vmem>>, vector<1x128xf32>
    %c0_96 = arith.constant 0 : index
    %c0_97 = arith.constant 0 : index
    %c0_98 = arith.constant 0 : index
    %316 = vector.load %arg15[%c0_96, %c0_97, %c0_98] : memref<8x2x32xf32, #tpu.memory_space<vmem>>, vector<1x2x32xf32>
    %317 = vector.shape_cast %316 : vector<1x2x32xf32> to vector<2x32xf32>
    %c1_99 = arith.constant 1 : index
    %c0_100 = arith.constant 0 : index
    %c0_101 = arith.constant 0 : index
    %318 = vector.load %arg15[%c1_99, %c0_100, %c0_101] : memref<8x2x32xf32, #tpu.memory_space<vmem>>, vector<1x2x32xf32>
    %319 = vector.shape_cast %318 : vector<1x2x32xf32> to vector<2x32xf32>
    %c2_102 = arith.constant 2 : index
    %c0_103 = arith.constant 0 : index
    %c0_104 = arith.constant 0 : index
    %320 = vector.load %arg15[%c2_102, %c0_103, %c0_104] : memref<8x2x32xf32, #tpu.memory_space<vmem>>, vector<1x2x32xf32>
    %321 = vector.shape_cast %320 : vector<1x2x32xf32> to vector<2x32xf32>
    %c3_105 = arith.constant 3 : index
    %c0_106 = arith.constant 0 : index
    %c0_107 = arith.constant 0 : index
    %322 = vector.load %arg15[%c3_105, %c0_106, %c0_107] : memref<8x2x32xf32, #tpu.memory_space<vmem>>, vector<1x2x32xf32>
    %323 = vector.shape_cast %322 : vector<1x2x32xf32> to vector<2x32xf32>
    %c4_108 = arith.constant 4 : index
    %c0_109 = arith.constant 0 : index
    %c0_110 = arith.constant 0 : index
    %324 = vector.load %arg15[%c4_108, %c0_109, %c0_110] : memref<8x2x32xf32, #tpu.memory_space<vmem>>, vector<1x2x32xf32>
    %325 = vector.shape_cast %324 : vector<1x2x32xf32> to vector<2x32xf32>
    %c5_111 = arith.constant 5 : index
    %c0_112 = arith.constant 0 : index
    %c0_113 = arith.constant 0 : index
    %326 = vector.load %arg15[%c5_111, %c0_112, %c0_113] : memref<8x2x32xf32, #tpu.memory_space<vmem>>, vector<1x2x32xf32>
    %327 = vector.shape_cast %326 : vector<1x2x32xf32> to vector<2x32xf32>
    %c6_114 = arith.constant 6 : index
    %c0_115 = arith.constant 0 : index
    %c0_116 = arith.constant 0 : index
    %328 = vector.load %arg15[%c6_114, %c0_115, %c0_116] : memref<8x2x32xf32, #tpu.memory_space<vmem>>, vector<1x2x32xf32>
    %329 = vector.shape_cast %328 : vector<1x2x32xf32> to vector<2x32xf32>
    %c7_117 = arith.constant 7 : index
    %c0_118 = arith.constant 0 : index
    %c0_119 = arith.constant 0 : index
    %330 = vector.load %arg15[%c7_117, %c0_118, %c0_119] : memref<8x2x32xf32, #tpu.memory_space<vmem>>, vector<1x2x32xf32>
    %331 = vector.shape_cast %330 : vector<1x2x32xf32> to vector<2x32xf32>
    %332 = tpu.concatenate %317, %319, %321, %323, %325, %327, %329, %331 in 0 : vector<2x32xf32>, vector<2x32xf32>, vector<2x32xf32>, vector<2x32xf32>, vector<2x32xf32>, vector<2x32xf32>, vector<2x32xf32>, vector<2x32xf32> -> vector<16x32xf32>
    %cst_120 = arith.constant dense<0.000000e+00> : vector<16x128xf32>
    %333 = tpu.matmul %332, %313, %cst_120 {dimension_numbers = #tpu.dot_dimension_numbers<[1], [0], [0], [1], [0, 0, 1, 1], [], []>} : vector<16x32xf32>, vector<32x128xf32>, vector<16x128xf32> -> vector<16x128xf32>
    %334 = vector.broadcast %315 : vector<1x128xf32> to vector<16x128xf32>
    %335 = arith.addf %333, %334 : vector<16x128xf32>
    %336 = vector.extract_strided_slice %335 {offsets = [0, 0], sizes = [2, 128], strides = [1, 1]} : vector<16x128xf32> to vector<2x128xf32>
    %c0_121 = arith.constant 0 : index
    %c0_122 = arith.constant 0 : index
    %c0_123 = arith.constant 0 : index
    %337 = vector.load %arg14[%c0_121, %c0_122, %c0_123] : memref<8x2x128xf32, #tpu.memory_space<vmem>>, vector<1x2x128xf32>
    %338 = vector.shape_cast %337 : vector<1x2x128xf32> to vector<2x128xf32>
    %339 = vector.shape_cast %336 : vector<2x128xf32> to vector<1x2x128xf32>
    tpu.vector_store %arg14[%c0_121, %c0_122, %c0_123], %339 {strides = array<i32>} : memref<8x2x128xf32, #tpu.memory_space<vmem>>, vector<1x2x128xf32>,
    %340 = vector.extract_strided_slice %335 {offsets = [2, 0], sizes = [2, 128], strides = [1, 1]} : vector<16x128xf32> to vector<2x128xf32>
    %c1_124 = arith.constant 1 : index
    %c0_125 = arith.constant 0 : index
    %c0_126 = arith.constant 0 : index
    %341 = vector.load %arg14[%c1_124, %c0_125, %c0_126] : memref<8x2x128xf32, #tpu.memory_space<vmem>>, vector<1x2x128xf32>
    %342 = vector.shape_cast %341 : vector<1x2x128xf32> to vector<2x128xf32>
    %343 = vector.shape_cast %340 : vector<2x128xf32> to vector<1x2x128xf32>
    tpu.vector_store %arg14[%c1_124, %c0_125, %c0_126], %343 {strides = array<i32>} : memref<8x2x128xf32, #tpu.memory_space<vmem>>, vector<1x2x128xf32>,
    %344 = vector.extract_strided_slice %335 {offsets = [4, 0], sizes = [2, 128], strides = [1, 1]} : vector<16x128xf32> to vector<2x128xf32>
    %c2_127 = arith.constant 2 : index
    %c0_128 = arith.constant 0 : index
    %c0_129 = arith.constant 0 : index
    %345 = vector.load %arg14[%c2_127, %c0_128, %c0_129] : memref<8x2x128xf32, #tpu.memory_space<vmem>>, vector<1x2x128xf32>
    %346 = vector.shape_cast %345 : vector<1x2x128xf32> to vector<2x128xf32>
    %347 = vector.shape_cast %344 : vector<2x128xf32> to vector<1x2x128xf32>
    tpu.vector_store %arg14[%c2_127, %c0_128, %c0_129], %347 {strides = array<i32>} : memref<8x2x128xf32, #tpu.memory_space<vmem>>, vector<1x2x128xf32>,
    %348 = vector.extract_strided_slice %335 {offsets = [6, 0], sizes = [2, 128], strides = [1, 1]} : vector<16x128xf32> to vector<2x128xf32>
    %c3_130 = arith.constant 3 : index
    %c0_131 = arith.constant 0 : index
    %c0_132 = arith.constant 0 : index
    %349 = vector.load %arg14[%c3_130, %c0_131, %c0_132] : memref<8x2x128xf32, #tpu.memory_space<vmem>>, vector<1x2x128xf32>
    %350 = vector.shape_cast %349 : vector<1x2x128xf32> to vector<2x128xf32>
    %351 = vector.shape_cast %348 : vector<2x128xf32> to vector<1x2x128xf32>
    tpu.vector_store %arg14[%c3_130, %c0_131, %c0_132], %351 {strides = array<i32>} : memref<8x2x128xf32, #tpu.memory_space<vmem>>, vector<1x2x128xf32>,
    %352 = vector.extract_strided_slice %335 {offsets = [8, 0], sizes = [2, 128], strides = [1, 1]} : vector<16x128xf32> to vector<2x128xf32>
    %c4_133 = arith.constant 4 : index
    %c0_134 = arith.constant 0 : index
    %c0_135 = arith.constant 0 : index
    %353 = vector.load %arg14[%c4_133, %c0_134, %c0_135] : memref<8x2x128xf32, #tpu.memory_space<vmem>>, vector<1x2x128xf32>
    %354 = vector.shape_cast %353 : vector<1x2x128xf32> to vector<2x128xf32>
    %355 = vector.shape_cast %352 : vector<2x128xf32> to vector<1x2x128xf32>
    tpu.vector_store %arg14[%c4_133, %c0_134, %c0_135], %355 {strides = array<i32>} : memref<8x2x128xf32, #tpu.memory_space<vmem>>, vector<1x2x128xf32>,
    %356 = vector.extract_strided_slice %335 {offsets = [10, 0], sizes = [2, 128], strides = [1, 1]} : vector<16x128xf32> to vector<2x128xf32>
    %c5_136 = arith.constant 5 : index
    %c0_137 = arith.constant 0 : index
    %c0_138 = arith.constant 0 : index
    %357 = vector.load %arg14[%c5_136, %c0_137, %c0_138] : memref<8x2x128xf32, #tpu.memory_space<vmem>>, vector<1x2x128xf32>
    %358 = vector.shape_cast %357 : vector<1x2x128xf32> to vector<2x128xf32>
    %359 = vector.shape_cast %356 : vector<2x128xf32> to vector<1x2x128xf32>
    tpu.vector_store %arg14[%c5_136, %c0_137, %c0_138], %359 {strides = array<i32>} : memref<8x2x128xf32, #tpu.memory_space<vmem>>, vector<1x2x128xf32>,
    %360 = vector.extract_strided_slice %335 {offsets = [12, 0], sizes = [2, 128], strides = [1, 1]} : vector<16x128xf32> to vector<2x128xf32>
    %c6_139 = arith.constant 6 : index
    %c0_140 = arith.constant 0 : index
    %c0_141 = arith.constant 0 : index
    %361 = vector.load %arg14[%c6_139, %c0_140, %c0_141] : memref<8x2x128xf32, #tpu.memory_space<vmem>>, vector<1x2x128xf32>
    %362 = vector.shape_cast %361 : vector<1x2x128xf32> to vector<2x128xf32>
    %363 = vector.shape_cast %360 : vector<2x128xf32> to vector<1x2x128xf32>
    tpu.vector_store %arg14[%c6_139, %c0_140, %c0_141], %363 {strides = array<i32>} : memref<8x2x128xf32, #tpu.memory_space<vmem>>, vector<1x2x128xf32>,
    %364 = vector.extract_strided_slice %335 {offsets = [14, 0], sizes = [2, 128], strides = [1, 1]} : vector<16x128xf32> to vector<2x128xf32>
    %c7_142 = arith.constant 7 : index
    %c0_143 = arith.constant 0 : index
    %c0_144 = arith.constant 0 : index
    %365 = vector.load %arg14[%c7_142, %c0_143, %c0_144] : memref<8x2x128xf32, #tpu.memory_space<vmem>>, vector<1x2x128xf32>
    %366 = vector.shape_cast %365 : vector<1x2x128xf32> to vector<2x128xf32>
    %367 = vector.shape_cast %364 : vector<2x128xf32> to vector<1x2x128xf32>
    tpu.vector_store %arg14[%c7_142, %c0_143, %c0_144], %367 {strides = array<i32>} : memref<8x2x128xf32, #tpu.memory_space<vmem>>, vector<1x2x128xf32>,
    %cst_145 = arith.constant 0.000000e+00 : f32
    %368 = vector.broadcast %cst_145 : f32 to vector<2x32xf32>
    %cst_146 = arith.constant 0.000000e+00 : f32
    %369 = vector.broadcast %cst_146 : f32 to vector<2x32xf32>
    %c0_i32_147 = arith.constant 0 : i32
    %370 = arith.index_cast %c0_i32_147 : i32 to index
    %c0_148 = arith.constant 0 : index
    %c0_149 = arith.constant 0 : index
    %371 = vector.load %arg14[%370, %c0_148, %c0_149] : memref<8x2x128xf32, #tpu.memory_space<vmem>>, vector<1x2x128xf32>
    %372 = vector.shape_cast %371 : vector<1x2x128xf32> to vector<2x128xf32>
    %cst_150 = arith.constant dense<0.000000e+00> : vector<2x128xf32>
    %373 = tpu.matmul %368, %314, %cst_150 {dimension_numbers = #tpu.dot_dimension_numbers<[1], [0], [0], [1], [0, 0, 1, 1], [], []>} : vector<2x32xf32>, vector<32x128xf32>, vector<2x128xf32> -> vector<2x128xf32>
    %374 = arith.addf %372, %373 : vector<2x128xf32>
    %375 = vector.extract_strided_slice %374 {offsets = [0, 0], sizes = [2, 32], strides = [1, 1]} : vector<2x128xf32> to vector<2x32xf32>
    %376 = arith.negf %375 : vector<2x32xf32>
    %377 = math.exp %376 : vector<2x32xf32>
    %cst_151 = arith.constant 1.000000e+00 : f32
    %378 = vector.broadcast %cst_151 : f32 to vector<2x32xf32>
    %379 = arith.addf %378, %377 : vector<2x32xf32>
    %380 = arith.divf %378, %379 : vector<2x32xf32>
    %381 = vector.extract_strided_slice %374 {offsets = [0, 32], sizes = [2, 32], strides = [1, 1]} : vector<2x128xf32> to vector<2x32xf32>
    %382 = arith.negf %381 : vector<2x32xf32>
    %383 = math.exp %382 : vector<2x32xf32>
    %cst_152 = arith.constant 1.000000e+00 : f32
    %384 = vector.broadcast %cst_152 : f32 to vector<2x32xf32>
    %385 = arith.addf %384, %383 : vector<2x32xf32>
    %386 = arith.divf %384, %385 : vector<2x32xf32>
    %387 = vector.extract_strided_slice %374 {offsets = [0, 64], sizes = [2, 32], strides = [1, 1]} : vector<2x128xf32> to vector<2x32xf32>
    %388 = math.tanh %387 : vector<2x32xf32>
    %389 = vector.extract_strided_slice %374 {offsets = [0, 96], sizes = [2, 32], strides = [1, 1]} : vector<2x128xf32> to vector<2x32xf32>
    %390 = arith.negf %389 : vector<2x32xf32>
    %391 = math.exp %390 : vector<2x32xf32>
    %cst_153 = arith.constant 1.000000e+00 : f32
    %392 = vector.broadcast %cst_153 : f32 to vector<2x32xf32>
    %393 = arith.addf %392, %391 : vector<2x32xf32>
    %394 = arith.divf %392, %393 : vector<2x32xf32>
    %395 = arith.mulf %386, %369 : vector<2x32xf32>
    %396 = arith.mulf %380, %388 : vector<2x32xf32>
    %397 = arith.addf %395, %396 : vector<2x32xf32>
    %398 = math.tanh %397 : vector<2x32xf32>
    %399 = arith.mulf %394, %398 : vector<2x32xf32>
    %c1_i32_154 = arith.constant 1 : i32
    %400 = arith.index_cast %c1_i32_154 : i32 to index
    %c0_155 = arith.constant 0 : index
    %c0_156 = arith.constant 0 : index
    %401 = vector.load %arg14[%400, %c0_155, %c0_156] : memref<8x2x128xf32, #tpu.memory_space<vmem>>, vector<1x2x128xf32>
    %402 = vector.shape_cast %401 : vector<1x2x128xf32> to vector<2x128xf32>
    %cst_157 = arith.constant dense<0.000000e+00> : vector<2x128xf32>
    %403 = tpu.matmul %399, %314, %cst_157 {dimension_numbers = #tpu.dot_dimension_numbers<[1], [0], [0], [1], [0, 0, 1, 1], [], []>} : vector<2x32xf32>, vector<32x128xf32>, vector<2x128xf32> -> vector<2x128xf32>
    %404 = arith.addf %402, %403 : vector<2x128xf32>
    %405 = vector.extract_strided_slice %404 {offsets = [0, 0], sizes = [2, 32], strides = [1, 1]} : vector<2x128xf32> to vector<2x32xf32>
    %406 = arith.negf %405 : vector<2x32xf32>
    %407 = math.exp %406 : vector<2x32xf32>
    %cst_158 = arith.constant 1.000000e+00 : f32
    %408 = vector.broadcast %cst_158 : f32 to vector<2x32xf32>
    %409 = arith.addf %408, %407 : vector<2x32xf32>
    %410 = arith.divf %408, %409 : vector<2x32xf32>
    %411 = vector.extract_strided_slice %404 {offsets = [0, 32], sizes = [2, 32], strides = [1, 1]} : vector<2x128xf32> to vector<2x32xf32>
    %412 = arith.negf %411 : vector<2x32xf32>
    %413 = math.exp %412 : vector<2x32xf32>
    %cst_159 = arith.constant 1.000000e+00 : f32
    %414 = vector.broadcast %cst_159 : f32 to vector<2x32xf32>
    %415 = arith.addf %414, %413 : vector<2x32xf32>
    %416 = arith.divf %414, %415 : vector<2x32xf32>
    %417 = vector.extract_strided_slice %404 {offsets = [0, 64], sizes = [2, 32], strides = [1, 1]} : vector<2x128xf32> to vector<2x32xf32>
    %418 = math.tanh %417 : vector<2x32xf32>
    %419 = vector.extract_strided_slice %404 {offsets = [0, 96], sizes = [2, 32], strides = [1, 1]} : vector<2x128xf32> to vector<2x32xf32>
    %420 = arith.negf %419 : vector<2x32xf32>
    %421 = math.exp %420 : vector<2x32xf32>
    %cst_160 = arith.constant 1.000000e+00 : f32
    %422 = vector.broadcast %cst_160 : f32 to vector<2x32xf32>
    %423 = arith.addf %422, %421 : vector<2x32xf32>
    %424 = arith.divf %422, %423 : vector<2x32xf32>
    %425 = arith.mulf %416, %397 : vector<2x32xf32>
    %426 = arith.mulf %410, %418 : vector<2x32xf32>
    %427 = arith.addf %425, %426 : vector<2x32xf32>
    %428 = math.tanh %427 : vector<2x32xf32>
    %429 = arith.mulf %424, %428 : vector<2x32xf32>
    %c2_i32_161 = arith.constant 2 : i32
    %430 = arith.index_cast %c2_i32_161 : i32 to index
    %c0_162 = arith.constant 0 : index
    %c0_163 = arith.constant 0 : index
    %431 = vector.load %arg14[%430, %c0_162, %c0_163] : memref<8x2x128xf32, #tpu.memory_space<vmem>>, vector<1x2x128xf32>
    %432 = vector.shape_cast %431 : vector<1x2x128xf32> to vector<2x128xf32>
    %cst_164 = arith.constant dense<0.000000e+00> : vector<2x128xf32>
    %433 = tpu.matmul %429, %314, %cst_164 {dimension_numbers = #tpu.dot_dimension_numbers<[1], [0], [0], [1], [0, 0, 1, 1], [], []>} : vector<2x32xf32>, vector<32x128xf32>, vector<2x128xf32> -> vector<2x128xf32>
    %434 = arith.addf %432, %433 : vector<2x128xf32>
    %435 = vector.extract_strided_slice %434 {offsets = [0, 0], sizes = [2, 32], strides = [1, 1]} : vector<2x128xf32> to vector<2x32xf32>
    %436 = arith.negf %435 : vector<2x32xf32>
    %437 = math.exp %436 : vector<2x32xf32>
    %cst_165 = arith.constant 1.000000e+00 : f32
    %438 = vector.broadcast %cst_165 : f32 to vector<2x32xf32>
    %439 = arith.addf %438, %437 : vector<2x32xf32>
    %440 = arith.divf %438, %439 : vector<2x32xf32>
    %441 = vector.extract_strided_slice %434 {offsets = [0, 32], sizes = [2, 32], strides = [1, 1]} : vector<2x128xf32> to vector<2x32xf32>
    %442 = arith.negf %441 : vector<2x32xf32>
    %443 = math.exp %442 : vector<2x32xf32>
    %cst_166 = arith.constant 1.000000e+00 : f32
    %444 = vector.broadcast %cst_166 : f32 to vector<2x32xf32>
    %445 = arith.addf %444, %443 : vector<2x32xf32>
    %446 = arith.divf %444, %445 : vector<2x32xf32>
    %447 = vector.extract_strided_slice %434 {offsets = [0, 64], sizes = [2, 32], strides = [1, 1]} : vector<2x128xf32> to vector<2x32xf32>
    %448 = math.tanh %447 : vector<2x32xf32>
    %449 = vector.extract_strided_slice %434 {offsets = [0, 96], sizes = [2, 32], strides = [1, 1]} : vector<2x128xf32> to vector<2x32xf32>
    %450 = arith.negf %449 : vector<2x32xf32>
    %451 = math.exp %450 : vector<2x32xf32>
    %cst_167 = arith.constant 1.000000e+00 : f32
    %452 = vector.broadcast %cst_167 : f32 to vector<2x32xf32>
    %453 = arith.addf %452, %451 : vector<2x32xf32>
    %454 = arith.divf %452, %453 : vector<2x32xf32>
    %455 = arith.mulf %446, %427 : vector<2x32xf32>
    %456 = arith.mulf %440, %448 : vector<2x32xf32>
    %457 = arith.addf %455, %456 : vector<2x32xf32>
    %458 = math.tanh %457 : vector<2x32xf32>
    %459 = arith.mulf %454, %458 : vector<2x32xf32>
    %c3_i32_168 = arith.constant 3 : i32
    %460 = arith.index_cast %c3_i32_168 : i32 to index
    %c0_169 = arith.constant 0 : index
    %c0_170 = arith.constant 0 : index
    %461 = vector.load %arg14[%460, %c0_169, %c0_170] : memref<8x2x128xf32, #tpu.memory_space<vmem>>, vector<1x2x128xf32>
    %462 = vector.shape_cast %461 : vector<1x2x128xf32> to vector<2x128xf32>
    %cst_171 = arith.constant dense<0.000000e+00> : vector<2x128xf32>
    %463 = tpu.matmul %459, %314, %cst_171 {dimension_numbers = #tpu.dot_dimension_numbers<[1], [0], [0], [1], [0, 0, 1, 1], [], []>} : vector<2x32xf32>, vector<32x128xf32>, vector<2x128xf32> -> vector<2x128xf32>
    %464 = arith.addf %462, %463 : vector<2x128xf32>
    %465 = vector.extract_strided_slice %464 {offsets = [0, 0], sizes = [2, 32], strides = [1, 1]} : vector<2x128xf32> to vector<2x32xf32>
    %466 = arith.negf %465 : vector<2x32xf32>
    %467 = math.exp %466 : vector<2x32xf32>
    %cst_172 = arith.constant 1.000000e+00 : f32
    %468 = vector.broadcast %cst_172 : f32 to vector<2x32xf32>
    %469 = arith.addf %468, %467 : vector<2x32xf32>
    %470 = arith.divf %468, %469 : vector<2x32xf32>
    %471 = vector.extract_strided_slice %464 {offsets = [0, 32], sizes = [2, 32], strides = [1, 1]} : vector<2x128xf32> to vector<2x32xf32>
    %472 = arith.negf %471 : vector<2x32xf32>
    %473 = math.exp %472 : vector<2x32xf32>
    %cst_173 = arith.constant 1.000000e+00 : f32
    %474 = vector.broadcast %cst_173 : f32 to vector<2x32xf32>
    %475 = arith.addf %474, %473 : vector<2x32xf32>
    %476 = arith.divf %474, %475 : vector<2x32xf32>
    %477 = vector.extract_strided_slice %464 {offsets = [0, 64], sizes = [2, 32], strides = [1, 1]} : vector<2x128xf32> to vector<2x32xf32>
    %478 = math.tanh %477 : vector<2x32xf32>
    %479 = vector.extract_strided_slice %464 {offsets = [0, 96], sizes = [2, 32], strides = [1, 1]} : vector<2x128xf32> to vector<2x32xf32>
    %480 = arith.negf %479 : vector<2x32xf32>
    %481 = math.exp %480 : vector<2x32xf32>
    %cst_174 = arith.constant 1.000000e+00 : f32
    %482 = vector.broadcast %cst_174 : f32 to vector<2x32xf32>
    %483 = arith.addf %482, %481 : vector<2x32xf32>
    %484 = arith.divf %482, %483 : vector<2x32xf32>
    %485 = arith.mulf %476, %457 : vector<2x32xf32>
    %486 = arith.mulf %470, %478 : vector<2x32xf32>
    %487 = arith.addf %485, %486 : vector<2x32xf32>
    %488 = math.tanh %487 : vector<2x32xf32>
    %489 = arith.mulf %484, %488 : vector<2x32xf32>
    %c4_i32_175 = arith.constant 4 : i32
    %490 = arith.index_cast %c4_i32_175 : i32 to index
    %c0_176 = arith.constant 0 : index
    %c0_177 = arith.constant 0 : index
    %491 = vector.load %arg14[%490, %c0_176, %c0_177] : memref<8x2x128xf32, #tpu.memory_space<vmem>>, vector<1x2x128xf32>
    %492 = vector.shape_cast %491 : vector<1x2x128xf32> to vector<2x128xf32>
    %cst_178 = arith.constant dense<0.000000e+00> : vector<2x128xf32>
    %493 = tpu.matmul %489, %314, %cst_178 {dimension_numbers = #tpu.dot_dimension_numbers<[1], [0], [0], [1], [0, 0, 1, 1], [], []>} : vector<2x32xf32>, vector<32x128xf32>, vector<2x128xf32> -> vector<2x128xf32>
    %494 = arith.addf %492, %493 : vector<2x128xf32>
    %495 = vector.extract_strided_slice %494 {offsets = [0, 0], sizes = [2, 32], strides = [1, 1]} : vector<2x128xf32> to vector<2x32xf32>
    %496 = arith.negf %495 : vector<2x32xf32>
    %497 = math.exp %496 : vector<2x32xf32>
    %cst_179 = arith.constant 1.000000e+00 : f32
    %498 = vector.broadcast %cst_179 : f32 to vector<2x32xf32>
    %499 = arith.addf %498, %497 : vector<2x32xf32>
    %500 = arith.divf %498, %499 : vector<2x32xf32>
    %501 = vector.extract_strided_slice %494 {offsets = [0, 32], sizes = [2, 32], strides = [1, 1]} : vector<2x128xf32> to vector<2x32xf32>
    %502 = arith.negf %501 : vector<2x32xf32>
    %503 = math.exp %502 : vector<2x32xf32>
    %cst_180 = arith.constant 1.000000e+00 : f32
    %504 = vector.broadcast %cst_180 : f32 to vector<2x32xf32>
    %505 = arith.addf %504, %503 : vector<2x32xf32>
    %506 = arith.divf %504, %505 : vector<2x32xf32>
    %507 = vector.extract_strided_slice %494 {offsets = [0, 64], sizes = [2, 32], strides = [1, 1]} : vector<2x128xf32> to vector<2x32xf32>
    %508 = math.tanh %507 : vector<2x32xf32>
    %509 = vector.extract_strided_slice %494 {offsets = [0, 96], sizes = [2, 32], strides = [1, 1]} : vector<2x128xf32> to vector<2x32xf32>
    %510 = arith.negf %509 : vector<2x32xf32>
    %511 = math.exp %510 : vector<2x32xf32>
    %cst_181 = arith.constant 1.000000e+00 : f32
    %512 = vector.broadcast %cst_181 : f32 to vector<2x32xf32>
    %513 = arith.addf %512, %511 : vector<2x32xf32>
    %514 = arith.divf %512, %513 : vector<2x32xf32>
    %515 = arith.mulf %506, %487 : vector<2x32xf32>
    %516 = arith.mulf %500, %508 : vector<2x32xf32>
    %517 = arith.addf %515, %516 : vector<2x32xf32>
    %518 = math.tanh %517 : vector<2x32xf32>
    %519 = arith.mulf %514, %518 : vector<2x32xf32>
    %c5_i32_182 = arith.constant 5 : i32
    %520 = arith.index_cast %c5_i32_182 : i32 to index
    %c0_183 = arith.constant 0 : index
    %c0_184 = arith.constant 0 : index
    %521 = vector.load %arg14[%520, %c0_183, %c0_184] : memref<8x2x128xf32, #tpu.memory_space<vmem>>, vector<1x2x128xf32>
    %522 = vector.shape_cast %521 : vector<1x2x128xf32> to vector<2x128xf32>
    %cst_185 = arith.constant dense<0.000000e+00> : vector<2x128xf32>
    %523 = tpu.matmul %519, %314, %cst_185 {dimension_numbers = #tpu.dot_dimension_numbers<[1], [0], [0], [1], [0, 0, 1, 1], [], []>} : vector<2x32xf32>, vector<32x128xf32>, vector<2x128xf32> -> vector<2x128xf32>
    %524 = arith.addf %522, %523 : vector<2x128xf32>
    %525 = vector.extract_strided_slice %524 {offsets = [0, 0], sizes = [2, 32], strides = [1, 1]} : vector<2x128xf32> to vector<2x32xf32>
    %526 = arith.negf %525 : vector<2x32xf32>
    %527 = math.exp %526 : vector<2x32xf32>
    %cst_186 = arith.constant 1.000000e+00 : f32
    %528 = vector.broadcast %cst_186 : f32 to vector<2x32xf32>
    %529 = arith.addf %528, %527 : vector<2x32xf32>
    %530 = arith.divf %528, %529 : vector<2x32xf32>
    %531 = vector.extract_strided_slice %524 {offsets = [0, 32], sizes = [2, 32], strides = [1, 1]} : vector<2x128xf32> to vector<2x32xf32>
    %532 = arith.negf %531 : vector<2x32xf32>
    %533 = math.exp %532 : vector<2x32xf32>
    %cst_187 = arith.constant 1.000000e+00 : f32
    %534 = vector.broadcast %cst_187 : f32 to vector<2x32xf32>
    %535 = arith.addf %534, %533 : vector<2x32xf32>
    %536 = arith.divf %534, %535 : vector<2x32xf32>
    %537 = vector.extract_strided_slice %524 {offsets = [0, 64], sizes = [2, 32], strides = [1, 1]} : vector<2x128xf32> to vector<2x32xf32>
    %538 = math.tanh %537 : vector<2x32xf32>
    %539 = vector.extract_strided_slice %524 {offsets = [0, 96], sizes = [2, 32], strides = [1, 1]} : vector<2x128xf32> to vector<2x32xf32>
    %540 = arith.negf %539 : vector<2x32xf32>
    %541 = math.exp %540 : vector<2x32xf32>
    %cst_188 = arith.constant 1.000000e+00 : f32
    %542 = vector.broadcast %cst_188 : f32 to vector<2x32xf32>
    %543 = arith.addf %542, %541 : vector<2x32xf32>
    %544 = arith.divf %542, %543 : vector<2x32xf32>
    %545 = arith.mulf %536, %517 : vector<2x32xf32>
    %546 = arith.mulf %530, %538 : vector<2x32xf32>
    %547 = arith.addf %545, %546 : vector<2x32xf32>
    %548 = math.tanh %547 : vector<2x32xf32>
    %549 = arith.mulf %544, %548 : vector<2x32xf32>
    %c6_i32_189 = arith.constant 6 : i32
    %550 = arith.index_cast %c6_i32_189 : i32 to index
    %c0_190 = arith.constant 0 : index
    %c0_191 = arith.constant 0 : index
    %551 = vector.load %arg14[%550, %c0_190, %c0_191] : memref<8x2x128xf32, #tpu.memory_space<vmem>>, vector<1x2x128xf32>
    %552 = vector.shape_cast %551 : vector<1x2x128xf32> to vector<2x128xf32>
    %cst_192 = arith.constant dense<0.000000e+00> : vector<2x128xf32>
    %553 = tpu.matmul %549, %314, %cst_192 {dimension_numbers = #tpu.dot_dimension_numbers<[1], [0], [0], [1], [0, 0, 1, 1], [], []>} : vector<2x32xf32>, vector<32x128xf32>, vector<2x128xf32> -> vector<2x128xf32>
    %554 = arith.addf %552, %553 : vector<2x128xf32>
    %555 = vector.extract_strided_slice %554 {offsets = [0, 0], sizes = [2, 32], strides = [1, 1]} : vector<2x128xf32> to vector<2x32xf32>
    %556 = arith.negf %555 : vector<2x32xf32>
    %557 = math.exp %556 : vector<2x32xf32>
    %cst_193 = arith.constant 1.000000e+00 : f32
    %558 = vector.broadcast %cst_193 : f32 to vector<2x32xf32>
    %559 = arith.addf %558, %557 : vector<2x32xf32>
    %560 = arith.divf %558, %559 : vector<2x32xf32>
    %561 = vector.extract_strided_slice %554 {offsets = [0, 32], sizes = [2, 32], strides = [1, 1]} : vector<2x128xf32> to vector<2x32xf32>
    %562 = arith.negf %561 : vector<2x32xf32>
    %563 = math.exp %562 : vector<2x32xf32>
    %cst_194 = arith.constant 1.000000e+00 : f32
    %564 = vector.broadcast %cst_194 : f32 to vector<2x32xf32>
    %565 = arith.addf %564, %563 : vector<2x32xf32>
    %566 = arith.divf %564, %565 : vector<2x32xf32>
    %567 = vector.extract_strided_slice %554 {offsets = [0, 64], sizes = [2, 32], strides = [1, 1]} : vector<2x128xf32> to vector<2x32xf32>
    %568 = math.tanh %567 : vector<2x32xf32>
    %569 = vector.extract_strided_slice %554 {offsets = [0, 96], sizes = [2, 32], strides = [1, 1]} : vector<2x128xf32> to vector<2x32xf32>
    %570 = arith.negf %569 : vector<2x32xf32>
    %571 = math.exp %570 : vector<2x32xf32>
    %cst_195 = arith.constant 1.000000e+00 : f32
    %572 = vector.broadcast %cst_195 : f32 to vector<2x32xf32>
    %573 = arith.addf %572, %571 : vector<2x32xf32>
    %574 = arith.divf %572, %573 : vector<2x32xf32>
    %575 = arith.mulf %566, %547 : vector<2x32xf32>
    %576 = arith.mulf %560, %568 : vector<2x32xf32>
    %577 = arith.addf %575, %576 : vector<2x32xf32>
    %578 = math.tanh %577 : vector<2x32xf32>
    %579 = arith.mulf %574, %578 : vector<2x32xf32>
    %c7_i32_196 = arith.constant 7 : i32
    %580 = arith.index_cast %c7_i32_196 : i32 to index
    %c0_197 = arith.constant 0 : index
    %c0_198 = arith.constant 0 : index
    %581 = vector.load %arg14[%580, %c0_197, %c0_198] : memref<8x2x128xf32, #tpu.memory_space<vmem>>, vector<1x2x128xf32>
    %582 = vector.shape_cast %581 : vector<1x2x128xf32> to vector<2x128xf32>
    %cst_199 = arith.constant dense<0.000000e+00> : vector<2x128xf32>
    %583 = tpu.matmul %579, %314, %cst_199 {dimension_numbers = #tpu.dot_dimension_numbers<[1], [0], [0], [1], [0, 0, 1, 1], [], []>} : vector<2x32xf32>, vector<32x128xf32>, vector<2x128xf32> -> vector<2x128xf32>
    %584 = arith.addf %582, %583 : vector<2x128xf32>
    %585 = vector.extract_strided_slice %584 {offsets = [0, 0], sizes = [2, 32], strides = [1, 1]} : vector<2x128xf32> to vector<2x32xf32>
    %586 = arith.negf %585 : vector<2x32xf32>
    %587 = math.exp %586 : vector<2x32xf32>
    %cst_200 = arith.constant 1.000000e+00 : f32
    %588 = vector.broadcast %cst_200 : f32 to vector<2x32xf32>
    %589 = arith.addf %588, %587 : vector<2x32xf32>
    %590 = arith.divf %588, %589 : vector<2x32xf32>
    %591 = vector.extract_strided_slice %584 {offsets = [0, 32], sizes = [2, 32], strides = [1, 1]} : vector<2x128xf32> to vector<2x32xf32>
    %592 = arith.negf %591 : vector<2x32xf32>
    %593 = math.exp %592 : vector<2x32xf32>
    %cst_201 = arith.constant 1.000000e+00 : f32
    %594 = vector.broadcast %cst_201 : f32 to vector<2x32xf32>
    %595 = arith.addf %594, %593 : vector<2x32xf32>
    %596 = arith.divf %594, %595 : vector<2x32xf32>
    %597 = vector.extract_strided_slice %584 {offsets = [0, 64], sizes = [2, 32], strides = [1, 1]} : vector<2x128xf32> to vector<2x32xf32>
    %598 = math.tanh %597 : vector<2x32xf32>
    %599 = vector.extract_strided_slice %584 {offsets = [0, 96], sizes = [2, 32], strides = [1, 1]} : vector<2x128xf32> to vector<2x32xf32>
    %600 = arith.negf %599 : vector<2x32xf32>
    %601 = math.exp %600 : vector<2x32xf32>
    %cst_202 = arith.constant 1.000000e+00 : f32
    %602 = vector.broadcast %cst_202 : f32 to vector<2x32xf32>
    %603 = arith.addf %602, %601 : vector<2x32xf32>
    %604 = arith.divf %602, %603 : vector<2x32xf32>
    %605 = arith.mulf %596, %577 : vector<2x32xf32>
    %606 = arith.mulf %590, %598 : vector<2x32xf32>
    %607 = arith.addf %605, %606 : vector<2x32xf32>
    %608 = math.tanh %607 : vector<2x32xf32>
    %609 = arith.mulf %604, %608 : vector<2x32xf32>
    %c8_i32_203 = arith.constant 8 : i32
    %c0_204 = arith.constant 0 : index
    %c0_205 = arith.constant 0 : index
    %610 = vector.load %arg7[%c0_204, %c0_205] : memref<32x16xf32, #tpu.memory_space<vmem>>, vector<32x16xf32>
    %cst_206 = arith.constant dense<0.000000e+00> : vector<2x16xf32>
    %611 = tpu.matmul %609, %610, %cst_206 {dimension_numbers = #tpu.dot_dimension_numbers<[1], [0], [0], [1], [0, 0, 1, 1], [], []>} : vector<2x32xf32>, vector<32x16xf32>, vector<2x16xf32> -> vector<2x16xf32>
    %c0_207 = arith.constant 0 : index
    %c0_208 = arith.constant 0 : index
    %612 = vector.load %arg8[%c0_207, %c0_208] : memref<1x16xf32, #tpu.memory_space<vmem>>, vector<1x16xf32>
    %613 = vector.broadcast %612 : vector<1x16xf32> to vector<2x16xf32>
    %614 = arith.addf %611, %613 : vector<2x16xf32>
    %cst_209 = arith.constant 0.000000e+00 : f32
    %615 = vector.broadcast %cst_209 : f32 to vector<2x16xf32>
    %616 = arith.maximumf %614, %615 : vector<2x16xf32>
    %c0_210 = arith.constant 0 : index
    %c0_211 = arith.constant 0 : index
    %617 = vector.load %arg9[%c0_210, %c0_211] : memref<16x16xf32, #tpu.memory_space<vmem>>, vector<16x16xf32>
    %cst_212 = arith.constant dense<0.000000e+00> : vector<2x16xf32>
    %618 = tpu.matmul %616, %617, %cst_212 {dimension_numbers = #tpu.dot_dimension_numbers<[1], [0], [0], [1], [0, 0, 1, 1], [], []>} : vector<2x16xf32>, vector<16x16xf32>, vector<2x16xf32> -> vector<2x16xf32>
    %c0_213 = arith.constant 0 : index
    %c0_214 = arith.constant 0 : index
    %619 = vector.load %arg10[%c0_213, %c0_214] : memref<1x16xf32, #tpu.memory_space<vmem>>, vector<1x16xf32>
    %620 = vector.broadcast %619 : vector<1x16xf32> to vector<2x16xf32>
    %621 = arith.addf %618, %620 : vector<2x16xf32>
    %cst_215 = arith.constant 0.000000e+00 : f32
    %622 = vector.broadcast %cst_215 : f32 to vector<2x16xf32>
    %623 = arith.maximumf %621, %622 : vector<2x16xf32>
    %c0_216 = arith.constant 0 : index
    %c0_217 = arith.constant 0 : index
    %624 = vector.load %arg11[%c0_216, %c0_217] : memref<16x1xf32, #tpu.memory_space<vmem>>, vector<16x1xf32>
    %cst_218 = arith.constant dense<0.000000e+00> : vector<2x1xf32>
    %625 = tpu.matmul %623, %624, %cst_218 {dimension_numbers = #tpu.dot_dimension_numbers<[1], [0], [0], [1], [0, 0, 1, 1], [], []>} : vector<2x16xf32>, vector<16x1xf32>, vector<2x1xf32> -> vector<2x1xf32>
    %c0_219 = arith.constant 0 : index
    %c0_220 = arith.constant 0 : index
    %626 = vector.load %arg12[%c0_219, %c0_220] : memref<1x1xf32, #tpu.memory_space<vmem>>, vector<1x1xf32>
    %627 = vector.broadcast %626 : vector<1x1xf32> to vector<2x1xf32>
    %628 = arith.addf %625, %627 : vector<2x1xf32>
    %c0_221 = arith.constant 0 : index
    %c0_222 = arith.constant 0 : index
    %629 = vector.load %arg13[%c0_221, %c0_222] : memref<2x1xf32, #tpu.memory_space<vmem>>, vector<2x1xf32>
    tpu.vector_store %arg13[%c0_221, %c0_222], %628 {strides = array<i32>} : memref<2x1xf32, #tpu.memory_space<vmem>>, vector<2x1xf32>,
    return
  }
}

</mosaic_0001>

<llo_original>
// kernel: lstm_dense_forward.1
$region0: #{lstm_dense_forward.1}
  #allocation0 [shape = 'u32[]', space=smem, size = 0x4, offset = 0x4, fixed_abs, tag = 'smem constant byte address 0x4 - core index']
  #allocation1 [shape = 'u32[144,128]{1,0:T(1,128)}', space=vmem, size = 0x12000, scoped, tag = 'internal scratch']
  #allocation2 [shape = 'f32[8,2,128]{2,1,0:T(2,128)}', space=vmem, size = 0x2000, scoped, tag = 'scratch operand']
  #allocation3 [shape = 'f32[8,2,32]{2,1,0:T(2,128)}', space=vmem, size = 0x2000, scoped, tag = 'scratch operand']
  #allocation4 [shape = 'f32[1,1]{1,0:T(1,128)S(1)}', space=vmem, size = 0x200, scoped, tag = 'scoped memory for lstm_dense_forward.1']
  %s0 = inlined_call_operand.vmem [shape: f32[16,4], index: 0, kind: input, shape index: {}]
  %s1 = inlined_call_operand.vmem [shape: f32[4,128], index: 1, kind: input, shape index: {}]
  %s2 = inlined_call_operand.vmem [shape: f32[32,128], index: 2, kind: input, shape index: {}]
  %s3 = inlined_call_operand.vmem [shape: f32[1,128], index: 3, kind: input, shape index: {}]
  %s4 = inlined_call_operand.vmem [shape: f32[32,128], index: 4, kind: input, shape index: {}]
  %s5 = inlined_call_operand.vmem [shape: f32[32,128], index: 5, kind: input, shape index: {}]
  %s6 = inlined_call_operand.vmem [shape: f32[1,128], index: 6, kind: input, shape index: {}]
  %s7 = inlined_call_operand.vmem [shape: f32[32,16], index: 7, kind: input, shape index: {}]
  %s8 = inlined_call_operand.hbm [shape: f32[1,16], index: 8, kind: input, shape index: {}]
  %s9 = inlined_call_operand.hbm [shape: f32[16,16], index: 9, kind: input, shape index: {}]
  %s10 = inlined_call_operand.vmem [shape: f32[1,16], index: 10, kind: input, shape index: {}]
  %s11 = inlined_call_operand.vmem [shape: f32[16,1], index: 11, kind: input, shape index: {}]
  %s12 = inlined_call_operand.<no memory space> [shape: f32[1,1], index: 12, kind: input, shape index: {}]
  %s13 = inlined_call_operand.vmem [shape: f32[2,1], index: 13, kind: output, shape index: {}]
  %s14 = sld [smem:[#allocation0]]
  $region70: #{lstm_dense_forward.1} parent=0
    _
  %s16 = ssub.s32 1, %s14
  %s17 = scalar_select 0, %s16, %s14
  %v18 = vstv %s12
  %19 = vst [vmem:[#allocation4] sm:$0x1] %v18
  $region1: #{lstm_dense_forward.1} parent=0
    #allocation5 [shape = 'u8[512]{0}', space=vmem, size = 0x400, scoped, tag = 'input window, operand 8, single buffered']
    #allocation6 [shape = 's32[1]{0}', space=sflag, size = 0x4, scoped, tag = 'scoped memory for lstm_dense_forward.1']
    #allocation7 [shape = 'u8[8192]{0}', space=vmem, size = 0x2000, scoped, tag = 'input window, operand 9, single buffered']
    #allocation8 [shape = 's32[1]{0}', space=sflag, size = 0x4, scoped, tag = 'scoped memory for lstm_dense_forward.1']
    %20 = vsyncpa [#allocation6], 0
    %21 = vsyncpa [#allocation8], 0
    // Predicated region
    $region2: #{lstm_dense_forward.1} parent=1 // pred_check
      _
    $region3: #{lstm_dense_forward.1} parent=1 // pred_check_branch
      %23 = sbr.rel (0) target = $region5
    $region4: #{lstm_dense_forward.1} parent=1 // pred_region
      _
    $region5: #{lstm_dense_forward.1} parent=1 // pred_fallthru
      _
    // Predicated region
    $region6: #{lstm_dense_forward.1} parent=1 // pred_check
      _
    $region7: #{lstm_dense_forward.1} parent=1 // pred_check_branch
      %25 = sbr.rel (0) target = $region9
    $region8: #{lstm_dense_forward.1} parent=1 // pred_region
      _
    $region9: #{lstm_dense_forward.1} parent=1 // pred_fallthru
      _
    // Predicated region
    $region10: #{lstm_dense_forward.1} parent=1 // pred_check
      _
    $region11: #{lstm_dense_forward.1} parent=1 // pred_check_branch
      %27 = sbr.rel (0) target = $region13
    $region12: #{lstm_dense_forward.1} parent=1 // pred_region
      _
    $region13: #{lstm_dense_forward.1} parent=1 // pred_fallthru
      _
    // Predicated region
    $region14: #{lstm_dense_forward.1} parent=1 // pred_check
      _
    $region15: #{lstm_dense_forward.1} parent=1 // pred_check_branch
      %29 = sbr.rel (0) target = $region17
    $region16: #{lstm_dense_forward.1} parent=1 // pred_region
      _
    $region17: #{lstm_dense_forward.1} parent=1 // pred_fallthru
      _
    // Predicated region
    $region18: #{lstm_dense_forward.1} parent=1 // pred_check
      _
    $region19: #{lstm_dense_forward.1} parent=1 // pred_check_branch
      %31 = sbr.rel (0) target = $region21
    $region20: #{lstm_dense_forward.1} parent=1 // pred_region
      _
    $region21: #{lstm_dense_forward.1} parent=1 // pred_fallthru
      _
    // Predicated region
    $region22: #{lstm_dense_forward.1} parent=1 // pred_check
      _
    $region23: #{lstm_dense_forward.1} parent=1 // pred_check_branch
      %33 = sbr.rel (0) target = $region25
    $region24: #{lstm_dense_forward.1} parent=1 // pred_region
      _
    $region25: #{lstm_dense_forward.1} parent=1 // pred_fallthru
      _
    // Predicated region
    $region26: #{lstm_dense_forward.1} parent=1 // pred_check
      _
    $region27: #{lstm_dense_forward.1} parent=1 // pred_check_branch
      %35 = sbr.rel (0) target = $region29
    $region28: #{lstm_dense_forward.1} parent=1 // pred_region
      _
    $region29: #{lstm_dense_forward.1} parent=1 // pred_fallthru
      _
    // Predicated region
    $region30: #{lstm_dense_forward.1} parent=1 // pred_check
      _
    $region31: #{lstm_dense_forward.1} parent=1 // pred_check_branch
      %37 = sbr.rel (0) target = $region33
    $region32: #{lstm_dense_forward.1} parent=1 // pred_region
      _
    $region33: #{lstm_dense_forward.1} parent=1 // pred_fallthru
      _
    // Predicated region
    $region34: #{lstm_dense_forward.1} parent=1 // pred_check
      _
    $region35: #{lstm_dense_forward.1} parent=1 // pred_check_branch
      %39 = sbr.rel (0) target = $region37
    $region36: #{lstm_dense_forward.1} parent=1 // pred_region
      %s41 = ssub.s32 16, 16
      %42 = vsyncadd [#allocation6], %s41
      %s44 = sshll.u32 [#allocation5], 4
      %s45 = int_to_ptr.vmem [resolvable:$true] %s44
      %47 = dma.hbm_to_vmem [thread:$0]  %s8, 16, %s45, [#allocation6]
    $region37: #{lstm_dense_forward.1} parent=1 // pred_fallthru
      _
    // Predicated region
    $region38: #{lstm_dense_forward.1} parent=1 // pred_check
      _
    $region39: #{lstm_dense_forward.1} parent=1 // pred_check_branch
      %49 = sbr.rel (0) target = $region41
    $region40: #{lstm_dense_forward.1} parent=1 // pred_region
      %s51 = ssub.s32 256, 256
      %52 = vsyncadd [#allocation8], %s51
      %s53 = sshll.u32 [#allocation7], 4
      %s54 = int_to_ptr.vmem [resolvable:$true] %s53
      %59 = dma.hbm_to_vmem [thread:$0]  %s9, 256, %s54, [#allocation8], 128, 128, 8
    $region41: #{lstm_dense_forward.1} parent=1 // pred_fallthru
      _
    // Predicated region
    $region42: #{lstm_dense_forward.1} parent=1 // pred_check
      _
    $region43: #{lstm_dense_forward.1} parent=1 // pred_check_branch
      %61 = sbr.rel (0) target = $region45
    $region44: #{lstm_dense_forward.1} parent=1 // pred_region
      _
    $region45: #{lstm_dense_forward.1} parent=1 // pred_fallthru
      _
    // Predicated region
    $region46: #{lstm_dense_forward.1} parent=1 // pred_check
      _
    $region47: #{lstm_dense_forward.1} parent=1 // pred_check_branch
      %63 = sbr.rel (0) target = $region49
    $region48: #{lstm_dense_forward.1} parent=1 // pred_region
      _
    $region49: #{lstm_dense_forward.1} parent=1 // pred_fallthru
      _
    // Predicated region
    $region50: #{lstm_dense_forward.1} parent=1 // pred_check
      _
    $region51: #{lstm_dense_forward.1} parent=1 // pred_check_branch
      %65 = sbr.rel (0) target = $region53
    $region52: #{lstm_dense_forward.1} parent=1 // pred_region
      _
    $region53: #{lstm_dense_forward.1} parent=1 // pred_fallthru
      _
    // Predicated region
    $region54: #{lstm_dense_forward.1} parent=1 // pred_check
      _
    $region55: #{lstm_dense_forward.1} parent=1 // pred_check_branch
      %67 = sbr.rel (0) target = $region57
    $region56: #{lstm_dense_forward.1} parent=1 // pred_region
      %68 = dma.done [#allocation6], 16
    $region57: #{lstm_dense_forward.1} parent=1 // pred_fallthru
      _
    // Predicated region
    $region58: #{lstm_dense_forward.1} parent=1 // pred_check
      _
    $region59: #{lstm_dense_forward.1} parent=1 // pred_check_branch
      %70 = sbr.rel (0) target = $region61
    $region60: #{lstm_dense_forward.1} parent=1 // pred_region
      %71 = dma.done [#allocation8], 256
    $region61: #{lstm_dense_forward.1} parent=1 // pred_fallthru
      _
    %v72 = vld [vmem:[%s1] sm:$0xf]
    %v73 = vld [vmem:[%s2] sm:$0xff]
    %v74 = vld [vmem:[%s2 + $0x8] sm:$0xff]
    %v75 = vld [vmem:[%s2 + $0x10] sm:$0xff]
    %v76 = vld [vmem:[%s2 + $0x18] sm:$0xff]
    %v77 = vld [vmem:[%s3] sm:$0x1]
    %v78 = vld [vmem:[%s0] sm:$0xff]
    %v79 = vld [vmem:[%s0 + $0x8] sm:$0xff]
    %v81 = vlaneseq
    %v82 = vshrl.u32 %v81, 7
    %v83 = vsub.s32 0, %v82
    %v84 = vrot.slane %v77, %v83
    %vm86 = vcmask 31744
    %v88 = vsel %vm86, %v78, 0
    %v91 = vsel %vm86, %v79, 0
    %vm93 = vcmask 1043456
    %v95 = vsel %vm93, %v72, 0
    %97 = vmatprep.subr.mxu0 0.0
    %98 = vmatpush1.msra.mxu0 %v95
    %99 = vmatprep.subr.mxu0 0.0
    %100 = vmatpush1.msra.mxu0 0.0
    %101 = vmatprep.subr.mxu0 0.0
    %102 = vmatpush1.msra.mxu0 0.0
    %103 = vmatprep.subr.mxu0 0.0
    %104 = vmatpush1.msra.mxu0 0.0
    %105 = vmatprep.subr.mxu0 0.0
    %106 = vmatpush1.msra.mxu0 0.0
    %107 = vmatprep.subr.mxu0 0.0
    %108 = vmatpush1.msra.mxu0 0.0
    %109 = vmatprep.subr.mxu0 0.0
    %110 = vmatpush1.msra.mxu0 0.0
    %111 = vmatprep.subr.mxu0 0.0
    %112 = vmatpush1.msra.mxu0 0.0
    %113 = vmatprep.subr.mxu0 0.0
    %114 = vmatpush1.msra.mxu0 0.0
    %115 = vmatprep.subr.mxu0 0.0
    %116 = vmatpush1.msra.mxu0 0.0
    %117 = vmatprep.subr.mxu0 0.0
    %118 = vmatpush1.msra.mxu0 0.0
    %119 = vmatprep.subr.mxu0 0.0
    %120 = vmatpush1.msra.mxu0 0.0
    %121 = vmatprep.subr.mxu0 0.0
    %122 = vmatpush1.msra.mxu0 0.0
    %123 = vmatprep.subr.mxu0 0.0
    %124 = vmatpush1.msra.mxu0 0.0
    %125 = vmatprep.subr.mxu0 0.0
    %126 = vmatpush1.msra.mxu0 0.0
    %127 = vmatprep.subr.mxu0 0.0
    %128 = vmatpush1.msra.mxu0 0.0
    %129 = vmatprep.subr.mxu0 0.0
    %130 = vmatpush1.msra.mxu0 0.0
    %131 = vmatprep.subr.mxu0 0.0
    %132 = vmatpush1.msra.mxu0 0.0
    %133 = vmatprep.subr.mxu0 0.0
    %134 = vmatpush1.msra.mxu0 0.0
    %135 = vmatprep.subr.mxu0 0.0
    %136 = vmatpush1.msra.mxu0 0.0
    %137 = vmatprep.subr.mxu0 0.0
    %138 = vmatpush1.msra.mxu0 0.0
    %139 = vmatprep.subr.mxu0 0.0
    %140 = vmatpush1.msra.mxu0 0.0
    %141 = vmatprep.subr.mxu0 0.0
    %142 = vmatpush1.msra.mxu0 0.0
    %143 = vmatprep.subr.mxu0 0.0
    %144 = vmatpush1.msra.mxu0 0.0
    %145 = vmatprep.subr.mxu0 0.0
    %146 = vmatpush1.msra.mxu0 0.0
    %147 = vmatprep.subr.mxu0 0.0
    %148 = vmatpush1.msra.mxu0 0.0
    %149 = vmatprep.subr.mxu0 0.0
    %150 = vmatpush1.msra.mxu0 0.0
    %151 = vmatprep.subr.mxu0 0.0
    %152 = vmatpush1.msra.mxu0 0.0
    %153 = vmatprep.subr.mxu0 0.0
    %154 = vmatpush1.msra.mxu0 0.0
    %155 = vmatprep.subr.mxu0 0.0
    %156 = vmatpush1.msra.mxu0 0.0
    %157 = vmatprep.subr.mxu0 0.0
    %158 = vmatpush1.msra.mxu0 0.0
    %159 = vmatprep.subr.mxu0 0.0
    %160 = vmatpush1.msra.mxu0 0.0
    %161 = vmatprep.mubr.f32.mxu0 0.0
    %162 = vmatmul.mubr.f32.gmra.mrb[0].mxu0 %v88
    %v163 = vpop.f32.mrb[0].mxu0
    %v164 = vadd.f32 %v84, %v163
    %v165 = vpop.f32.mrb[0].mxu0
    %166 = vmatprep.mubr.f32.mxu0 0.0
    %167 = vmatmul.mubr.f32.gmra.mrb[0].mxu0 %v91
    %v168 = vpop.f32.mrb[0].mxu0
    %v169 = vadd.f32 %v84, %v168
    %v170 = vpop.f32.mrb[0].mxu0
    %171 = vdwg.mxu0
    %172 = vst [vmem:[#allocation2] sm:$0x3] %v164
    %s173 = scalar_lea.vmem [#allocation2], 2
    %174 = vst [vmem:[%s173 - $0x2] sm:$0xc] %v164
    %s175 = scalar_lea.vmem [#allocation2], 4
    %176 = vst [vmem:[%s175 - $0x4] sm:$0x30] %v164
    %s177 = scalar_lea.vmem [#allocation2], 6
    %178 = vst [vmem:[%s177 - $0x6] sm:$0xc0] %v164
    %s179 = scalar_lea.vmem [#allocation2], 8
    %180 = vst [vmem:[%s179] sm:$0x3] %v169
    %s181 = scalar_lea.vmem [#allocation2], 10
    %182 = vst [vmem:[%s181 - $0x2] sm:$0xc] %v169
    %s183 = scalar_lea.vmem [#allocation2], 12
    %184 = vst [vmem:[%s183 - $0x4] sm:$0x30] %v169
    %s185 = scalar_lea.vmem [#allocation2], 14
    %186 = vst [vmem:[%s185 - $0x6] sm:$0xc0] %v169
    %v187 = vld [vmem:[#allocation2] sm:$0x3]
    %vm188 = vcmask 261120
    %v190 = vsel %vm188, 0.0, 0
    %192 = vmatprep.subr.mxu0 0.0
    %193 = vmatpush1.msra.mxu0 %v73
    %194 = vmatprep.subr.mxu0 0.0
    %195 = vmatpush1.msra.mxu0 %v74
    %196 = vmatprep.subr.mxu0 0.0
    %197 = vmatpush1.msra.mxu0 %v75
    %198 = vmatprep.subr.mxu0 0.0
    %199 = vmatpush1.msra.mxu0 %v76
    %200 = vmatprep.subr.mxu0 0.0
    %201 = vmatpush1.msra.mxu0 0.0
    %202 = vmatprep.subr.mxu0 0.0
    %203 = vmatpush1.msra.mxu0 0.0
    %204 = vmatprep.subr.mxu0 0.0
    %205 = vmatpush1.msra.mxu0 0.0
    %206 = vmatprep.subr.mxu0 0.0
    %207 = vmatpush1.msra.mxu0 0.0
    %208 = vmatprep.subr.mxu0 0.0
    %209 = vmatpush1.msra.mxu0 0.0
    %210 = vmatprep.subr.mxu0 0.0
    %211 = vmatpush1.msra.mxu0 0.0
    %212 = vmatprep.subr.mxu0 0.0
    %213 = vmatpush1.msra.mxu0 0.0
    %214 = vmatprep.subr.mxu0 0.0
    %215 = vmatpush1.msra.mxu0 0.0
    %216 = vmatprep.subr.mxu0 0.0
    %217 = vmatpush1.msra.mxu0 0.0
    %218 = vmatprep.subr.mxu0 0.0
    %219 = vmatpush1.msra.mxu0 0.0
    %220 = vmatprep.subr.mxu0 0.0
    %221 = vmatpush1.msra.mxu0 0.0
    %222 = vmatprep.subr.mxu0 0.0
    %223 = vmatpush1.msra.mxu0 0.0
    %224 = vmatprep.subr.mxu0 0.0
    %225 = vmatpush1.msra.mxu0 0.0
    %226 = vmatprep.subr.mxu0 0.0
    %227 = vmatpush1.msra.mxu0 0.0
    %228 = vmatprep.subr.mxu0 0.0
    %229 = vmatpush1.msra.mxu0 0.0
    %230 = vmatprep.subr.mxu0 0.0
    %231 = vmatpush1.msra.mxu0 0.0
    %232 = vmatprep.subr.mxu0 0.0
    %233 = vmatpush1.msra.mxu0 0.0
    %234 = vmatprep.subr.mxu0 0.0
    %235 = vmatpush1.msra.mxu0 0.0
    %236 = vmatprep.subr.mxu0 0.0
    %237 = vmatpush1.msra.mxu0 0.0
    %238 = vmatprep.subr.mxu0 0.0
    %239 = vmatpush1.msra.mxu0 0.0
    %240 = vmatprep.subr.mxu0 0.0
    %241 = vmatpush1.msra.mxu0 0.0
    %242 = vmatprep.subr.mxu0 0.0
    %243 = vmatpush1.msra.mxu0 0.0
    %244 = vmatprep.subr.mxu0 0.0
    %245 = vmatpush1.msra.mxu0 0.0
    %246 = vmatprep.subr.mxu0 0.0
    %247 = vmatpush1.msra.mxu0 0.0
    %248 = vmatprep.subr.mxu0 0.0
    %249 = vmatpush1.msra.mxu0 0.0
    %250 = vmatprep.subr.mxu0 0.0
    %251 = vmatpush1.msra.mxu0 0.0
    %252 = vmatprep.subr.mxu0 0.0
    %253 = vmatpush1.msra.mxu0 0.0
    %254 = vmatprep.subr.mxu0 0.0
    %255 = vmatpush1.msra.mxu0 0.0
    %256 = vmatprep.mubr.f32.mxu0 0.0
    %257 = vmatmul.mubr.f32.gmra.mrb[0].mxu0 %v190
    %v258 = vpop.f32.mrb[0].mxu0
    %v259 = vadd.f32 0.0, %v258
    %v260 = vpop.f32.mrb[0].mxu0
    %261 = vdwg.mxu0
    %v262 = vadd.f32 %v187, %v259
    %v263 = vxor.u32 %v262, 2147483648
    %v264 = vmul.f32 %v263, 1.442695
    %v265 = vpow.pop %v264
    %v266 = vadd.f32 %v265, 1.0
    %v267 = vrcp.pop %v266
    %v268 = vmul.f32 1.0, %v267
    %v269 = vtanh.pop %v262
    %v270 = vmul.f32 %v268, 0.0
    %272 = vrot.lane.b32.xlu0 %v269, 64
    %v273 = vpop.permute.xlu0 %272
    %v275 = vmul.f32 %v268, %v273
    %277 = vrot.lane.b32.xlu0 %v275, 32
    %v278 = vpop.permute.xlu0 %277
    %v280 = vadd.f32 %v270, %v278
    %v281 = vtanh.pop %v280
    %283 = vrot.lane.b32.xlu0 %v281, 64
    %v284 = vpop.permute.xlu0 %283
    %v286 = vmul.f32 %v268, %v284
    %288 = vrot.lane.b32.xlu0 %v286, 32
    %v289 = vpop.permute.xlu0 %288
    %vm291 = vcmask 254976
    %292 = vst.msk [vmem:[#allocation3] sm:$0x3] %vm291, %v289
    %v293 = vld [vmem:[%s173] sm:$0x3]
    %v294 = vsel %vm188, %v289, 0
    %296 = vmatprep.subr.mxu0 0.0
    %297 = vmatpush1.msra.mxu0 %v73
    %298 = vmatprep.subr.mxu0 0.0
    %299 = vmatpush1.msra.mxu0 %v74
    %300 = vmatprep.subr.mxu0 0.0
    %301 = vmatpush1.msra.mxu0 %v75
    %302 = vmatprep.subr.mxu0 0.0
    %303 = vmatpush1.msra.mxu0 %v76
    %304 = vmatprep.subr.mxu0 0.0
    %305 = vmatpush1.msra.mxu0 0.0
    %306 = vmatprep.subr.mxu0 0.0
    %307 = vmatpush1.msra.mxu0 0.0
    %308 = vmatprep.subr.mxu0 0.0
    %309 = vmatpush1.msra.mxu0 0.0
    %310 = vmatprep.subr.mxu0 0.0
    %311 = vmatpush1.msra.mxu0 0.0
    %312 = vmatprep.subr.mxu0 0.0
    %313 = vmatpush1.msra.mxu0 0.0
    %314 = vmatprep.subr.mxu0 0.0
    %315 = vmatpush1.msra.mxu0 0.0
    %316 = vmatprep.subr.mxu0 0.0
    %317 = vmatpush1.msra.mxu0 0.0
    %318 = vmatprep.subr.mxu0 0.0
    %319 = vmatpush1.msra.mxu0 0.0
    %320 = vmatprep.subr.mxu0 0.0
    %321 = vmatpush1.msra.mxu0 0.0
    %322 = vmatprep.subr.mxu0 0.0
    %323 = vmatpush1.msra.mxu0 0.0
    %324 = vmatprep.subr.mxu0 0.0
    %325 = vmatpush1.msra.mxu0 0.0
    %326 = vmatprep.subr.mxu0 0.0
    %327 = vmatpush1.msra.mxu0 0.0
    %328 = vmatprep.subr.mxu0 0.0
    %329 = vmatpush1.msra.mxu0 0.0
    %330 = vmatprep.subr.mxu0 0.0
    %331 = vmatpush1.msra.mxu0 0.0
    %332 = vmatprep.subr.mxu0 0.0
    %333 = vmatpush1.msra.mxu0 0.0
    %334 = vmatprep.subr.mxu0 0.0
    %335 = vmatpush1.msra.mxu0 0.0
    %336 = vmatprep.subr.mxu0 0.0
    %337 = vmatpush1.msra.mxu0 0.0
    %338 = vmatprep.subr.mxu0 0.0
    %339 = vmatpush1.msra.mxu0 0.0
    %340 = vmatprep.subr.mxu0 0.0
    %341 = vmatpush1.msra.mxu0 0.0
    %342 = vmatprep.subr.mxu0 0.0
    %343 = vmatpush1.msra.mxu0 0.0
    %344 = vmatprep.subr.mxu0 0.0
    %345 = vmatpush1.msra.mxu0 0.0
    %346 = vmatprep.subr.mxu0 0.0
    %347 = vmatpush1.msra.mxu0 0.0
    %348 = vmatprep.subr.mxu0 0.0
    %349 = vmatpush1.msra.mxu0 0.0
    %350 = vmatprep.subr.mxu0 0.0
    %351 = vmatpush1.msra.mxu0 0.0
    %352 = vmatprep.subr.mxu0 0.0
    %353 = vmatpush1.msra.mxu0 0.0
    %354 = vmatprep.subr.mxu0 0.0
    %355 = vmatpush1.msra.mxu0 0.0
    %356 = vmatprep.subr.mxu0 0.0
    %357 = vmatpush1.msra.mxu0 0.0
    %358 = vmatprep.subr.mxu0 0.0
    %359 = vmatpush1.msra.mxu0 0.0
    %360 = vmatprep.mubr.f32.mxu0 0.0
    %361 = vmatmul.mubr.f32.gmra.mrb[0].mxu0 %v294
    %v362 = vpop.f32.mrb[0].mxu0
    %v363 = vadd.f32 0.0, %v362
    %v364 = vpop.f32.mrb[0].mxu0
    %365 = vdwg.mxu0
    %v366 = vadd.f32 %v293, %v363
    %v367 = vxor.u32 %v366, 2147483648
    %v368 = vmul.f32 %v367, 1.442695
    %v369 = vpow.pop %v368
    %v370 = vadd.f32 %v369, 1.0
    %v371 = vrcp.pop %v370
    %v372 = vmul.f32 1.0, %v371
    %v373 = vtanh.pop %v366
    %v374 = vmul.f32 %v372, %v280
    %376 = vrot.lane.b32.xlu0 %v373, 64
    %v377 = vpop.permute.xlu0 %376
    %v379 = vmul.f32 %v372, %v377
    %381 = vrot.lane.b32.xlu0 %v379, 32
    %v382 = vpop.permute.xlu0 %381
    %v384 = vadd.f32 %v374, %v382
    %v385 = vtanh.pop %v384
    %387 = vrot.lane.b32.xlu0 %v385, 64
    %v388 = vpop.permute.xlu0 %387
    %v390 = vmul.f32 %v372, %v388
    %392 = vrot.lane.b32.xlu0 %v390, 32
    %v393 = vpop.permute.xlu0 %392
    %s395 = scalar_lea.vmem [#allocation3], 2
    %396 = vst.msk [vmem:[%s395] sm:$0x3] %vm291, %v393
    %v397 = vld [vmem:[%s175] sm:$0x3]
    %v398 = vsel %vm188, %v393, 0
    %400 = vmatprep.subr.mxu0 0.0
    %401 = vmatpush1.msra.mxu0 %v73
    %402 = vmatprep.subr.mxu0 0.0
    %403 = vmatpush1.msra.mxu0 %v74
    %404 = vmatprep.subr.mxu0 0.0
    %405 = vmatpush1.msra.mxu0 %v75
    %406 = vmatprep.subr.mxu0 0.0
    %407 = vmatpush1.msra.mxu0 %v76
    %408 = vmatprep.subr.mxu0 0.0
    %409 = vmatpush1.msra.mxu0 0.0
    %410 = vmatprep.subr.mxu0 0.0
    %411 = vmatpush1.msra.mxu0 0.0
    %412 = vmatprep.subr.mxu0 0.0
    %413 = vmatpush1.msra.mxu0 0.0
    %414 = vmatprep.subr.mxu0 0.0
    %415 = vmatpush1.msra.mxu0 0.0
    %416 = vmatprep.subr.mxu0 0.0
    %417 = vmatpush1.msra.mxu0 0.0
    %418 = vmatprep.subr.mxu0 0.0
    %419 = vmatpush1.msra.mxu0 0.0
    %420 = vmatprep.subr.mxu0 0.0
    %421 = vmatpush1.msra.mxu0 0.0
    %422 = vmatprep.subr.mxu0 0.0
    %423 = vmatpush1.msra.mxu0 0.0
    %424 = vmatprep.subr.mxu0 0.0
    %425 = vmatpush1.msra.mxu0 0.0
    %426 = vmatprep.subr.mxu0 0.0
    %427 = vmatpush1.msra.mxu0 0.0
    %428 = vmatprep.subr.mxu0 0.0
    %429 = vmatpush1.msra.mxu0 0.0
    %430 = vmatprep.subr.mxu0 0.0
    %431 = vmatpush1.msra.mxu0 0.0
    %432 = vmatprep.subr.mxu0 0.0
    %433 = vmatpush1.msra.mxu0 0.0
    %434 = vmatprep.subr.mxu0 0.0
    %435 = vmatpush1.msra.mxu0 0.0
    %436 = vmatprep.subr.mxu0 0.0
    %437 = vmatpush1.msra.mxu0 0.0
    %438 = vmatprep.subr.mxu0 0.0
    %439 = vmatpush1.msra.mxu0 0.0
    %440 = vmatprep.subr.mxu0 0.0
    %441 = vmatpush1.msra.mxu0 0.0
    %442 = vmatprep.subr.mxu0 0.0
    %443 = vmatpush1.msra.mxu0 0.0
    %444 = vmatprep.subr.mxu0 0.0
    %445 = vmatpush1.msra.mxu0 0.0
    %446 = vmatprep.subr.mxu0 0.0
    %447 = vmatpush1.msra.mxu0 0.0
    %448 = vmatprep.subr.mxu0 0.0
    %449 = vmatpush1.msra.mxu0 0.0
    %450 = vmatprep.subr.mxu0 0.0
    %451 = vmatpush1.msra.mxu0 0.0
    %452 = vmatprep.subr.mxu0 0.0
    %453 = vmatpush1.msra.mxu0 0.0
    %454 = vmatprep.subr.mxu0 0.0
    %455 = vmatpush1.msra.mxu0 0.0
    %456 = vmatprep.subr.mxu0 0.0
    %457 = vmatpush1.msra.mxu0 0.0
    %458 = vmatprep.subr.mxu0 0.0
    %459 = vmatpush1.msra.mxu0 0.0
    %460 = vmatprep.subr.mxu0 0.0
    %461 = vmatpush1.msra.mxu0 0.0
    %462 = vmatprep.subr.mxu0 0.0
    %463 = vmatpush1.msra.mxu0 0.0
    %464 = vmatprep.mubr.f32.mxu0 0.0
    %465 = vmatmul.mubr.f32.gmra.mrb[0].mxu0 %v398
    %v466 = vpop.f32.mrb[0].mxu0
    %v467 = vadd.f32 0.0, %v466
    %v468 = vpop.f32.mrb[0].mxu0
    %469 = vdwg.mxu0
    %v470 = vadd.f32 %v397, %v467
    %v471 = vxor.u32 %v470, 2147483648
    %v472 = vmul.f32 %v471, 1.442695
    %v473 = vpow.pop %v472
    %v474 = vadd.f32 %v473, 1.0
    %v475 = vrcp.pop %v474
    %v476 = vmul.f32 1.0, %v475
    %v477 = vtanh.pop %v470
    %v478 = vmul.f32 %v476, %v384
    %480 = vrot.lane.b32.xlu0 %v477, 64
    %v481 = vpop.permute.xlu0 %480
    %v483 = vmul.f32 %v476, %v481
    %485 = vrot.lane.b32.xlu0 %v483, 32
    %v486 = vpop.permute.xlu0 %485
    %v488 = vadd.f32 %v478, %v486
    %v489 = vtanh.pop %v488
    %491 = vrot.lane.b32.xlu0 %v489, 64
    %v492 = vpop.permute.xlu0 %491
    %v494 = vmul.f32 %v476, %v492
    %496 = vrot.lane.b32.xlu0 %v494, 32
    %v497 = vpop.permute.xlu0 %496
    %s499 = scalar_lea.vmem [#allocation3], 4
    %500 = vst.msk [vmem:[%s499] sm:$0x3] %vm291, %v497
    %v501 = vld [vmem:[%s177] sm:$0x3]
    %v502 = vsel %vm188, %v497, 0
    %504 = vmatprep.subr.mxu0 0.0
    %505 = vmatpush1.msra.mxu0 %v73
    %506 = vmatprep.subr.mxu0 0.0
    %507 = vmatpush1.msra.mxu0 %v74
    %508 = vmatprep.subr.mxu0 0.0
    %509 = vmatpush1.msra.mxu0 %v75
    %510 = vmatprep.subr.mxu0 0.0
    %511 = vmatpush1.msra.mxu0 %v76
    %512 = vmatprep.subr.mxu0 0.0
    %513 = vmatpush1.msra.mxu0 0.0
    %514 = vmatprep.subr.mxu0 0.0
    %515 = vmatpush1.msra.mxu0 0.0
    %516 = vmatprep.subr.mxu0 0.0
    %517 = vmatpush1.msra.mxu0 0.0
    %518 = vmatprep.subr.mxu0 0.0
    %519 = vmatpush1.msra.mxu0 0.0
    %520 = vmatprep.subr.mxu0 0.0
    %521 = vmatpush1.msra.mxu0 0.0
    %522 = vmatprep.subr.mxu0 0.0
    %523 = vmatpush1.msra.mxu0 0.0
    %524 = vmatprep.subr.mxu0 0.0
    %525 = vmatpush1.msra.mxu0 0.0
    %526 = vmatprep.subr.mxu0 0.0
    %527 = vmatpush1.msra.mxu0 0.0
    %528 = vmatprep.subr.mxu0 0.0
    %529 = vmatpush1.msra.mxu0 0.0
    %530 = vmatprep.subr.mxu0 0.0
    %531 = vmatpush1.msra.mxu0 0.0
    %532 = vmatprep.subr.mxu0 0.0
    %533 = vmatpush1.msra.mxu0 0.0
    %534 = vmatprep.subr.mxu0 0.0
    %535 = vmatpush1.msra.mxu0 0.0
    %536 = vmatprep.subr.mxu0 0.0
    %537 = vmatpush1.msra.mxu0 0.0
    %538 = vmatprep.subr.mxu0 0.0
    %539 = vmatpush1.msra.mxu0 0.0
    %540 = vmatprep.subr.mxu0 0.0
    %541 = vmatpush1.msra.mxu0 0.0
    %542 = vmatprep.subr.mxu0 0.0
    %543 = vmatpush1.msra.mxu0 0.0
    %544 = vmatprep.subr.mxu0 0.0
    %545 = vmatpush1.msra.mxu0 0.0
    %546 = vmatprep.subr.mxu0 0.0
    %547 = vmatpush1.msra.mxu0 0.0
    %548 = vmatprep.subr.mxu0 0.0
    %549 = vmatpush1.msra.mxu0 0.0
    %550 = vmatprep.subr.mxu0 0.0
    %551 = vmatpush1.msra.mxu0 0.0
    %552 = vmatprep.subr.mxu0 0.0
    %553 = vmatpush1.msra.mxu0 0.0
    %554 = vmatprep.subr.mxu0 0.0
    %555 = vmatpush1.msra.mxu0 0.0
    %556 = vmatprep.subr.mxu0 0.0
    %557 = vmatpush1.msra.mxu0 0.0
    %558 = vmatprep.subr.mxu0 0.0
    %559 = vmatpush1.msra.mxu0 0.0
    %560 = vmatprep.subr.mxu0 0.0
    %561 = vmatpush1.msra.mxu0 0.0
    %562 = vmatprep.subr.mxu0 0.0
    %563 = vmatpush1.msra.mxu0 0.0
    %564 = vmatprep.subr.mxu0 0.0
    %565 = vmatpush1.msra.mxu0 0.0
    %566 = vmatprep.subr.mxu0 0.0
    %567 = vmatpush1.msra.mxu0 0.0
    %568 = vmatprep.mubr.f32.mxu0 0.0
    %569 = vmatmul.mubr.f32.gmra.mrb[0].mxu0 %v502
    %v570 = vpop.f32.mrb[0].mxu0
    %v571 = vadd.f32 0.0, %v570
    %v572 = vpop.f32.mrb[0].mxu0
    %573 = vdwg.mxu0
    %v574 = vadd.f32 %v501, %v571
    %v575 = vxor.u32 %v574, 2147483648
    %v576 = vmul.f32 %v575, 1.442695
    %v577 = vpow.pop %v576
    %v578 = vadd.f32 %v577, 1.0
    %v579 = vrcp.pop %v578
    %v580 = vmul.f32 1.0, %v579
    %v581 = vtanh.pop %v574
    %v582 = vmul.f32 %v580, %v488
    %584 = vrot.lane.b32.xlu0 %v581, 64
    %v585 = vpop.permute.xlu0 %584
    %v587 = vmul.f32 %v580, %v585
    %589 = vrot.lane.b32.xlu0 %v587, 32
    %v590 = vpop.permute.xlu0 %589
    %v592 = vadd.f32 %v582, %v590
    %v593 = vtanh.pop %v592
    %595 = vrot.lane.b32.xlu0 %v593, 64
    %v596 = vpop.permute.xlu0 %595
    %v598 = vmul.f32 %v580, %v596
    %600 = vrot.lane.b32.xlu0 %v598, 32
    %v601 = vpop.permute.xlu0 %600
    %s603 = scalar_lea.vmem [#allocation3], 6
    %604 = vst.msk [vmem:[%s603] sm:$0x3] %vm291, %v601
    %v605 = vld [vmem:[%s179] sm:$0x3]
    %v606 = vsel %vm188, %v601, 0
    %608 = vmatprep.subr.mxu0 0.0
    %609 = vmatpush1.msra.mxu0 %v73
    %610 = vmatprep.subr.mxu0 0.0
    %611 = vmatpush1.msra.mxu0 %v74
    %612 = vmatprep.subr.mxu0 0.0
    %613 = vmatpush1.msra.mxu0 %v75
    %614 = vmatprep.subr.mxu0 0.0
    %615 = vmatpush1.msra.mxu0 %v76
    %616 = vmatprep.subr.mxu0 0.0
    %617 = vmatpush1.msra.mxu0 0.0
    %618 = vmatprep.subr.mxu0 0.0
    %619 = vmatpush1.msra.mxu0 0.0
    %620 = vmatprep.subr.mxu0 0.0
    %621 = vmatpush1.msra.mxu0 0.0
    %622 = vmatprep.subr.mxu0 0.0
    %623 = vmatpush1.msra.mxu0 0.0
    %624 = vmatprep.subr.mxu0 0.0
    %625 = vmatpush1.msra.mxu0 0.0
    %626 = vmatprep.subr.mxu0 0.0
    %627 = vmatpush1.msra.mxu0 0.0
    %628 = vmatprep.subr.mxu0 0.0
    %629 = vmatpush1.msra.mxu0 0.0
    %630 = vmatprep.subr.mxu0 0.0
    %631 = vmatpush1.msra.mxu0 0.0
    %632 = vmatprep.subr.mxu0 0.0
    %633 = vmatpush1.msra.mxu0 0.0
    %634 = vmatprep.subr.mxu0 0.0
    %635 = vmatpush1.msra.mxu0 0.0
    %636 = vmatprep.subr.mxu0 0.0
    %637 = vmatpush1.msra.mxu0 0.0
    %638 = vmatprep.subr.mxu0 0.0
    %639 = vmatpush1.msra.mxu0 0.0
    %640 = vmatprep.subr.mxu0 0.0
    %641 = vmatpush1.msra.mxu0 0.0
    %642 = vmatprep.subr.mxu0 0.0
    %643 = vmatpush1.msra.mxu0 0.0
    %644 = vmatprep.subr.mxu0 0.0
    %645 = vmatpush1.msra.mxu0 0.0
    %646 = vmatprep.subr.mxu0 0.0
    %647 = vmatpush1.msra.mxu0 0.0
    %648 = vmatprep.subr.mxu0 0.0
    %649 = vmatpush1.msra.mxu0 0.0
    %650 = vmatprep.subr.mxu0 0.0
    %651 = vmatpush1.msra.mxu0 0.0
    %652 = vmatprep.subr.mxu0 0.0
    %653 = vmatpush1.msra.mxu0 0.0
    %654 = vmatprep.subr.mxu0 0.0
    %655 = vmatpush1.msra.mxu0 0.0
    %656 = vmatprep.subr.mxu0 0.0
    %657 = vmatpush1.msra.mxu0 0.0
    %658 = vmatprep.subr.mxu0 0.0
    %659 = vmatpush1.msra.mxu0 0.0
    %660 = vmatprep.subr.mxu0 0.0
    %661 = vmatpush1.msra.mxu0 0.0
    %662 = vmatprep.subr.mxu0 0.0
    %663 = vmatpush1.msra.mxu0 0.0
    %664 = vmatprep.subr.mxu0 0.0
    %665 = vmatpush1.msra.mxu0 0.0
    %666 = vmatprep.subr.mxu0 0.0
    %667 = vmatpush1.msra.mxu0 0.0
    %668 = vmatprep.subr.mxu0 0.0
    %669 = vmatpush1.msra.mxu0 0.0
    %670 = vmatprep.subr.mxu0 0.0
    %671 = vmatpush1.msra.mxu0 0.0
    %672 = vmatprep.mubr.f32.mxu0 0.0
    %673 = vmatmul.mubr.f32.gmra.mrb[0].mxu0 %v606
    %v674 = vpop.f32.mrb[0].mxu0
    %v675 = vadd.f32 0.0, %v674
    %v676 = vpop.f32.mrb[0].mxu0
    %677 = vdwg.mxu0
    %v678 = vadd.f32 %v605, %v675
    %v679 = vxor.u32 %v678, 2147483648
    %v680 = vmul.f32 %v679, 1.442695
    %v681 = vpow.pop %v680
    %v682 = vadd.f32 %v681, 1.0
    %v683 = vrcp.pop %v682
    %v684 = vmul.f32 1.0, %v683
    %v685 = vtanh.pop %v678
    %v686 = vmul.f32 %v684, %v592
    %688 = vrot.lane.b32.xlu0 %v685, 64
    %v689 = vpop.permute.xlu0 %688
    %v691 = vmul.f32 %v684, %v689
    %693 = vrot.lane.b32.xlu0 %v691, 32
    %v694 = vpop.permute.xlu0 %693
    %v696 = vadd.f32 %v686, %v694
    %v697 = vtanh.pop %v696
    %699 = vrot.lane.b32.xlu0 %v697, 64
    %v700 = vpop.permute.xlu0 %699
    %v702 = vmul.f32 %v684, %v700
    %704 = vrot.lane.b32.xlu0 %v702, 32
    %v705 = vpop.permute.xlu0 %704
    %s707 = scalar_lea.vmem [#allocation3], 8
    %708 = vst.msk [vmem:[%s707] sm:$0x3] %vm291, %v705
    %v709 = vld [vmem:[%s181] sm:$0x3]
    %v710 = vsel %vm188, %v705, 0
    %712 = vmatprep.subr.mxu0 0.0
    %713 = vmatpush1.msra.mxu0 %v73
    %714 = vmatprep.subr.mxu0 0.0
    %715 = vmatpush1.msra.mxu0 %v74
    %716 = vmatprep.subr.mxu0 0.0
    %717 = vmatpush1.msra.mxu0 %v75
    %718 = vmatprep.subr.mxu0 0.0
    %719 = vmatpush1.msra.mxu0 %v76
    %720 = vmatprep.subr.mxu0 0.0
    %721 = vmatpush1.msra.mxu0 0.0
    %722 = vmatprep.subr.mxu0 0.0
    %723 = vmatpush1.msra.mxu0 0.0
    %724 = vmatprep.subr.mxu0 0.0
    %725 = vmatpush1.msra.mxu0 0.0
    %726 = vmatprep.subr.mxu0 0.0
    %727 = vmatpush1.msra.mxu0 0.0
    %728 = vmatprep.subr.mxu0 0.0
    %729 = vmatpush1.msra.mxu0 0.0
    %730 = vmatprep.subr.mxu0 0.0
    %731 = vmatpush1.msra.mxu0 0.0
    %732 = vmatprep.subr.mxu0 0.0
    %733 = vmatpush1.msra.mxu0 0.0
    %734 = vmatprep.subr.mxu0 0.0
    %735 = vmatpush1.msra.mxu0 0.0
    %736 = vmatprep.subr.mxu0 0.0
    %737 = vmatpush1.msra.mxu0 0.0
    %738 = vmatprep.subr.mxu0 0.0
    %739 = vmatpush1.msra.mxu0 0.0
    %740 = vmatprep.subr.mxu0 0.0
    %741 = vmatpush1.msra.mxu0 0.0
    %742 = vmatprep.subr.mxu0 0.0
    %743 = vmatpush1.msra.mxu0 0.0
    %744 = vmatprep.subr.mxu0 0.0
    %745 = vmatpush1.msra.mxu0 0.0
    %746 = vmatprep.subr.mxu0 0.0
    %747 = vmatpush1.msra.mxu0 0.0
    %748 = vmatprep.subr.mxu0 0.0
    %749 = vmatpush1.msra.mxu0 0.0
    %750 = vmatprep.subr.mxu0 0.0
    %751 = vmatpush1.msra.mxu0 0.0
    %752 = vmatprep.subr.mxu0 0.0
    %753 = vmatpush1.msra.mxu0 0.0
    %754 = vmatprep.subr.mxu0 0.0
    %755 = vmatpush1.msra.mxu0 0.0
    %756 = vmatprep.subr.mxu0 0.0
    %757 = vmatpush1.msra.mxu0 0.0
    %758 = vmatprep.subr.mxu0 0.0
    %759 = vmatpush1.msra.mxu0 0.0
    %760 = vmatprep.subr.mxu0 0.0
    %761 = vmatpush1.msra.mxu0 0.0
    %762 = vmatprep.subr.mxu0 0.0
    %763 = vmatpush1.msra.mxu0 0.0
    %764 = vmatprep.subr.mxu0 0.0
    %765 = vmatpush1.msra.mxu0 0.0
    %766 = vmatprep.subr.mxu0 0.0
    %767 = vmatpush1.msra.mxu0 0.0
    %768 = vmatprep.subr.mxu0 0.0
    %769 = vmatpush1.msra.mxu0 0.0
    %770 = vmatprep.subr.mxu0 0.0
    %771 = vmatpush1.msra.mxu0 0.0
    %772 = vmatprep.subr.mxu0 0.0
    %773 = vmatpush1.msra.mxu0 0.0
    %774 = vmatprep.subr.mxu0 0.0
    %775 = vmatpush1.msra.mxu0 0.0
    %776 = vmatprep.mubr.f32.mxu0 0.0
    %777 = vmatmul.mubr.f32.gmra.mrb[0].mxu0 %v710
    %v778 = vpop.f32.mrb[0].mxu0
    %v779 = vadd.f32 0.0, %v778
    %v780 = vpop.f32.mrb[0].mxu0
    %781 = vdwg.mxu0
    %v782 = vadd.f32 %v709, %v779
    %v783 = vxor.u32 %v782, 2147483648
    %v784 = vmul.f32 %v783, 1.442695
    %v785 = vpow.pop %v784
    %v786 = vadd.f32 %v785, 1.0
    %v787 = vrcp.pop %v786
    %v788 = vmul.f32 1.0, %v787
    %v789 = vtanh.pop %v782
    %v790 = vmul.f32 %v788, %v696
    %792 = vrot.lane.b32.xlu0 %v789, 64
    %v793 = vpop.permute.xlu0 %792
    %v795 = vmul.f32 %v788, %v793
    %797 = vrot.lane.b32.xlu0 %v795, 32
    %v798 = vpop.permute.xlu0 %797
    %v800 = vadd.f32 %v790, %v798
    %v801 = vtanh.pop %v800
    %803 = vrot.lane.b32.xlu0 %v801, 64
    %v804 = vpop.permute.xlu0 %803
    %v806 = vmul.f32 %v788, %v804
    %808 = vrot.lane.b32.xlu0 %v806, 32
    %v809 = vpop.permute.xlu0 %808
    %s811 = scalar_lea.vmem [#allocation3], 10
    %812 = vst.msk [vmem:[%s811] sm:$0x3] %vm291, %v809
    %v813 = vld [vmem:[%s183] sm:$0x3]
    %v814 = vsel %vm188, %v809, 0
    %816 = vmatprep.subr.mxu0 0.0
    %817 = vmatpush1.msra.mxu0 %v73
    %818 = vmatprep.subr.mxu0 0.0
    %819 = vmatpush1.msra.mxu0 %v74
    %820 = vmatprep.subr.mxu0 0.0
    %821 = vmatpush1.msra.mxu0 %v75
    %822 = vmatprep.subr.mxu0 0.0
    %823 = vmatpush1.msra.mxu0 %v76
    %824 = vmatprep.subr.mxu0 0.0
    %825 = vmatpush1.msra.mxu0 0.0
    %826 = vmatprep.subr.mxu0 0.0
    %827 = vmatpush1.msra.mxu0 0.0
    %828 = vmatprep.subr.mxu0 0.0
    %829 = vmatpush1.msra.mxu0 0.0
    %830 = vmatprep.subr.mxu0 0.0
    %831 = vmatpush1.msra.mxu0 0.0
    %832 = vmatprep.subr.mxu0 0.0
    %833 = vmatpush1.msra.mxu0 0.0
    %834 = vmatprep.subr.mxu0 0.0
    %835 = vmatpush1.msra.mxu0 0.0
    %836 = vmatprep.subr.mxu0 0.0
    %837 = vmatpush1.msra.mxu0 0.0
    %838 = vmatprep.subr.mxu0 0.0
    %839 = vmatpush1.msra.mxu0 0.0
    %840 = vmatprep.subr.mxu0 0.0
    %841 = vmatpush1.msra.mxu0 0.0
    %842 = vmatprep.subr.mxu0 0.0
    %843 = vmatpush1.msra.mxu0 0.0
    %844 = vmatprep.subr.mxu0 0.0
    %845 = vmatpush1.msra.mxu0 0.0
    %846 = vmatprep.subr.mxu0 0.0
    %847 = vmatpush1.msra.mxu0 0.0
    %848 = vmatprep.subr.mxu0 0.0
    %849 = vmatpush1.msra.mxu0 0.0
    %850 = vmatprep.subr.mxu0 0.0
    %851 = vmatpush1.msra.mxu0 0.0
    %852 = vmatprep.subr.mxu0 0.0
    %853 = vmatpush1.msra.mxu0 0.0
    %854 = vmatprep.subr.mxu0 0.0
    %855 = vmatpush1.msra.mxu0 0.0
    %856 = vmatprep.subr.mxu0 0.0
    %857 = vmatpush1.msra.mxu0 0.0
    %858 = vmatprep.subr.mxu0 0.0
    %859 = vmatpush1.msra.mxu0 0.0
    %860 = vmatprep.subr.mxu0 0.0
    %861 = vmatpush1.msra.mxu0 0.0
    %862 = vmatprep.subr.mxu0 0.0
    %863 = vmatpush1.msra.mxu0 0.0
    %864 = vmatprep.subr.mxu0 0.0
    %865 = vmatpush1.msra.mxu0 0.0
    %866 = vmatprep.subr.mxu0 0.0
    %867 = vmatpush1.msra.mxu0 0.0
    %868 = vmatprep.subr.mxu0 0.0
    %869 = vmatpush1.msra.mxu0 0.0
    %870 = vmatprep.subr.mxu0 0.0
    %871 = vmatpush1.msra.mxu0 0.0
    %872 = vmatprep.subr.mxu0 0.0
    %873 = vmatpush1.msra.mxu0 0.0
    %874 = vmatprep.subr.mxu0 0.0
    %875 = vmatpush1.msra.mxu0 0.0
    %876 = vmatprep.subr.mxu0 0.0
    %877 = vmatpush1.msra.mxu0 0.0
    %878 = vmatprep.subr.mxu0 0.0
    %879 = vmatpush1.msra.mxu0 0.0
    %880 = vmatprep.mubr.f32.mxu0 0.0
    %881 = vmatmul.mubr.f32.gmra.mrb[0].mxu0 %v814
    %v882 = vpop.f32.mrb[0].mxu0
    %v883 = vadd.f32 0.0, %v882
    %v884 = vpop.f32.mrb[0].mxu0
    %885 = vdwg.mxu0
    %v886 = vadd.f32 %v813, %v883
    %v887 = vxor.u32 %v886, 2147483648
    %v888 = vmul.f32 %v887, 1.442695
    %v889 = vpow.pop %v888
    %v890 = vadd.f32 %v889, 1.0
    %v891 = vrcp.pop %v890
    %v892 = vmul.f32 1.0, %v891
    %v893 = vtanh.pop %v886
    %v894 = vmul.f32 %v892, %v800
    %896 = vrot.lane.b32.xlu0 %v893, 64
    %v897 = vpop.permute.xlu0 %896
    %v899 = vmul.f32 %v892, %v897
    %901 = vrot.lane.b32.xlu0 %v899, 32
    %v902 = vpop.permute.xlu0 %901
    %v904 = vadd.f32 %v894, %v902
    %v905 = vtanh.pop %v904
    %907 = vrot.lane.b32.xlu0 %v905, 64
    %v908 = vpop.permute.xlu0 %907
    %v910 = vmul.f32 %v892, %v908
    %912 = vrot.lane.b32.xlu0 %v910, 32
    %v913 = vpop.permute.xlu0 %912
    %s915 = scalar_lea.vmem [#allocation3], 12
    %916 = vst.msk [vmem:[%s915] sm:$0x3] %vm291, %v913
    %v917 = vld [vmem:[%s185] sm:$0x3]
    %v918 = vsel %vm188, %v913, 0
    %920 = vmatprep.subr.mxu0 0.0
    %921 = vmatpush1.msra.mxu0 %v73
    %922 = vmatprep.subr.mxu0 0.0
    %923 = vmatpush1.msra.mxu0 %v74
    %924 = vmatprep.subr.mxu0 0.0
    %925 = vmatpush1.msra.mxu0 %v75
    %926 = vmatprep.subr.mxu0 0.0
    %927 = vmatpush1.msra.mxu0 %v76
    %928 = vmatprep.subr.mxu0 0.0
    %929 = vmatpush1.msra.mxu0 0.0
    %930 = vmatprep.subr.mxu0 0.0
    %931 = vmatpush1.msra.mxu0 0.0
    %932 = vmatprep.subr.mxu0 0.0
    %933 = vmatpush1.msra.mxu0 0.0
    %934 = vmatprep.subr.mxu0 0.0
    %935 = vmatpush1.msra.mxu0 0.0
    %936 = vmatprep.subr.mxu0 0.0
    %937 = vmatpush1.msra.mxu0 0.0
    %938 = vmatprep.subr.mxu0 0.0
    %939 = vmatpush1.msra.mxu0 0.0
    %940 = vmatprep.subr.mxu0 0.0
    %941 = vmatpush1.msra.mxu0 0.0
    %942 = vmatprep.subr.mxu0 0.0
    %943 = vmatpush1.msra.mxu0 0.0
    %944 = vmatprep.subr.mxu0 0.0
    %945 = vmatpush1.msra.mxu0 0.0
    %946 = vmatprep.subr.mxu0 0.0
    %947 = vmatpush1.msra.mxu0 0.0
    %948 = vmatprep.subr.mxu0 0.0
    %949 = vmatpush1.msra.mxu0 0.0
    %950 = vmatprep.subr.mxu0 0.0
    %951 = vmatpush1.msra.mxu0 0.0
    %952 = vmatprep.subr.mxu0 0.0
    %953 = vmatpush1.msra.mxu0 0.0
    %954 = vmatprep.subr.mxu0 0.0
    %955 = vmatpush1.msra.mxu0 0.0
    %956 = vmatprep.subr.mxu0 0.0
    %957 = vmatpush1.msra.mxu0 0.0
    %958 = vmatprep.subr.mxu0 0.0
    %959 = vmatpush1.msra.mxu0 0.0
    %960 = vmatprep.subr.mxu0 0.0
    %961 = vmatpush1.msra.mxu0 0.0
    %962 = vmatprep.subr.mxu0 0.0
    %963 = vmatpush1.msra.mxu0 0.0
    %964 = vmatprep.subr.mxu0 0.0
    %965 = vmatpush1.msra.mxu0 0.0
    %966 = vmatprep.subr.mxu0 0.0
    %967 = vmatpush1.msra.mxu0 0.0
    %968 = vmatprep.subr.mxu0 0.0
    %969 = vmatpush1.msra.mxu0 0.0
    %970 = vmatprep.subr.mxu0 0.0
    %971 = vmatpush1.msra.mxu0 0.0
    %972 = vmatprep.subr.mxu0 0.0
    %973 = vmatpush1.msra.mxu0 0.0
    %974 = vmatprep.subr.mxu0 0.0
    %975 = vmatpush1.msra.mxu0 0.0
    %976 = vmatprep.subr.mxu0 0.0
    %977 = vmatpush1.msra.mxu0 0.0
    %978 = vmatprep.subr.mxu0 0.0
    %979 = vmatpush1.msra.mxu0 0.0
    %980 = vmatprep.subr.mxu0 0.0
    %981 = vmatpush1.msra.mxu0 0.0
    %982 = vmatprep.subr.mxu0 0.0
    %983 = vmatpush1.msra.mxu0 0.0
    %984 = vmatprep.mubr.f32.mxu0 0.0
    %985 = vmatmul.mubr.f32.gmra.mrb[0].mxu0 %v918
    %v986 = vpop.f32.mrb[0].mxu0
    %v987 = vadd.f32 0.0, %v986
    %v988 = vpop.f32.mrb[0].mxu0
    %989 = vdwg.mxu0
    %v990 = vadd.f32 %v917, %v987
    %v991 = vxor.u32 %v990, 2147483648
    %v992 = vmul.f32 %v991, 1.442695
    %v993 = vpow.pop %v992
    %v994 = vadd.f32 %v993, 1.0
    %v995 = vrcp.pop %v994
    %v996 = vmul.f32 1.0, %v995
    %v997 = vtanh.pop %v990
    %v998 = vmul.f32 %v996, %v904
    %1000 = vrot.lane.b32.xlu0 %v997, 64
    %v1001 = vpop.permute.xlu0 %1000
    %v1003 = vmul.f32 %v996, %v1001
    %1005 = vrot.lane.b32.xlu0 %v1003, 32
    %v1006 = vpop.permute.xlu0 %1005
    %v1008 = vadd.f32 %v998, %v1006
    %v1009 = vtanh.pop %v1008
    %1011 = vrot.lane.b32.xlu0 %v1009, 64
    %v1012 = vpop.permute.xlu0 %1011
    %v1014 = vmul.f32 %v996, %v1012
    %1016 = vrot.lane.b32.xlu0 %v1014, 32
    %v1017 = vpop.permute.xlu0 %1016
    %s1019 = scalar_lea.vmem [#allocation3], 14
    %1020 = vst.msk [vmem:[%s1019] sm:$0x3] %vm291, %v1017
    %v1021 = vld [vmem:[%s4] sm:$0xff]
    %v1022 = vld [vmem:[%s4 + $0x8] sm:$0xff]
    %v1023 = vld [vmem:[%s4 + $0x10] sm:$0xff]
    %v1024 = vld [vmem:[%s4 + $0x18] sm:$0xff]
    %v1025 = vld [vmem:[%s5] sm:$0xff]
    %v1026 = vld [vmem:[%s5 + $0x8] sm:$0xff]
    %v1027 = vld [vmem:[%s5 + $0x10] sm:$0xff]
    %v1028 = vld [vmem:[%s5 + $0x18] sm:$0xff]
    %v1029 = vld [vmem:[%s6] sm:$0x1]
    %v1030 = vld [vmem:[#allocation3] sm:$0x3]
    %v1031 = vld [vmem:[%s395] sm:$0x3]
    %v1032 = vld [vmem:[%s499] sm:$0x3]
    %v1033 = vld [vmem:[%s603] sm:$0x3]
    %v1034 = vld [vmem:[%s707] sm:$0x3]
    %v1035 = vld [vmem:[%s811] sm:$0x3]
    %v1036 = vld [vmem:[%s915] sm:$0x3]
    %v1037 = vld [vmem:[%s1019] sm:$0x3]
    %v1039 = vrot.slane %v1031, 6
    %v1042 = vrot.slane %v1032, 4
    %v1045 = vrot.slane %v1033, 2
    %v1048 = vrot.slane %v1035, 6
    %v1051 = vrot.slane %v1036, 4
    %v1054 = vrot.slane %v1037, 2
    %vm1056 = vcmask 1041408
    %v1057 = vsel %vm1056, %v1030, %v1039
    %v1058 = vsel %vm93, %v1057, %v1042
    %vm1059 = vcmask 1045504
    %v1060 = vsel %vm1059, %v1058, %v1045
    %v1061 = vsel %vm1056, %v1034, %v1048
    %v1062 = vsel %vm93, %v1061, %v1051
    %v1063 = vsel %vm1059, %v1062, %v1054
    %v1065 = vlaneseq
    %v1066 = vshrl.u32 %v1065, 7
    %v1067 = vsub.s32 0, %v1066
    %v1068 = vrot.slane %v1029, %v1067
    %v1071 = vsel %vm188, %v1060, 0
    %v1074 = vsel %vm188, %v1063, 0
    %1076 = vmatprep.subr.mxu0 0.0
    %1077 = vmatpush1.msra.mxu0 %v1021
    %1078 = vmatprep.subr.mxu0 0.0
    %1079 = vmatpush1.msra.mxu0 %v1022
    %1080 = vmatprep.subr.mxu0 0.0
    %1081 = vmatpush1.msra.mxu0 %v1023
    %1082 = vmatprep.subr.mxu0 0.0
    %1083 = vmatpush1.msra.mxu0 %v1024
    %1084 = vmatprep.subr.mxu0 0.0
    %1085 = vmatpush1.msra.mxu0 0.0
    %1086 = vmatprep.subr.mxu0 0.0
    %1087 = vmatpush1.msra.mxu0 0.0
    %1088 = vmatprep.subr.mxu0 0.0
    %1089 = vmatpush1.msra.mxu0 0.0
    %1090 = vmatprep.subr.mxu0 0.0
    %1091 = vmatpush1.msra.mxu0 0.0
    %1092 = vmatprep.subr.mxu0 0.0
    %1093 = vmatpush1.msra.mxu0 0.0
    %1094 = vmatprep.subr.mxu0 0.0
    %1095 = vmatpush1.msra.mxu0 0.0
    %1096 = vmatprep.subr.mxu0 0.0
    %1097 = vmatpush1.msra.mxu0 0.0
    %1098 = vmatprep.subr.mxu0 0.0
    %1099 = vmatpush1.msra.mxu0 0.0
    %1100 = vmatprep.subr.mxu0 0.0
    %1101 = vmatpush1.msra.mxu0 0.0
    %1102 = vmatprep.subr.mxu0 0.0
    %1103 = vmatpush1.msra.mxu0 0.0
    %1104 = vmatprep.subr.mxu0 0.0
    %1105 = vmatpush1.msra.mxu0 0.0
    %1106 = vmatprep.subr.mxu0 0.0
    %1107 = vmatpush1.msra.mxu0 0.0
    %1108 = vmatprep.subr.mxu0 0.0
    %1109 = vmatpush1.msra.mxu0 0.0
    %1110 = vmatprep.subr.mxu0 0.0
    %1111 = vmatpush1.msra.mxu0 0.0
    %1112 = vmatprep.subr.mxu0 0.0
    %1113 = vmatpush1.msra.mxu0 0.0
    %1114 = vmatprep.subr.mxu0 0.0
    %1115 = vmatpush1.msra.mxu0 0.0
    %1116 = vmatprep.subr.mxu0 0.0
    %1117 = vmatpush1.msra.mxu0 0.0
    %1118 = vmatprep.subr.mxu0 0.0
    %1119 = vmatpush1.msra.mxu0 0.0
    %1120 = vmatprep.subr.mxu0 0.0
    %1121 = vmatpush1.msra.mxu0 0.0
    %1122 = vmatprep.subr.mxu0 0.0
    %1123 = vmatpush1.msra.mxu0 0.0
    %1124 = vmatprep.subr.mxu0 0.0
    %1125 = vmatpush1.msra.mxu0 0.0
    %1126 = vmatprep.subr.mxu0 0.0
    %1127 = vmatpush1.msra.mxu0 0.0
    %1128 = vmatprep.subr.mxu0 0.0
    %1129 = vmatpush1.msra.mxu0 0.0
    %1130 = vmatprep.subr.mxu0 0.0
    %1131 = vmatpush1.msra.mxu0 0.0
    %1132 = vmatprep.subr.mxu0 0.0
    %1133 = vmatpush1.msra.mxu0 0.0
    %1134 = vmatprep.subr.mxu0 0.0
    %1135 = vmatpush1.msra.mxu0 0.0
    %1136 = vmatprep.subr.mxu0 0.0
    %1137 = vmatpush1.msra.mxu0 0.0
    %1138 = vmatprep.subr.mxu0 0.0
    %1139 = vmatpush1.msra.mxu0 0.0
    %1140 = vmatprep.mubr.f32.mxu0 0.0
    %1141 = vmatmul.mubr.f32.gmra.mrb[0].mxu0 %v1071
    %v1142 = vpop.f32.mrb[0].mxu0
    %v1143 = vadd.f32 %v1068, %v1142
    %v1144 = vpop.f32.mrb[0].mxu0
    %1145 = vmatprep.mubr.f32.mxu0 0.0
    %1146 = vmatmul.mubr.f32.gmra.mrb[0].mxu0 %v1074
    %v1147 = vpop.f32.mrb[0].mxu0
    %v1148 = vadd.f32 %v1068, %v1147
    %v1149 = vpop.f32.mrb[0].mxu0
    %1150 = vdwg.mxu0
    %1151 = vst [vmem:[#allocation2] sm:$0x3] %v1143
    %1152 = vst [vmem:[%s173 - $0x2] sm:$0xc] %v1143
    %1153 = vst [vmem:[%s175 - $0x4] sm:$0x30] %v1143
    %1154 = vst [vmem:[%s177 - $0x6] sm:$0xc0] %v1143
    %1155 = vst [vmem:[%s179] sm:$0x3] %v1148
    %1156 = vst [vmem:[%s181 - $0x2] sm:$0xc] %v1148
    %1157 = vst [vmem:[%s183 - $0x4] sm:$0x30] %v1148
    %1158 = vst [vmem:[%s185 - $0x6] sm:$0xc0] %v1148
    %v1159 = vld [vmem:[#allocation2] sm:$0x3]
    %1160 = vmatprep.subr.mxu0 0.0
    %1161 = vmatpush1.msra.mxu0 %v1025
    %1162 = vmatprep.subr.mxu0 0.0
    %1163 = vmatpush1.msra.mxu0 %v1026
    %1164 = vmatprep.subr.mxu0 0.0
    %1165 = vmatpush1.msra.mxu0 %v1027
    %1166 = vmatprep.subr.mxu0 0.0
    %1167 = vmatpush1.msra.mxu0 %v1028
    %1168 = vmatprep.subr.mxu0 0.0
    %1169 = vmatpush1.msra.mxu0 0.0
    %1170 = vmatprep.subr.mxu0 0.0
    %1171 = vmatpush1.msra.mxu0 0.0
    %1172 = vmatprep.subr.mxu0 0.0
    %1173 = vmatpush1.msra.mxu0 0.0
    %1174 = vmatprep.subr.mxu0 0.0
    %1175 = vmatpush1.msra.mxu0 0.0
    %1176 = vmatprep.subr.mxu0 0.0
    %1177 = vmatpush1.msra.mxu0 0.0
    %1178 = vmatprep.subr.mxu0 0.0
    %1179 = vmatpush1.msra.mxu0 0.0
    %1180 = vmatprep.subr.mxu0 0.0
    %1181 = vmatpush1.msra.mxu0 0.0
    %1182 = vmatprep.subr.mxu0 0.0
    %1183 = vmatpush1.msra.mxu0 0.0
    %1184 = vmatprep.subr.mxu0 0.0
    %1185 = vmatpush1.msra.mxu0 0.0
    %1186 = vmatprep.subr.mxu0 0.0
    %1187 = vmatpush1.msra.mxu0 0.0
    %1188 = vmatprep.subr.mxu0 0.0
    %1189 = vmatpush1.msra.mxu0 0.0
    %1190 = vmatprep.subr.mxu0 0.0
    %1191 = vmatpush1.msra.mxu0 0.0
    %1192 = vmatprep.subr.mxu0 0.0
    %1193 = vmatpush1.msra.mxu0 0.0
    %1194 = vmatprep.subr.mxu0 0.0
    %1195 = vmatpush1.msra.mxu0 0.0
    %1196 = vmatprep.subr.mxu0 0.0
    %1197 = vmatpush1.msra.mxu0 0.0
    %1198 = vmatprep.subr.mxu0 0.0
    %1199 = vmatpush1.msra.mxu0 0.0
    %1200 = vmatprep.subr.mxu0 0.0
    %1201 = vmatpush1.msra.mxu0 0.0
    %1202 = vmatprep.subr.mxu0 0.0
    %1203 = vmatpush1.msra.mxu0 0.0
    %1204 = vmatprep.subr.mxu0 0.0
    %1205 = vmatpush1.msra.mxu0 0.0
    %1206 = vmatprep.subr.mxu0 0.0
    %1207 = vmatpush1.msra.mxu0 0.0
    %1208 = vmatprep.subr.mxu0 0.0
    %1209 = vmatpush1.msra.mxu0 0.0
    %1210 = vmatprep.subr.mxu0 0.0
    %1211 = vmatpush1.msra.mxu0 0.0
    %1212 = vmatprep.subr.mxu0 0.0
    %1213 = vmatpush1.msra.mxu0 0.0
    %1214 = vmatprep.subr.mxu0 0.0
    %1215 = vmatpush1.msra.mxu0 0.0
    %1216 = vmatprep.subr.mxu0 0.0
    %1217 = vmatpush1.msra.mxu0 0.0
    %1218 = vmatprep.subr.mxu0 0.0
    %1219 = vmatpush1.msra.mxu0 0.0
    %1220 = vmatprep.subr.mxu0 0.0
    %1221 = vmatpush1.msra.mxu0 0.0
    %1222 = vmatprep.subr.mxu0 0.0
    %1223 = vmatpush1.msra.mxu0 0.0
    %1224 = vmatprep.mubr.f32.mxu0 0.0
    %1225 = vmatmul.mubr.f32.gmra.mrb[0].mxu0 %v190
    %v1226 = vpop.f32.mrb[0].mxu0
    %v1227 = vadd.f32 0.0, %v1226
    %v1228 = vpop.f32.mrb[0].mxu0
    %1229 = vdwg.mxu0
    %v1230 = vadd.f32 %v1159, %v1227
    %v1231 = vxor.u32 %v1230, 2147483648
    %v1232 = vmul.f32 %v1231, 1.442695
    %v1233 = vpow.pop %v1232
    %v1234 = vadd.f32 %v1233, 1.0
    %v1235 = vrcp.pop %v1234
    %v1236 = vmul.f32 1.0, %v1235
    %v1237 = vtanh.pop %v1230
    %v1238 = vmul.f32 %v1236, 0.0
    %1240 = vrot.lane.b32.xlu0 %v1237, 64
    %v1241 = vpop.permute.xlu0 %1240
    %v1243 = vmul.f32 %v1236, %v1241
    %1245 = vrot.lane.b32.xlu0 %v1243, 32
    %v1246 = vpop.permute.xlu0 %1245
    %v1248 = vadd.f32 %v1238, %v1246
    %v1249 = vtanh.pop %v1248
    %1251 = vrot.lane.b32.xlu0 %v1249, 64
    %v1252 = vpop.permute.xlu0 %1251
    %v1254 = vmul.f32 %v1236, %v1252
    %v1255 = vld [vmem:[%s173] sm:$0x3]
    %1257 = vrot.lane.b32.xlu0 %v1254, 32
    %v1258 = vpop.permute.xlu0 %1257
    %v1259 = vsel %vm188, %v1258, 0
    %1261 = vmatprep.subr.mxu0 0.0
    %1262 = vmatpush1.msra.mxu0 %v1025
    %1263 = vmatprep.subr.mxu0 0.0
    %1264 = vmatpush1.msra.mxu0 %v1026
    %1265 = vmatprep.subr.mxu0 0.0
    %1266 = vmatpush1.msra.mxu0 %v1027
    %1267 = vmatprep.subr.mxu0 0.0
    %1268 = vmatpush1.msra.mxu0 %v1028
    %1269 = vmatprep.subr.mxu0 0.0
    %1270 = vmatpush1.msra.mxu0 0.0
    %1271 = vmatprep.subr.mxu0 0.0
    %1272 = vmatpush1.msra.mxu0 0.0
    %1273 = vmatprep.subr.mxu0 0.0
    %1274 = vmatpush1.msra.mxu0 0.0
    %1275 = vmatprep.subr.mxu0 0.0
    %1276 = vmatpush1.msra.mxu0 0.0
    %1277 = vmatprep.subr.mxu0 0.0
    %1278 = vmatpush1.msra.mxu0 0.0
    %1279 = vmatprep.subr.mxu0 0.0
    %1280 = vmatpush1.msra.mxu0 0.0
    %1281 = vmatprep.subr.mxu0 0.0
    %1282 = vmatpush1.msra.mxu0 0.0
    %1283 = vmatprep.subr.mxu0 0.0
    %1284 = vmatpush1.msra.mxu0 0.0
    %1285 = vmatprep.subr.mxu0 0.0
    %1286 = vmatpush1.msra.mxu0 0.0
    %1287 = vmatprep.subr.mxu0 0.0
    %1288 = vmatpush1.msra.mxu0 0.0
    %1289 = vmatprep.subr.mxu0 0.0
    %1290 = vmatpush1.msra.mxu0 0.0
    %1291 = vmatprep.subr.mxu0 0.0
    %1292 = vmatpush1.msra.mxu0 0.0
    %1293 = vmatprep.subr.mxu0 0.0
    %1294 = vmatpush1.msra.mxu0 0.0
    %1295 = vmatprep.subr.mxu0 0.0
    %1296 = vmatpush1.msra.mxu0 0.0
    %1297 = vmatprep.subr.mxu0 0.0
    %1298 = vmatpush1.msra.mxu0 0.0
    %1299 = vmatprep.subr.mxu0 0.0
    %1300 = vmatpush1.msra.mxu0 0.0
    %1301 = vmatprep.subr.mxu0 0.0
    %1302 = vmatpush1.msra.mxu0 0.0
    %1303 = vmatprep.subr.mxu0 0.0
    %1304 = vmatpush1.msra.mxu0 0.0
    %1305 = vmatprep.subr.mxu0 0.0
    %1306 = vmatpush1.msra.mxu0 0.0
    %1307 = vmatprep.subr.mxu0 0.0
    %1308 = vmatpush1.msra.mxu0 0.0
    %1309 = vmatprep.subr.mxu0 0.0
    %1310 = vmatpush1.msra.mxu0 0.0
    %1311 = vmatprep.subr.mxu0 0.0
    %1312 = vmatpush1.msra.mxu0 0.0
    %1313 = vmatprep.subr.mxu0 0.0
    %1314 = vmatpush1.msra.mxu0 0.0
    %1315 = vmatprep.subr.mxu0 0.0
    %1316 = vmatpush1.msra.mxu0 0.0
    %1317 = vmatprep.subr.mxu0 0.0
    %1318 = vmatpush1.msra.mxu0 0.0
    %1319 = vmatprep.subr.mxu0 0.0
    %1320 = vmatpush1.msra.mxu0 0.0
    %1321 = vmatprep.subr.mxu0 0.0
    %1322 = vmatpush1.msra.mxu0 0.0
    %1323 = vmatprep.subr.mxu0 0.0
    %1324 = vmatpush1.msra.mxu0 0.0
    %1325 = vmatprep.mubr.f32.mxu0 0.0
    %1326 = vmatmul.mubr.f32.gmra.mrb[0].mxu0 %v1259
    %v1327 = vpop.f32.mrb[0].mxu0
    %v1328 = vadd.f32 0.0, %v1327
    %v1329 = vpop.f32.mrb[0].mxu0
    %1330 = vdwg.mxu0
    %v1331 = vadd.f32 %v1255, %v1328
    %v1332 = vxor.u32 %v1331, 2147483648
    %v1333 = vmul.f32 %v1332, 1.442695
    %v1334 = vpow.pop %v1333
    %v1335 = vadd.f32 %v1334, 1.0
    %v1336 = vrcp.pop %v1335
    %v1337 = vmul.f32 1.0, %v1336
    %v1338 = vtanh.pop %v1331
    %v1339 = vmul.f32 %v1337, %v1248
    %1341 = vrot.lane.b32.xlu0 %v1338, 64
    %v1342 = vpop.permute.xlu0 %1341
    %v1344 = vmul.f32 %v1337, %v1342
    %1346 = vrot.lane.b32.xlu0 %v1344, 32
    %v1347 = vpop.permute.xlu0 %1346
    %v1349 = vadd.f32 %v1339, %v1347
    %v1350 = vtanh.pop %v1349
    %1352 = vrot.lane.b32.xlu0 %v1350, 64
    %v1353 = vpop.permute.xlu0 %1352
    %v1355 = vmul.f32 %v1337, %v1353
    %v1356 = vld [vmem:[%s175] sm:$0x3]
    %1358 = vrot.lane.b32.xlu0 %v1355, 32
    %v1359 = vpop.permute.xlu0 %1358
    %v1360 = vsel %vm188, %v1359, 0
    %1362 = vmatprep.subr.mxu0 0.0
    %1363 = vmatpush1.msra.mxu0 %v1025
    %1364 = vmatprep.subr.mxu0 0.0
    %1365 = vmatpush1.msra.mxu0 %v1026
    %1366 = vmatprep.subr.mxu0 0.0
    %1367 = vmatpush1.msra.mxu0 %v1027
    %1368 = vmatprep.subr.mxu0 0.0
    %1369 = vmatpush1.msra.mxu0 %v1028
    %1370 = vmatprep.subr.mxu0 0.0
    %1371 = vmatpush1.msra.mxu0 0.0
    %1372 = vmatprep.subr.mxu0 0.0
    %1373 = vmatpush1.msra.mxu0 0.0
    %1374 = vmatprep.subr.mxu0 0.0
    %1375 = vmatpush1.msra.mxu0 0.0
    %1376 = vmatprep.subr.mxu0 0.0
    %1377 = vmatpush1.msra.mxu0 0.0
    %1378 = vmatprep.subr.mxu0 0.0
    %1379 = vmatpush1.msra.mxu0 0.0
    %1380 = vmatprep.subr.mxu0 0.0
    %1381 = vmatpush1.msra.mxu0 0.0
    %1382 = vmatprep.subr.mxu0 0.0
    %1383 = vmatpush1.msra.mxu0 0.0
    %1384 = vmatprep.subr.mxu0 0.0
    %1385 = vmatpush1.msra.mxu0 0.0
    %1386 = vmatprep.subr.mxu0 0.0
    %1387 = vmatpush1.msra.mxu0 0.0
    %1388 = vmatprep.subr.mxu0 0.0
    %1389 = vmatpush1.msra.mxu0 0.0
    %1390 = vmatprep.subr.mxu0 0.0
    %1391 = vmatpush1.msra.mxu0 0.0
    %1392 = vmatprep.subr.mxu0 0.0
    %1393 = vmatpush1.msra.mxu0 0.0
    %1394 = vmatprep.subr.mxu0 0.0
    %1395 = vmatpush1.msra.mxu0 0.0
    %1396 = vmatprep.subr.mxu0 0.0
    %1397 = vmatpush1.msra.mxu0 0.0
    %1398 = vmatprep.subr.mxu0 0.0
    %1399 = vmatpush1.msra.mxu0 0.0
    %1400 = vmatprep.subr.mxu0 0.0
    %1401 = vmatpush1.msra.mxu0 0.0
    %1402 = vmatprep.subr.mxu0 0.0
    %1403 = vmatpush1.msra.mxu0 0.0
    %1404 = vmatprep.subr.mxu0 0.0
    %1405 = vmatpush1.msra.mxu0 0.0
    %1406 = vmatprep.subr.mxu0 0.0
    %1407 = vmatpush1.msra.mxu0 0.0
    %1408 = vmatprep.subr.mxu0 0.0
    %1409 = vmatpush1.msra.mxu0 0.0
    %1410 = vmatprep.subr.mxu0 0.0
    %1411 = vmatpush1.msra.mxu0 0.0
    %1412 = vmatprep.subr.mxu0 0.0
    %1413 = vmatpush1.msra.mxu0 0.0
    %1414 = vmatprep.subr.mxu0 0.0
    %1415 = vmatpush1.msra.mxu0 0.0
    %1416 = vmatprep.subr.mxu0 0.0
    %1417 = vmatpush1.msra.mxu0 0.0
    %1418 = vmatprep.subr.mxu0 0.0
    %1419 = vmatpush1.msra.mxu0 0.0
    %1420 = vmatprep.subr.mxu0 0.0
    %1421 = vmatpush1.msra.mxu0 0.0
    %1422 = vmatprep.subr.mxu0 0.0
    %1423 = vmatpush1.msra.mxu0 0.0
    %1424 = vmatprep.subr.mxu0 0.0
    %1425 = vmatpush1.msra.mxu0 0.0
    %1426 = vmatprep.mubr.f32.mxu0 0.0
    %1427 = vmatmul.mubr.f32.gmra.mrb[0].mxu0 %v1360
    %v1428 = vpop.f32.mrb[0].mxu0
    %v1429 = vadd.f32 0.0, %v1428
    %v1430 = vpop.f32.mrb[0].mxu0
    %1431 = vdwg.mxu0
    %v1432 = vadd.f32 %v1356, %v1429
    %v1433 = vxor.u32 %v1432, 2147483648
    %v1434 = vmul.f32 %v1433, 1.442695
    %v1435 = vpow.pop %v1434
    %v1436 = vadd.f32 %v1435, 1.0
    %v1437 = vrcp.pop %v1436
    %v1438 = vmul.f32 1.0, %v1437
    %v1439 = vtanh.pop %v1432
    %v1440 = vmul.f32 %v1438, %v1349
    %1442 = vrot.lane.b32.xlu0 %v1439, 64
    %v1443 = vpop.permute.xlu0 %1442
    %v1445 = vmul.f32 %v1438, %v1443
    %1447 = vrot.lane.b32.xlu0 %v1445, 32
    %v1448 = vpop.permute.xlu0 %1447
    %v1450 = vadd.f32 %v1440, %v1448
    %v1451 = vtanh.pop %v1450
    %1453 = vrot.lane.b32.xlu0 %v1451, 64
    %v1454 = vpop.permute.xlu0 %1453
    %v1456 = vmul.f32 %v1438, %v1454
    %v1457 = vld [vmem:[%s177] sm:$0x3]
    %1459 = vrot.lane.b32.xlu0 %v1456, 32
    %v1460 = vpop.permute.xlu0 %1459
    %v1461 = vsel %vm188, %v1460, 0
    %1463 = vmatprep.subr.mxu0 0.0
    %1464 = vmatpush1.msra.mxu0 %v1025
    %1465 = vmatprep.subr.mxu0 0.0
    %1466 = vmatpush1.msra.mxu0 %v1026
    %1467 = vmatprep.subr.mxu0 0.0
    %1468 = vmatpush1.msra.mxu0 %v1027
    %1469 = vmatprep.subr.mxu0 0.0
    %1470 = vmatpush1.msra.mxu0 %v1028
    %1471 = vmatprep.subr.mxu0 0.0
    %1472 = vmatpush1.msra.mxu0 0.0
    %1473 = vmatprep.subr.mxu0 0.0
    %1474 = vmatpush1.msra.mxu0 0.0
    %1475 = vmatprep.subr.mxu0 0.0
    %1476 = vmatpush1.msra.mxu0 0.0
    %1477 = vmatprep.subr.mxu0 0.0
    %1478 = vmatpush1.msra.mxu0 0.0
    %1479 = vmatprep.subr.mxu0 0.0
    %1480 = vmatpush1.msra.mxu0 0.0
    %1481 = vmatprep.subr.mxu0 0.0
    %1482 = vmatpush1.msra.mxu0 0.0
    %1483 = vmatprep.subr.mxu0 0.0
    %1484 = vmatpush1.msra.mxu0 0.0
    %1485 = vmatprep.subr.mxu0 0.0
    %1486 = vmatpush1.msra.mxu0 0.0
    %1487 = vmatprep.subr.mxu0 0.0
    %1488 = vmatpush1.msra.mxu0 0.0
    %1489 = vmatprep.subr.mxu0 0.0
    %1490 = vmatpush1.msra.mxu0 0.0
    %1491 = vmatprep.subr.mxu0 0.0
    %1492 = vmatpush1.msra.mxu0 0.0
    %1493 = vmatprep.subr.mxu0 0.0
    %1494 = vmatpush1.msra.mxu0 0.0
    %1495 = vmatprep.subr.mxu0 0.0
    %1496 = vmatpush1.msra.mxu0 0.0
    %1497 = vmatprep.subr.mxu0 0.0
    %1498 = vmatpush1.msra.mxu0 0.0
    %1499 = vmatprep.subr.mxu0 0.0
    %1500 = vmatpush1.msra.mxu0 0.0
    %1501 = vmatprep.subr.mxu0 0.0
    %1502 = vmatpush1.msra.mxu0 0.0
    %1503 = vmatprep.subr.mxu0 0.0
    %1504 = vmatpush1.msra.mxu0 0.0
    %1505 = vmatprep.subr.mxu0 0.0
    %1506 = vmatpush1.msra.mxu0 0.0
    %1507 = vmatprep.subr.mxu0 0.0
    %1508 = vmatpush1.msra.mxu0 0.0
    %1509 = vmatprep.subr.mxu0 0.0
    %1510 = vmatpush1.msra.mxu0 0.0
    %1511 = vmatprep.subr.mxu0 0.0
    %1512 = vmatpush1.msra.mxu0 0.0
    %1513 = vmatprep.subr.mxu0 0.0
    %1514 = vmatpush1.msra.mxu0 0.0
    %1515 = vmatprep.subr.mxu0 0.0
    %1516 = vmatpush1.msra.mxu0 0.0
    %1517 = vmatprep.subr.mxu0 0.0
    %1518 = vmatpush1.msra.mxu0 0.0
    %1519 = vmatprep.subr.mxu0 0.0
    %1520 = vmatpush1.msra.mxu0 0.0
    %1521 = vmatprep.subr.mxu0 0.0
    %1522 = vmatpush1.msra.mxu0 0.0
    %1523 = vmatprep.subr.mxu0 0.0
    %1524 = vmatpush1.msra.mxu0 0.0
    %1525 = vmatprep.subr.mxu0 0.0
    %1526 = vmatpush1.msra.mxu0 0.0
    %1527 = vmatprep.mubr.f32.mxu0 0.0
    %1528 = vmatmul.mubr.f32.gmra.mrb[0].mxu0 %v1461
    %v1529 = vpop.f32.mrb[0].mxu0
    %v1530 = vadd.f32 0.0, %v1529
    %v1531 = vpop.f32.mrb[0].mxu0
    %1532 = vdwg.mxu0
    %v1533 = vadd.f32 %v1457, %v1530
    %v1534 = vxor.u32 %v1533, 2147483648
    %v1535 = vmul.f32 %v1534, 1.442695
    %v1536 = vpow.pop %v1535
    %v1537 = vadd.f32 %v1536, 1.0
    %v1538 = vrcp.pop %v1537
    %v1539 = vmul.f32 1.0, %v1538
    %v1540 = vtanh.pop %v1533
    %v1541 = vmul.f32 %v1539, %v1450
    %1543 = vrot.lane.b32.xlu0 %v1540, 64
    %v1544 = vpop.permute.xlu0 %1543
    %v1546 = vmul.f32 %v1539, %v1544
    %1548 = vrot.lane.b32.xlu0 %v1546, 32
    %v1549 = vpop.permute.xlu0 %1548
    %v1551 = vadd.f32 %v1541, %v1549
    %v1552 = vtanh.pop %v1551
    %1554 = vrot.lane.b32.xlu0 %v1552, 64
    %v1555 = vpop.permute.xlu0 %1554
    %v1557 = vmul.f32 %v1539, %v1555
    %v1558 = vld [vmem:[%s179] sm:$0x3]
    %1560 = vrot.lane.b32.xlu0 %v1557, 32
    %v1561 = vpop.permute.xlu0 %1560
    %v1562 = vsel %vm188, %v1561, 0
    %1564 = vmatprep.subr.mxu0 0.0
    %1565 = vmatpush1.msra.mxu0 %v1025
    %1566 = vmatprep.subr.mxu0 0.0
    %1567 = vmatpush1.msra.mxu0 %v1026
    %1568 = vmatprep.subr.mxu0 0.0
    %1569 = vmatpush1.msra.mxu0 %v1027
    %1570 = vmatprep.subr.mxu0 0.0
    %1571 = vmatpush1.msra.mxu0 %v1028
    %1572 = vmatprep.subr.mxu0 0.0
    %1573 = vmatpush1.msra.mxu0 0.0
    %1574 = vmatprep.subr.mxu0 0.0
    %1575 = vmatpush1.msra.mxu0 0.0
    %1576 = vmatprep.subr.mxu0 0.0
    %1577 = vmatpush1.msra.mxu0 0.0
    %1578 = vmatprep.subr.mxu0 0.0
    %1579 = vmatpush1.msra.mxu0 0.0
    %1580 = vmatprep.subr.mxu0 0.0
    %1581 = vmatpush1.msra.mxu0 0.0
    %1582 = vmatprep.subr.mxu0 0.0
    %1583 = vmatpush1.msra.mxu0 0.0
    %1584 = vmatprep.subr.mxu0 0.0
    %1585 = vmatpush1.msra.mxu0 0.0
    %1586 = vmatprep.subr.mxu0 0.0
    %1587 = vmatpush1.msra.mxu0 0.0
    %1588 = vmatprep.subr.mxu0 0.0
    %1589 = vmatpush1.msra.mxu0 0.0
    %1590 = vmatprep.subr.mxu0 0.0
    %1591 = vmatpush1.msra.mxu0 0.0
    %1592 = vmatprep.subr.mxu0 0.0
    %1593 = vmatpush1.msra.mxu0 0.0
    %1594 = vmatprep.subr.mxu0 0.0
    %1595 = vmatpush1.msra.mxu0 0.0
    %1596 = vmatprep.subr.mxu0 0.0
    %1597 = vmatpush1.msra.mxu0 0.0
    %1598 = vmatprep.subr.mxu0 0.0
    %1599 = vmatpush1.msra.mxu0 0.0
    %1600 = vmatprep.subr.mxu0 0.0
    %1601 = vmatpush1.msra.mxu0 0.0
    %1602 = vmatprep.subr.mxu0 0.0
    %1603 = vmatpush1.msra.mxu0 0.0
    %1604 = vmatprep.subr.mxu0 0.0
    %1605 = vmatpush1.msra.mxu0 0.0
    %1606 = vmatprep.subr.mxu0 0.0
    %1607 = vmatpush1.msra.mxu0 0.0
    %1608 = vmatprep.subr.mxu0 0.0
    %1609 = vmatpush1.msra.mxu0 0.0
    %1610 = vmatprep.subr.mxu0 0.0
    %1611 = vmatpush1.msra.mxu0 0.0
    %1612 = vmatprep.subr.mxu0 0.0
    %1613 = vmatpush1.msra.mxu0 0.0
    %1614 = vmatprep.subr.mxu0 0.0
    %1615 = vmatpush1.msra.mxu0 0.0
    %1616 = vmatprep.subr.mxu0 0.0
    %1617 = vmatpush1.msra.mxu0 0.0
    %1618 = vmatprep.subr.mxu0 0.0
    %1619 = vmatpush1.msra.mxu0 0.0
    %1620 = vmatprep.subr.mxu0 0.0
    %1621 = vmatpush1.msra.mxu0 0.0
    %1622 = vmatprep.subr.mxu0 0.0
    %1623 = vmatpush1.msra.mxu0 0.0
    %1624 = vmatprep.subr.mxu0 0.0
    %1625 = vmatpush1.msra.mxu0 0.0
    %1626 = vmatprep.subr.mxu0 0.0
    %1627 = vmatpush1.msra.mxu0 0.0
    %1628 = vmatprep.mubr.f32.mxu0 0.0
    %1629 = vmatmul.mubr.f32.gmra.mrb[0].mxu0 %v1562
    %v1630 = vpop.f32.mrb[0].mxu0
    %v1631 = vadd.f32 0.0, %v1630
    %v1632 = vpop.f32.mrb[0].mxu0
    %1633 = vdwg.mxu0
    %v1634 = vadd.f32 %v1558, %v1631
    %v1635 = vxor.u32 %v1634, 2147483648
    %v1636 = vmul.f32 %v1635, 1.442695
    %v1637 = vpow.pop %v1636
    %v1638 = vadd.f32 %v1637, 1.0
    %v1639 = vrcp.pop %v1638
    %v1640 = vmul.f32 1.0, %v1639
    %v1641 = vtanh.pop %v1634
    %v1642 = vmul.f32 %v1640, %v1551
    %1644 = vrot.lane.b32.xlu0 %v1641, 64
    %v1645 = vpop.permute.xlu0 %1644
    %v1647 = vmul.f32 %v1640, %v1645
    %1649 = vrot.lane.b32.xlu0 %v1647, 32
    %v1650 = vpop.permute.xlu0 %1649
    %v1652 = vadd.f32 %v1642, %v1650
    %v1653 = vtanh.pop %v1652
    %1655 = vrot.lane.b32.xlu0 %v1653, 64
    %v1656 = vpop.permute.xlu0 %1655
    %v1658 = vmul.f32 %v1640, %v1656
    %v1659 = vld [vmem:[%s181] sm:$0x3]
    %1661 = vrot.lane.b32.xlu0 %v1658, 32
    %v1662 = vpop.permute.xlu0 %1661
    %v1663 = vsel %vm188, %v1662, 0
    %1665 = vmatprep.subr.mxu0 0.0
    %1666 = vmatpush1.msra.mxu0 %v1025
    %1667 = vmatprep.subr.mxu0 0.0
    %1668 = vmatpush1.msra.mxu0 %v1026
    %1669 = vmatprep.subr.mxu0 0.0
    %1670 = vmatpush1.msra.mxu0 %v1027
    %1671 = vmatprep.subr.mxu0 0.0
    %1672 = vmatpush1.msra.mxu0 %v1028
    %1673 = vmatprep.subr.mxu0 0.0
    %1674 = vmatpush1.msra.mxu0 0.0
    %1675 = vmatprep.subr.mxu0 0.0
    %1676 = vmatpush1.msra.mxu0 0.0
    %1677 = vmatprep.subr.mxu0 0.0
    %1678 = vmatpush1.msra.mxu0 0.0
    %1679 = vmatprep.subr.mxu0 0.0
    %1680 = vmatpush1.msra.mxu0 0.0
    %1681 = vmatprep.subr.mxu0 0.0
    %1682 = vmatpush1.msra.mxu0 0.0
    %1683 = vmatprep.subr.mxu0 0.0
    %1684 = vmatpush1.msra.mxu0 0.0
    %1685 = vmatprep.subr.mxu0 0.0
    %1686 = vmatpush1.msra.mxu0 0.0
    %1687 = vmatprep.subr.mxu0 0.0
    %1688 = vmatpush1.msra.mxu0 0.0
    %1689 = vmatprep.subr.mxu0 0.0
    %1690 = vmatpush1.msra.mxu0 0.0
    %1691 = vmatprep.subr.mxu0 0.0
    %1692 = vmatpush1.msra.mxu0 0.0
    %1693 = vmatprep.subr.mxu0 0.0
    %1694 = vmatpush1.msra.mxu0 0.0
    %1695 = vmatprep.subr.mxu0 0.0
    %1696 = vmatpush1.msra.mxu0 0.0
    %1697 = vmatprep.subr.mxu0 0.0
    %1698 = vmatpush1.msra.mxu0 0.0
    %1699 = vmatprep.subr.mxu0 0.0
    %1700 = vmatpush1.msra.mxu0 0.0
    %1701 = vmatprep.subr.mxu0 0.0
    %1702 = vmatpush1.msra.mxu0 0.0
    %1703 = vmatprep.subr.mxu0 0.0
    %1704 = vmatpush1.msra.mxu0 0.0
    %1705 = vmatprep.subr.mxu0 0.0
    %1706 = vmatpush1.msra.mxu0 0.0
    %1707 = vmatprep.subr.mxu0 0.0
    %1708 = vmatpush1.msra.mxu0 0.0
    %1709 = vmatprep.subr.mxu0 0.0
    %1710 = vmatpush1.msra.mxu0 0.0
    %1711 = vmatprep.subr.mxu0 0.0
    %1712 = vmatpush1.msra.mxu0 0.0
    %1713 = vmatprep.subr.mxu0 0.0
    %1714 = vmatpush1.msra.mxu0 0.0
    %1715 = vmatprep.subr.mxu0 0.0
    %1716 = vmatpush1.msra.mxu0 0.0
    %1717 = vmatprep.subr.mxu0 0.0
    %1718 = vmatpush1.msra.mxu0 0.0
    %1719 = vmatprep.subr.mxu0 0.0
    %1720 = vmatpush1.msra.mxu0 0.0
    %1721 = vmatprep.subr.mxu0 0.0
    %1722 = vmatpush1.msra.mxu0 0.0
    %1723 = vmatprep.subr.mxu0 0.0
    %1724 = vmatpush1.msra.mxu0 0.0
    %1725 = vmatprep.subr.mxu0 0.0
    %1726 = vmatpush1.msra.mxu0 0.0
    %1727 = vmatprep.subr.mxu0 0.0
    %1728 = vmatpush1.msra.mxu0 0.0
    %1729 = vmatprep.mubr.f32.mxu0 0.0
    %1730 = vmatmul.mubr.f32.gmra.mrb[0].mxu0 %v1663
    %v1731 = vpop.f32.mrb[0].mxu0
    %v1732 = vadd.f32 0.0, %v1731
    %v1733 = vpop.f32.mrb[0].mxu0
    %1734 = vdwg.mxu0
    %v1735 = vadd.f32 %v1659, %v1732
    %v1736 = vxor.u32 %v1735, 2147483648
    %v1737 = vmul.f32 %v1736, 1.442695
    %v1738 = vpow.pop %v1737
    %v1739 = vadd.f32 %v1738, 1.0
    %v1740 = vrcp.pop %v1739
    %v1741 = vmul.f32 1.0, %v1740
    %v1742 = vtanh.pop %v1735
    %v1743 = vmul.f32 %v1741, %v1652
    %1745 = vrot.lane.b32.xlu0 %v1742, 64
    %v1746 = vpop.permute.xlu0 %1745
    %v1748 = vmul.f32 %v1741, %v1746
    %1750 = vrot.lane.b32.xlu0 %v1748, 32
    %v1751 = vpop.permute.xlu0 %1750
    %v1753 = vadd.f32 %v1743, %v1751
    %v1754 = vtanh.pop %v1753
    %1756 = vrot.lane.b32.xlu0 %v1754, 64
    %v1757 = vpop.permute.xlu0 %1756
    %v1759 = vmul.f32 %v1741, %v1757
    %v1760 = vld [vmem:[%s183] sm:$0x3]
    %1762 = vrot.lane.b32.xlu0 %v1759, 32
    %v1763 = vpop.permute.xlu0 %1762
    %v1764 = vsel %vm188, %v1763, 0
    %1766 = vmatprep.subr.mxu0 0.0
    %1767 = vmatpush1.msra.mxu0 %v1025
    %1768 = vmatprep.subr.mxu0 0.0
    %1769 = vmatpush1.msra.mxu0 %v1026
    %1770 = vmatprep.subr.mxu0 0.0
    %1771 = vmatpush1.msra.mxu0 %v1027
    %1772 = vmatprep.subr.mxu0 0.0
    %1773 = vmatpush1.msra.mxu0 %v1028
    %1774 = vmatprep.subr.mxu0 0.0
    %1775 = vmatpush1.msra.mxu0 0.0
    %1776 = vmatprep.subr.mxu0 0.0
    %1777 = vmatpush1.msra.mxu0 0.0
    %1778 = vmatprep.subr.mxu0 0.0
    %1779 = vmatpush1.msra.mxu0 0.0
    %1780 = vmatprep.subr.mxu0 0.0
    %1781 = vmatpush1.msra.mxu0 0.0
    %1782 = vmatprep.subr.mxu0 0.0
    %1783 = vmatpush1.msra.mxu0 0.0
    %1784 = vmatprep.subr.mxu0 0.0
    %1785 = vmatpush1.msra.mxu0 0.0
    %1786 = vmatprep.subr.mxu0 0.0
    %1787 = vmatpush1.msra.mxu0 0.0
    %1788 = vmatprep.subr.mxu0 0.0
    %1789 = vmatpush1.msra.mxu0 0.0
    %1790 = vmatprep.subr.mxu0 0.0
    %1791 = vmatpush1.msra.mxu0 0.0
    %1792 = vmatprep.subr.mxu0 0.0
    %1793 = vmatpush1.msra.mxu0 0.0
    %1794 = vmatprep.subr.mxu0 0.0
    %1795 = vmatpush1.msra.mxu0 0.0
    %1796 = vmatprep.subr.mxu0 0.0
    %1797 = vmatpush1.msra.mxu0 0.0
    %1798 = vmatprep.subr.mxu0 0.0
    %1799 = vmatpush1.msra.mxu0 0.0
    %1800 = vmatprep.subr.mxu0 0.0
    %1801 = vmatpush1.msra.mxu0 0.0
    %1802 = vmatprep.subr.mxu0 0.0
    %1803 = vmatpush1.msra.mxu0 0.0
    %1804 = vmatprep.subr.mxu0 0.0
    %1805 = vmatpush1.msra.mxu0 0.0
    %1806 = vmatprep.subr.mxu0 0.0
    %1807 = vmatpush1.msra.mxu0 0.0
    %1808 = vmatprep.subr.mxu0 0.0
    %1809 = vmatpush1.msra.mxu0 0.0
    %1810 = vmatprep.subr.mxu0 0.0
    %1811 = vmatpush1.msra.mxu0 0.0
    %1812 = vmatprep.subr.mxu0 0.0
    %1813 = vmatpush1.msra.mxu0 0.0
    %1814 = vmatprep.subr.mxu0 0.0
    %1815 = vmatpush1.msra.mxu0 0.0
    %1816 = vmatprep.subr.mxu0 0.0
    %1817 = vmatpush1.msra.mxu0 0.0
    %1818 = vmatprep.subr.mxu0 0.0
    %1819 = vmatpush1.msra.mxu0 0.0
    %1820 = vmatprep.subr.mxu0 0.0
    %1821 = vmatpush1.msra.mxu0 0.0
    %1822 = vmatprep.subr.mxu0 0.0
    %1823 = vmatpush1.msra.mxu0 0.0
    %1824 = vmatprep.subr.mxu0 0.0
    %1825 = vmatpush1.msra.mxu0 0.0
    %1826 = vmatprep.subr.mxu0 0.0
    %1827 = vmatpush1.msra.mxu0 0.0
    %1828 = vmatprep.subr.mxu0 0.0
    %1829 = vmatpush1.msra.mxu0 0.0
    %1830 = vmatprep.mubr.f32.mxu0 0.0
    %1831 = vmatmul.mubr.f32.gmra.mrb[0].mxu0 %v1764
    %v1832 = vpop.f32.mrb[0].mxu0
    %v1833 = vadd.f32 0.0, %v1832
    %v1834 = vpop.f32.mrb[0].mxu0
    %1835 = vdwg.mxu0
    %v1836 = vadd.f32 %v1760, %v1833
    %v1837 = vxor.u32 %v1836, 2147483648
    %v1838 = vmul.f32 %v1837, 1.442695
    %v1839 = vpow.pop %v1838
    %v1840 = vadd.f32 %v1839, 1.0
    %v1841 = vrcp.pop %v1840
    %v1842 = vmul.f32 1.0, %v1841
    %v1843 = vtanh.pop %v1836
    %v1844 = vmul.f32 %v1842, %v1753
    %1846 = vrot.lane.b32.xlu0 %v1843, 64
    %v1847 = vpop.permute.xlu0 %1846
    %v1849 = vmul.f32 %v1842, %v1847
    %1851 = vrot.lane.b32.xlu0 %v1849, 32
    %v1852 = vpop.permute.xlu0 %1851
    %v1854 = vadd.f32 %v1844, %v1852
    %v1855 = vtanh.pop %v1854
    %1857 = vrot.lane.b32.xlu0 %v1855, 64
    %v1858 = vpop.permute.xlu0 %1857
    %v1860 = vmul.f32 %v1842, %v1858
    %v1861 = vld [vmem:[%s185] sm:$0x3]
    %1863 = vrot.lane.b32.xlu0 %v1860, 32
    %v1864 = vpop.permute.xlu0 %1863
    %v1865 = vsel %vm188, %v1864, 0
    %1867 = vmatprep.subr.mxu0 0.0
    %1868 = vmatpush1.msra.mxu0 %v1025
    %1869 = vmatprep.subr.mxu0 0.0
    %1870 = vmatpush1.msra.mxu0 %v1026
    %1871 = vmatprep.subr.mxu0 0.0
    %1872 = vmatpush1.msra.mxu0 %v1027
    %1873 = vmatprep.subr.mxu0 0.0
    %1874 = vmatpush1.msra.mxu0 %v1028
    %1875 = vmatprep.subr.mxu0 0.0
    %1876 = vmatpush1.msra.mxu0 0.0
    %1877 = vmatprep.subr.mxu0 0.0
    %1878 = vmatpush1.msra.mxu0 0.0
    %1879 = vmatprep.subr.mxu0 0.0
    %1880 = vmatpush1.msra.mxu0 0.0
    %1881 = vmatprep.subr.mxu0 0.0
    %1882 = vmatpush1.msra.mxu0 0.0
    %1883 = vmatprep.subr.mxu0 0.0
    %1884 = vmatpush1.msra.mxu0 0.0
    %1885 = vmatprep.subr.mxu0 0.0
    %1886 = vmatpush1.msra.mxu0 0.0
    %1887 = vmatprep.subr.mxu0 0.0
    %1888 = vmatpush1.msra.mxu0 0.0
    %1889 = vmatprep.subr.mxu0 0.0
    %1890 = vmatpush1.msra.mxu0 0.0
    %1891 = vmatprep.subr.mxu0 0.0
    %1892 = vmatpush1.msra.mxu0 0.0
    %1893 = vmatprep.subr.mxu0 0.0
    %1894 = vmatpush1.msra.mxu0 0.0
    %1895 = vmatprep.subr.mxu0 0.0
    %1896 = vmatpush1.msra.mxu0 0.0
    %1897 = vmatprep.subr.mxu0 0.0
    %1898 = vmatpush1.msra.mxu0 0.0
    %1899 = vmatprep.subr.mxu0 0.0
    %1900 = vmatpush1.msra.mxu0 0.0
    %1901 = vmatprep.subr.mxu0 0.0
    %1902 = vmatpush1.msra.mxu0 0.0
    %1903 = vmatprep.subr.mxu0 0.0
    %1904 = vmatpush1.msra.mxu0 0.0
    %1905 = vmatprep.subr.mxu0 0.0
    %1906 = vmatpush1.msra.mxu0 0.0
    %1907 = vmatprep.subr.mxu0 0.0
    %1908 = vmatpush1.msra.mxu0 0.0
    %1909 = vmatprep.subr.mxu0 0.0
    %1910 = vmatpush1.msra.mxu0 0.0
    %1911 = vmatprep.subr.mxu0 0.0
    %1912 = vmatpush1.msra.mxu0 0.0
    %1913 = vmatprep.subr.mxu0 0.0
    %1914 = vmatpush1.msra.mxu0 0.0
    %1915 = vmatprep.subr.mxu0 0.0
    %1916 = vmatpush1.msra.mxu0 0.0
    %1917 = vmatprep.subr.mxu0 0.0
    %1918 = vmatpush1.msra.mxu0 0.0
    %1919 = vmatprep.subr.mxu0 0.0
    %1920 = vmatpush1.msra.mxu0 0.0
    %1921 = vmatprep.subr.mxu0 0.0
    %1922 = vmatpush1.msra.mxu0 0.0
    %1923 = vmatprep.subr.mxu0 0.0
    %1924 = vmatpush1.msra.mxu0 0.0
    %1925 = vmatprep.subr.mxu0 0.0
    %1926 = vmatpush1.msra.mxu0 0.0
    %1927 = vmatprep.subr.mxu0 0.0
    %1928 = vmatpush1.msra.mxu0 0.0
    %1929 = vmatprep.subr.mxu0 0.0
    %1930 = vmatpush1.msra.mxu0 0.0
    %1931 = vmatprep.mubr.f32.mxu0 0.0
    %1932 = vmatmul.mubr.f32.gmra.mrb[0].mxu0 %v1865
    %v1933 = vpop.f32.mrb[0].mxu0
    %v1934 = vadd.f32 0.0, %v1933
    %v1935 = vpop.f32.mrb[0].mxu0
    %1936 = vdwg.mxu0
    %v1937 = vadd.f32 %v1861, %v1934
    %v1938 = vxor.u32 %v1937, 2147483648
    %v1939 = vmul.f32 %v1938, 1.442695
    %v1940 = vpow.pop %v1939
    %v1941 = vadd.f32 %v1940, 1.0
    %v1942 = vrcp.pop %v1941
    %v1943 = vmul.f32 1.0, %v1942
    %v1944 = vtanh.pop %v1937
    %v1945 = vmul.f32 %v1943, %v1854
    %1947 = vrot.lane.b32.xlu0 %v1944, 64
    %v1948 = vpop.permute.xlu0 %1947
    %v1950 = vmul.f32 %v1943, %v1948
    %1952 = vrot.lane.b32.xlu0 %v1950, 32
    %v1953 = vpop.permute.xlu0 %1952
    %v1955 = vadd.f32 %v1945, %v1953
    %v1956 = vtanh.pop %v1955
    %1958 = vrot.lane.b32.xlu0 %v1956, 64
    %v1959 = vpop.permute.xlu0 %1958
    %v1961 = vmul.f32 %v1943, %v1959
    %v1962 = vld [vmem:[%s7] sm:$0xff]
    %v1963 = vld [vmem:[%s7 + $0x8] sm:$0xff]
    %v1964 = vld [vmem:[%s7 + $0x10] sm:$0xff]
    %v1965 = vld [vmem:[%s7 + $0x18] sm:$0xff]
    %v1966 = vld [vmem:[#allocation5] sm:$0x1]
    %v1968 = vlaneseq
    %v1969 = vshrl.u32 %v1968, 7
    %v1970 = vsub.s32 0, %v1969
    %v1971 = vrot.slane %v1966, %v1970
    %1974 = vrot.lane.b32.xlu0 %v1961, 32
    %v1975 = vpop.permute.xlu0 %1974
    %v1976 = vsel %vm188, %v1975, 0
    %1978 = vmatprep.subr.mxu0 0.0
    %1979 = vmatpush1.msra.mxu0 %v1962
    %1980 = vmatprep.subr.mxu0 0.0
    %1981 = vmatpush1.msra.mxu0 %v1963
    %1982 = vmatprep.subr.mxu0 0.0
    %1983 = vmatpush1.msra.mxu0 %v1964
    %1984 = vmatprep.subr.mxu0 0.0
    %1985 = vmatpush1.msra.mxu0 %v1965
    %1986 = vmatprep.subr.mxu0 0.0
    %1987 = vmatpush1.msra.mxu0 0.0
    %1988 = vmatprep.subr.mxu0 0.0
    %1989 = vmatpush1.msra.mxu0 0.0
    %1990 = vmatprep.subr.mxu0 0.0
    %1991 = vmatpush1.msra.mxu0 0.0
    %1992 = vmatprep.subr.mxu0 0.0
    %1993 = vmatpush1.msra.mxu0 0.0
    %1994 = vmatprep.subr.mxu0 0.0
    %1995 = vmatpush1.msra.mxu0 0.0
    %1996 = vmatprep.subr.mxu0 0.0
    %1997 = vmatpush1.msra.mxu0 0.0
    %1998 = vmatprep.subr.mxu0 0.0
    %1999 = vmatpush1.msra.mxu0 0.0
    %2000 = vmatprep.subr.mxu0 0.0
    %2001 = vmatpush1.msra.mxu0 0.0
    %2002 = vmatprep.subr.mxu0 0.0
    %2003 = vmatpush1.msra.mxu0 0.0
    %2004 = vmatprep.subr.mxu0 0.0
    %2005 = vmatpush1.msra.mxu0 0.0
    %2006 = vmatprep.subr.mxu0 0.0
    %2007 = vmatpush1.msra.mxu0 0.0
    %2008 = vmatprep.subr.mxu0 0.0
    %2009 = vmatpush1.msra.mxu0 0.0
    %2010 = vmatprep.subr.mxu0 0.0
    %2011 = vmatpush1.msra.mxu0 0.0
    %2012 = vmatprep.subr.mxu0 0.0
    %2013 = vmatpush1.msra.mxu0 0.0
    %2014 = vmatprep.subr.mxu0 0.0
    %2015 = vmatpush1.msra.mxu0 0.0
    %2016 = vmatprep.subr.mxu0 0.0
    %2017 = vmatpush1.msra.mxu0 0.0
    %2018 = vmatprep.subr.mxu0 0.0
    %2019 = vmatpush1.msra.mxu0 0.0
    %2020 = vmatprep.subr.mxu0 0.0
    %2021 = vmatpush1.msra.mxu0 0.0
    %2022 = vmatprep.subr.mxu0 0.0
    %2023 = vmatpush1.msra.mxu0 0.0
    %2024 = vmatprep.subr.mxu0 0.0
    %2025 = vmatpush1.msra.mxu0 0.0
    %2026 = vmatprep.subr.mxu0 0.0
    %2027 = vmatpush1.msra.mxu0 0.0
    %2028 = vmatprep.subr.mxu0 0.0
    %2029 = vmatpush1.msra.mxu0 0.0
    %2030 = vmatprep.subr.mxu0 0.0
    %2031 = vmatpush1.msra.mxu0 0.0
    %2032 = vmatprep.subr.mxu0 0.0
    %2033 = vmatpush1.msra.mxu0 0.0
    %2034 = vmatprep.subr.mxu0 0.0
    %2035 = vmatpush1.msra.mxu0 0.0
    %2036 = vmatprep.subr.mxu0 0.0
    %2037 = vmatpush1.msra.mxu0 0.0
    %2038 = vmatprep.subr.mxu0 0.0
    %2039 = vmatpush1.msra.mxu0 0.0
    %2040 = vmatprep.subr.mxu0 0.0
    %2041 = vmatpush1.msra.mxu0 0.0
    %2042 = vmatprep.mubr.f32.mxu0 0.0
    %2043 = vmatmul.mubr.f32.gmra.mrb[0].mxu0 %v1976
    %v2044 = vpop.f32.mrb[0].mxu0
    %v2045 = vadd.f32 %v1971, %v2044
    %v2046 = vpop.f32.mrb[0].mxu0
    %2047 = vdwg.mxu0
    %v2048 = vmax.f32 %v2045, 0.0
    %v2049 = vld [vmem:[#allocation7] sm:$0xff]
    %v2050 = vld [vmem:[#allocation7 + $0x8] sm:$0xff]
    %v2051 = vld [vmem:[%s10] sm:$0x1]
    %v2053 = vlaneseq
    %v2054 = vshrl.u32 %v2053, 7
    %v2055 = vsub.s32 0, %v2054
    %v2056 = vrot.slane %v2051, %v2055
    %vm2058 = vcmask 130048
    %v2060 = vsel %vm2058, %v2048, 0
    %2062 = vmatprep.subr.mxu0 0.0
    %2063 = vmatpush1.msra.mxu0 %v2049
    %2064 = vmatprep.subr.mxu0 0.0
    %2065 = vmatpush1.msra.mxu0 %v2050
    %2066 = vmatprep.subr.mxu0 0.0
    %2067 = vmatpush1.msra.mxu0 0.0
    %2068 = vmatprep.subr.mxu0 0.0
    %2069 = vmatpush1.msra.mxu0 0.0
    %2070 = vmatprep.subr.mxu0 0.0
    %2071 = vmatpush1.msra.mxu0 0.0
    %2072 = vmatprep.subr.mxu0 0.0
    %2073 = vmatpush1.msra.mxu0 0.0
    %2074 = vmatprep.subr.mxu0 0.0
    %2075 = vmatpush1.msra.mxu0 0.0
    %2076 = vmatprep.subr.mxu0 0.0
    %2077 = vmatpush1.msra.mxu0 0.0
    %2078 = vmatprep.subr.mxu0 0.0
    %2079 = vmatpush1.msra.mxu0 0.0
    %2080 = vmatprep.subr.mxu0 0.0
    %2081 = vmatpush1.msra.mxu0 0.0
    %2082 = vmatprep.subr.mxu0 0.0
    %2083 = vmatpush1.msra.mxu0 0.0
    %2084 = vmatprep.subr.mxu0 0.0
    %2085 = vmatpush1.msra.mxu0 0.0
    %2086 = vmatprep.subr.mxu0 0.0
    %2087 = vmatpush1.msra.mxu0 0.0
    %2088 = vmatprep.subr.mxu0 0.0
    %2089 = vmatpush1.msra.mxu0 0.0
    %2090 = vmatprep.subr.mxu0 0.0
    %2091 = vmatpush1.msra.mxu0 0.0
    %2092 = vmatprep.subr.mxu0 0.0
    %2093 = vmatpush1.msra.mxu0 0.0
    %2094 = vmatprep.subr.mxu0 0.0
    %2095 = vmatpush1.msra.mxu0 0.0
    %2096 = vmatprep.subr.mxu0 0.0
    %2097 = vmatpush1.msra.mxu0 0.0
    %2098 = vmatprep.subr.mxu0 0.0
    %2099 = vmatpush1.msra.mxu0 0.0
    %2100 = vmatprep.subr.mxu0 0.0
    %2101 = vmatpush1.msra.mxu0 0.0
    %2102 = vmatprep.subr.mxu0 0.0
    %2103 = vmatpush1.msra.mxu0 0.0
    %2104 = vmatprep.subr.mxu0 0.0
    %2105 = vmatpush1.msra.mxu0 0.0
    %2106 = vmatprep.subr.mxu0 0.0
    %2107 = vmatpush1.msra.mxu0 0.0
    %2108 = vmatprep.subr.mxu0 0.0
    %2109 = vmatpush1.msra.mxu0 0.0
    %2110 = vmatprep.subr.mxu0 0.0
    %2111 = vmatpush1.msra.mxu0 0.0
    %2112 = vmatprep.subr.mxu0 0.0
    %2113 = vmatpush1.msra.mxu0 0.0
    %2114 = vmatprep.subr.mxu0 0.0
    %2115 = vmatpush1.msra.mxu0 0.0
    %2116 = vmatprep.subr.mxu0 0.0
    %2117 = vmatpush1.msra.mxu0 0.0
    %2118 = vmatprep.subr.mxu0 0.0
    %2119 = vmatpush1.msra.mxu0 0.0
    %2120 = vmatprep.subr.mxu0 0.0
    %2121 = vmatpush1.msra.mxu0 0.0
    %2122 = vmatprep.subr.mxu0 0.0
    %2123 = vmatpush1.msra.mxu0 0.0
    %2124 = vmatprep.subr.mxu0 0.0
    %2125 = vmatpush1.msra.mxu0 0.0
    %2126 = vmatprep.mubr.f32.mxu0 0.0
    %2127 = vmatmul.mubr.f32.gmra.mrb[0].mxu0 %v2060
    %v2128 = vpop.f32.mrb[0].mxu0
    %v2129 = vadd.f32 %v2056, %v2128
    %v2130 = vpop.f32.mrb[0].mxu0
    %2131 = vdwg.mxu0
    %v2132 = vmax.f32 %v2129, 0.0
    %v2133 = vld [vmem:[%s11] sm:$0xff]
    %v2134 = vld [vmem:[%s11 + $0x8] sm:$0xff]
    %v2135 = vld [vmem:[#allocation4] sm:$0x1]
    %v2137 = vlaneseq
    %v2138 = vshrl.u32 %v2137, 7
    %v2139 = vsub.s32 0, %v2138
    %v2140 = vrot.slane %v2135, %v2139
    %v2143 = vsel %vm2058, %v2132, 0
    %2145 = vmatprep.subr.mxu0 0.0
    %2146 = vmatpush1.msra.mxu0 %v2133
    %2147 = vmatprep.subr.mxu0 0.0
    %2148 = vmatpush1.msra.mxu0 %v2134
    %2149 = vmatprep.subr.mxu0 0.0
    %2150 = vmatpush1.msra.mxu0 0.0
    %2151 = vmatprep.subr.mxu0 0.0
    %2152 = vmatpush1.msra.mxu0 0.0
    %2153 = vmatprep.subr.mxu0 0.0
    %2154 = vmatpush1.msra.mxu0 0.0
    %2155 = vmatprep.subr.mxu0 0.0
    %2156 = vmatpush1.msra.mxu0 0.0
    %2157 = vmatprep.subr.mxu0 0.0
    %2158 = vmatpush1.msra.mxu0 0.0
    %2159 = vmatprep.subr.mxu0 0.0
    %2160 = vmatpush1.msra.mxu0 0.0
    %2161 = vmatprep.subr.mxu0 0.0
    %2162 = vmatpush1.msra.mxu0 0.0
    %2163 = vmatprep.subr.mxu0 0.0
    %2164 = vmatpush1.msra.mxu0 0.0
    %2165 = vmatprep.subr.mxu0 0.0
    %2166 = vmatpush1.msra.mxu0 0.0
    %2167 = vmatprep.subr.mxu0 0.0
    %2168 = vmatpush1.msra.mxu0 0.0
    %2169 = vmatprep.subr.mxu0 0.0
    %2170 = vmatpush1.msra.mxu0 0.0
    %2171 = vmatprep.subr.mxu0 0.0
    %2172 = vmatpush1.msra.mxu0 0.0
    %2173 = vmatprep.subr.mxu0 0.0
    %2174 = vmatpush1.msra.mxu0 0.0
    %2175 = vmatprep.subr.mxu0 0.0
    %2176 = vmatpush1.msra.mxu0 0.0
    %2177 = vmatprep.subr.mxu0 0.0
    %2178 = vmatpush1.msra.mxu0 0.0
    %2179 = vmatprep.subr.mxu0 0.0
    %2180 = vmatpush1.msra.mxu0 0.0
    %2181 = vmatprep.subr.mxu0 0.0
    %2182 = vmatpush1.msra.mxu0 0.0
    %2183 = vmatprep.subr.mxu0 0.0
    %2184 = vmatpush1.msra.mxu0 0.0
    %2185 = vmatprep.subr.mxu0 0.0
    %2186 = vmatpush1.msra.mxu0 0.0
    %2187 = vmatprep.subr.mxu0 0.0
    %2188 = vmatpush1.msra.mxu0 0.0
    %2189 = vmatprep.subr.mxu0 0.0
    %2190 = vmatpush1.msra.mxu0 0.0
    %2191 = vmatprep.subr.mxu0 0.0
    %2192 = vmatpush1.msra.mxu0 0.0
    %2193 = vmatprep.subr.mxu0 0.0
    %2194 = vmatpush1.msra.mxu0 0.0
    %2195 = vmatprep.subr.mxu0 0.0
    %2196 = vmatpush1.msra.mxu0 0.0
    %2197 = vmatprep.subr.mxu0 0.0
    %2198 = vmatpush1.msra.mxu0 0.0
    %2199 = vmatprep.subr.mxu0 0.0
    %2200 = vmatpush1.msra.mxu0 0.0
    %2201 = vmatprep.subr.mxu0 0.0
    %2202 = vmatpush1.msra.mxu0 0.0
    %2203 = vmatprep.subr.mxu0 0.0
    %2204 = vmatpush1.msra.mxu0 0.0
    %2205 = vmatprep.subr.mxu0 0.0
    %2206 = vmatpush1.msra.mxu0 0.0
    %2207 = vmatprep.subr.mxu0 0.0
    %2208 = vmatpush1.msra.mxu0 0.0
    %2209 = vmatprep.mubr.f32.mxu0 0.0
    %2210 = vmatmul.mubr.f32.gmra.mrb[0].mxu0 %v2143
    %v2211 = vpop.f32.mrb[0].mxu0
    %v2212 = vadd.f32 %v2140, %v2211
    %v2213 = vpop.f32.mrb[0].mxu0
    %2214 = vdwg.mxu0
    %vm2215 = vcmask 1024
    %2216 = vst.msk [vmem:[%s13] sm:$0x3] %vm2215, %v2212
    // Predicated region
    $region62: #{lstm_dense_forward.1} parent=1 // pred_check
      _
    $region63: #{lstm_dense_forward.1} parent=1 // pred_check_branch
      %2218 = sbr.rel (0) target = $region65
    $region64: #{lstm_dense_forward.1} parent=1 // pred_region
      _
    $region65: #{lstm_dense_forward.1} parent=1 // pred_fallthru
      _
    // Predicated region
    $region66: #{lstm_dense_forward.1} parent=1 // pred_check
      _
    $region67: #{lstm_dense_forward.1} parent=1 // pred_check_branch
      %2220 = sbr.rel (0) target = $region69
    $region68: #{lstm_dense_forward.1} parent=1 // pred_region
      _
    $region69: #{lstm_dense_forward.1} parent=1 // pred_fallthru
      _
    %2221 = vsyncpa [#allocation6], 1
    %2222 = vsyncpa [#allocation8], 1

</llo_original>
